<compile_context>
chip_gen: v5e
topology: v5e:2x2
jax: 0.10.0
libtpu: 0.0.40
codegen_flags: <defaults>
</compile_context>

<pallas_src>
import functools

import jax
import jax.numpy as jnp
from jax.experimental import pallas as pl
from jax.experimental.pallas import tpu as pltpu


# -----------------------------------------------------------------------------
# Kernel 1: recurrent LSTM. One grid step == Tb time steps (unrolled loop).
# Emits h_t only; h/c state carried across grid iterations in VMEM scratch.
# -----------------------------------------------------------------------------
def _lstm_chunk_kernel(x_ref, wih_ref, whh_ref, b_ref, h_out_ref, h_ref, c_ref,
                       *, t_block):
    # Zero hidden/cell state at the very first grid step (DecoderRNN.init_hidden).
    @pl.when(pl.program_id(0) == 0)
    def _():
        h_ref[...] = jnp.zeros_like(h_ref)
        c_ref[...] = jnp.zeros_like(c_ref)

    mxu_dtype = x_ref.dtype  # bf16 or f32 operands for the MXU

    def step(t, carry):
        x = x_ref[t]                       # (B, E) current time-step input
        h_prev = h_ref[...]                # (B, H) f32 state
        c_prev = c_ref[...]                # (B, H) f32 state
        h_in = h_prev.astype(mxu_dtype)

        # PyTorch gate order [i, f, g, o]; gate k's weights are leading-axis
        # slices (no lane-crossing slicing of a 4H axis). f32 accumulation.
        def gate(k):
            return (jnp.dot(x, wih_ref[k], preferred_element_type=jnp.float32)
                    + jnp.dot(h_in, whh_ref[k], preferred_element_type=jnp.float32)
                    + b_ref[k])            # (B, H) f32

        i_g = jax.nn.sigmoid(gate(0))
        f_g = jax.nn.sigmoid(gate(1))
        g_g = jnp.tanh(gate(2))
        o_g = jax.nn.sigmoid(gate(3))

        c_new = f_g * c_prev + i_g * g_g
        h_new = o_g * jnp.tanh(c_new)

        c_ref[...] = c_new
        h_ref[...] = h_new
        h_out_ref[t] = h_new.astype(h_out_ref.dtype)
        return carry

    jax.lax.fori_loop(0, t_block, step, 0, unroll=True)


# -----------------------------------------------------------------------------
# Kernel 2: batched output projection  logits = H_all @ W_out^T + b_out.
# Lane-dense (tm, tn) output tiles; both grid axes are "parallel".
# -----------------------------------------------------------------------------
def _projection_kernel(h_ref, w_ref, b_ref, out_ref):
    out_ref[...] = (
        jnp.dot(h_ref[...], w_ref[...], preferred_element_type=jnp.float32)
        + b_ref[...]
    )


# -----------------------------------------------------------------------------
# Tiling helpers.
# -----------------------------------------------------------------------------
def _largest_divisor_leq(n, cap):
    for d in range(min(n, cap), 0, -1):
        if n % d == 0:
            return d
    return 1


def _pick_tile(dim, preferred, align):
    """Pick a tile size that is either the full dim or an `align`-multiple divisor."""
    if dim <= preferred:
        return dim
    t = (preferred // align) * align
    while t >= align:
        if dim % t == 0:
            return t
        t -= align
    return dim  # fall back to the full (untiled) extent — always legal


# -----------------------------------------------------------------------------
# Wrapper: embedding lookup, concat, weight layout, two pallas_calls.
# -----------------------------------------------------------------------------
def decoder_rnn_forward(features, captions, params, *,
                        compute_dtype=jnp.float32, t_block=None):
    """Equivalent of DecoderRNN.forward(features, captions).

    features: (B, E) float32
    captions: (B, Tcap) int32
    returns:  (B, Tcap, V) float32 logits (softmax is NOT applied in the
              PyTorch forward, so it is not applied here either).
    """
    emb_table = params["embedding"]      # (V, E)
    w_ih = params["w_ih"]                # (4H, E)   PyTorch weight_ih_l0
    w_hh = params["w_hh"]                # (4H, H)   PyTorch weight_hh_l0
    b_ih = params["b_ih"]                # (4H,)
    b_hh = params["b_hh"]                # (4H,)
    w_out = params["w_out"]              # (V, H)    PyTorch linear.weight
    b_out = params["b_out"]              # (V,)

    H = w_hh.shape[1]
    V, E = emb_table.shape

    # captions[:, :-1] -> embedding, then prepend image features as step 0.
    cap_emb = jnp.take(emb_table, captions[:, :-1], axis=0)             # (B, Tcap-1, E)
    inputs = jnp.concatenate([features[:, None, :], cap_emb], axis=1)   # (B, T, E)
    B, T, _ = inputs.shape

    # Time-major layout for the recurrent kernel.
    x_tbe = jnp.transpose(inputs, (1, 0, 2)).astype(compute_dtype)      # (T, B, E)

    # Per-gate weight layout: (4, E, H), (4, H, H), (4, 1, H).
    wih_g = jnp.transpose(w_ih.reshape(4, H, E), (0, 2, 1)).astype(compute_dtype)
    whh_g = jnp.transpose(w_hh.reshape(4, H, H), (0, 2, 1)).astype(compute_dtype)
    b_g = (b_ih + b_hh).reshape(4, 1, H).astype(jnp.float32)

    if t_block is None:
        t_block = _largest_divisor_leq(T, 16)
    n_chunks = T // t_block

    # ---- Recurrent kernel: h_all (T, B, H) --------------------------------
    h_all = pl.pallas_call(
        functools.partial(_lstm_chunk_kernel, t_block=t_block),
        out_shape=jax.ShapeDtypeStruct((T, B, H), compute_dtype),
        grid_spec=pltpu.PrefetchScalarGridSpec(
            num_scalar_prefetch=0,
            grid=(n_chunks,),
            in_specs=[
                pl.BlockSpec((t_block, B, E), lambda i: (i, 0, 0)),       # x chunk
                pl.BlockSpec(memory_space=pltpu.MemorySpace.VMEM),        # W_ih (4,E,H)
                pl.BlockSpec(memory_space=pltpu.MemorySpace.VMEM),        # W_hh (4,H,H)
                pl.BlockSpec(memory_space=pltpu.MemorySpace.VMEM),        # bias (4,1,H)
            ],
            out_specs=pl.BlockSpec((t_block, B, H), lambda i: (i, 0, 0)),
            scratch_shapes=[
                pltpu.VMEM((B, H), jnp.float32),   # h state
                pltpu.VMEM((B, H), jnp.float32),   # c state
            ],
        ),
        compiler_params=pltpu.CompilerParams(
            dimension_semantics=("arbitrary",),    # sequential recurrence
            vmem_limit_bytes=32 * 1024 * 1024,
        ),
    )(x_tbe, wih_g, whh_g, b_g)

    # ---- Batched output projection (hoisted out of the recurrence) --------
    M = T * B
    h_flat = h_all.reshape(M, H)
    wout_t = jnp.transpose(w_out).astype(compute_dtype)   # (H, V)
    bout = b_out.reshape(1, V).astype(jnp.float32)        # (1, V)

    tm = _pick_tile(M, 256, 8)
    tn = _pick_tile(V, 512, 128)

    logits_flat = pl.pallas_call(
        _projection_kernel,
        out_shape=jax.ShapeDtypeStruct((M, V), jnp.float32),
        grid_spec=pltpu.PrefetchScalarGridSpec(
            num_scalar_prefetch=0,
            grid=(M // tm, V // tn),
            in_specs=[
                pl.BlockSpec((tm, H), lambda i, j: (i, 0)),
                pl.BlockSpec((H, tn), lambda i, j: (0, j)),
                pl.BlockSpec((1, tn), lambda i, j: (0, j)),
            ],
            out_specs=pl.BlockSpec((tm, tn), lambda i, j: (i, j)),
        ),
        compiler_params=pltpu.CompilerParams(
            dimension_semantics=("parallel", "parallel"),
            vmem_limit_bytes=32 * 1024 * 1024,
        ),
    )(h_flat, wout_t, bout)

    return jnp.transpose(logits_flat.reshape(T, B, V), (1, 0, 2))   # (B, T, V)


# -----------------------------------------------------------------------------
# Pure-JAX reference (for verification only).
# -----------------------------------------------------------------------------
def decoder_rnn_reference(features, captions, params):
    emb_table = params["embedding"]
    w_ih, w_hh = params["w_ih"], params["w_hh"]
    b_ih, b_hh = params["b_ih"], params["b_hh"]
    w_out, b_out = params["w_out"], params["b_out"]
    H = w_hh.shape[1]

    cap_emb = jnp.take(emb_table, captions[:, :-1], axis=0)
    inputs = jnp.concatenate([features[:, None, :], cap_emb], axis=1)
    B = inputs.shape[0]

    def step(carry, x_t):
        h, c = carry
        gates = x_t @ w_ih.T + b_ih + h @ w_hh.T + b_hh
        i = jax.nn.sigmoid(gates[:, 0 * H:1 * H])
        f = jax.nn.sigmoid(gates[:, 1 * H:2 * H])
        g = jnp.tanh(gates[:, 2 * H:3 * H])
        o = jax.nn.sigmoid(gates[:, 3 * H:4 * H])
        c = f * c + i * g
        h = o * jnp.tanh(c)
        return (h, c), h

    h0 = jnp.zeros((B, H), jnp.float32)
    c0 = jnp.zeros((B, H), jnp.float32)
    _, hs = jax.lax.scan(step, (h0, c0), jnp.transpose(inputs, (1, 0, 2)))
    hs = jnp.transpose(hs, (1, 0, 2))            # (B, T, H)
    return hs @ w_out.T + b_out


# -----------------------------------------------------------------------------
# Deterministic parameter init + test driver.
# -----------------------------------------------------------------------------
def make_params(key, embed_size, hidden_size, vocab_size):
    ks = jax.random.split(key, 7)
    s = 0.1
    return {
        "embedding": s * jax.random.normal(ks[0], (vocab_size, embed_size), jnp.float32),
        "w_ih": s * jax.random.normal(ks[1], (4 * hidden_size, embed_size), jnp.float32),
        "w_hh": s * jax.random.normal(ks[2], (4 * hidden_size, hidden_size), jnp.float32),
        "b_ih": s * jax.random.normal(ks[3], (4 * hidden_size,), jnp.float32),
        "b_hh": s * jax.random.normal(ks[4], (4 * hidden_size,), jnp.float32),
        "w_out": s * jax.random.normal(ks[5], (vocab_size, hidden_size), jnp.float32),
        "b_out": s * jax.random.normal(ks[6], (vocab_size,), jnp.float32),
    }


if __name__ == "__main__":
    # Small shapes: batch=2, embed=32, hidden=32, vocab=128, caption length=8.
    B, E, H, V, TCAP = 2, 32, 32, 128, 8

    key = jax.random.PRNGKey(0)
    k_params, k_feat, k_cap = jax.random.split(key, 3)

    params = make_params(k_params, E, H, V)
    features = jax.random.normal(k_feat, (B, E), jnp.float32)
    captions = jax.random.randint(k_cap, (B, TCAP), 0, V, dtype=jnp.int32)

    ref = decoder_rnn_reference(features, captions, params)

    # f32 path: bit-faithful to the PyTorch math.
    fwd_f32 = jax.jit(functools.partial(decoder_rnn_forward, compute_dtype=jnp.float32))
    logits = jax.block_until_ready(fwd_f32(features, captions, params))
    assert logits.shape == (B, TCAP, V), logits.shape
    assert jnp.allclose(logits, ref, atol=1e-4, rtol=1e-4), \
        float(jnp.max(jnp.abs(logits - ref)))

    # bf16 MXU-operand path (f32 accumulation / gate math / state).
    fwd_bf16 = jax.jit(functools.partial(decoder_rnn_forward, compute_dtype=jnp.bfloat16))
    logits_bf16 = jax.block_until_ready(fwd_bf16(features, captions, params))
    assert logits_bf16.shape == (B, TCAP, V), logits_bf16.shape
    assert jnp.allclose(logits_bf16, ref, atol=5e-2, rtol=5e-2), \
        float(jnp.max(jnp.abs(logits_bf16 - ref)))

    print("KERNEL_OK")
</pallas_src>

<mosaic_0001>
module attributes {stable_mosaic.version = 11 : i64} {
  func.func @_projection_kernel(%arg0: i32, %arg1: i32, %arg2: memref<16x32xf32, #tpu.memory_space<vmem>>, %arg3: memref<32x128xf32, #tpu.memory_space<vmem>>, %arg4: memref<1x128xf32, #tpu.memory_space<vmem>>, %arg5: memref<16x128xf32, #tpu.memory_space<vmem>>) attributes {dimension_semantics = [#tpu.dimension_semantics<parallel>, #tpu.dimension_semantics<parallel>], iteration_bounds = array<i64: 1, 1>, scalar_prefetch = 0 : i64, scratch_operands = 0 : i64, tpu.core_type = #tpu.core_type<tc>, window_params = [{transform_indices = @transform_0, window_bounds = array<i64: 16, 32>}, {transform_indices = @transform_1, window_bounds = array<i64: 32, 128>}, {transform_indices = @transform_2, window_bounds = array<i64: 1, 128>}, {transform_indices = @transform_3, window_bounds = array<i64: 16, 128>}]} {
    %c0 = arith.constant 0 : index
    %c0_0 = arith.constant 0 : index
    %0 = vector.load %arg2[%c0, %c0_0] : memref<16x32xf32, #tpu.memory_space<vmem>>, vector<16x32xf32>
    %c0_1 = arith.constant 0 : index
    %c0_2 = arith.constant 0 : index
    %1 = vector.load %arg3[%c0_1, %c0_2] : memref<32x128xf32, #tpu.memory_space<vmem>>, vector<32x128xf32>
    %cst = arith.constant dense<0.000000e+00> : vector<16x128xf32>
    %2 = tpu.matmul %0, %1, %cst {dimension_numbers = #tpu.dot_dimension_numbers<[1], [0], [0], [1], [0, 0, 1, 1], [], []>} : vector<16x32xf32>, vector<32x128xf32>, vector<16x128xf32> -> vector<16x128xf32>
    %c0_3 = arith.constant 0 : index
    %c0_4 = arith.constant 0 : index
    %3 = vector.load %arg4[%c0_3, %c0_4] : memref<1x128xf32, #tpu.memory_space<vmem>>, vector<1x128xf32>
    %4 = vector.broadcast %3 : vector<1x128xf32> to vector<16x128xf32>
    %5 = arith.addf %2, %4 : vector<16x128xf32>
    %c0_5 = arith.constant 0 : index
    %c0_6 = arith.constant 0 : index
    %6 = vector.load %arg5[%c0_5, %c0_6] : memref<16x128xf32, #tpu.memory_space<vmem>>, vector<16x128xf32>
    tpu.vector_store %arg5[%c0_5, %c0_6], %5 {strides = array<i32>} : memref<16x128xf32, #tpu.memory_space<vmem>>, vector<16x128xf32>,
    return
  }
  func.func @transform_0(%arg0: i32, %arg1: i32) -> (i32, i32) {
    %c0_i32 = arith.constant 0 : i32
    %c0_i32_0 = arith.constant 0 : i32
    return %arg0, %c0_i32 : i32, i32
  }
  func.func @transform_1(%arg0: i32, %arg1: i32) -> (i32, i32) {
    %c0_i32 = arith.constant 0 : i32
    %c0_i32_0 = arith.constant 0 : i32
    return %c0_i32, %arg1 : i32, i32
  }
  func.func @transform_2(%arg0: i32, %arg1: i32) -> (i32, i32) {
    %c0_i32 = arith.constant 0 : i32
    %c0_i32_0 = arith.constant 0 : i32
    return %c0_i32, %arg1 : i32, i32
  }
  func.func @transform_3(%arg0: i32, %arg1: i32) -> (i32, i32) {
    %c0_i32 = arith.constant 0 : i32
    return %arg0, %arg1 : i32, i32
  }
}

module attributes {stable_mosaic.version = 11 : i64} {
  func.func @_lstm_chunk_kernel(%arg0: i32, %arg1: memref<8x2x32xf32, #tpu.memory_space<vmem>>, %arg2: memref<4x32x32xf32, #tpu.memory_space<vmem>>, %arg3: memref<4x32x32xf32, #tpu.memory_space<vmem>>, %arg4: memref<4x1x32xf32, #tpu.memory_space<vmem>>, %arg5: memref<8x2x32xf32, #tpu.memory_space<vmem>>, %arg6: memref<2x32xf32, #tpu.memory_space<vmem>>, %arg7: memref<2x32xf32, #tpu.memory_space<vmem>>) attributes {dimension_semantics = [#tpu.dimension_semantics<arbitrary>], iteration_bounds = array<i64: 1>, scalar_prefetch = 0 : i64, scratch_operands = 2 : i64, tpu.core_type = #tpu.core_type<tc>, window_params = [{transform_indices = @transform_0, window_bounds = array<i64: 8, 2, 32>}, {pipeline_mode = #tpu.pipeline_mode<synchronous>, transform_indices = @transform_1, window_bounds = array<i64: 4, 32, 32>}, {pipeline_mode = #tpu.pipeline_mode<synchronous>, transform_indices = @transform_2, window_bounds = array<i64: 4, 32, 32>}, {pipeline_mode = #tpu.pipeline_mode<synchronous>, transform_indices = @transform_3, window_bounds = array<i64: 4, 1, 32>}, {transform_indices = @transform_4, window_bounds = array<i64: 8, 2, 32>}]} {
    %c0_i32 = arith.constant 0 : i32
    %0 = arith.cmpi eq, %arg0, %c0_i32 : i32
    %1 = arith.extui %0 : i1 to i32
    %c0_i32_0 = arith.constant 0 : i32
    %2 = arith.cmpi ne, %1, %c0_i32_0 : i32
    scf.if %2 {
      %cst_469 = arith.constant 0.000000e+00 : f32
      %611 = vector.broadcast %cst_469 : f32 to vector<2x32xf32>
      %c0_470 = arith.constant 0 : index
      %c0_471 = arith.constant 0 : index
      %612 = vector.load %arg6[%c0_470, %c0_471] : memref<2x32xf32, #tpu.memory_space<vmem>>, vector<2x32xf32>
      tpu.vector_store %arg6[%c0_470, %c0_471], %611 {strides = array<i32>} : memref<2x32xf32, #tpu.memory_space<vmem>>, vector<2x32xf32>,
      %cst_472 = arith.constant 0.000000e+00 : f32
      %613 = vector.broadcast %cst_472 : f32 to vector<2x32xf32>
      %c0_473 = arith.constant 0 : index
      %c0_474 = arith.constant 0 : index
      %614 = vector.load %arg7[%c0_473, %c0_474] : memref<2x32xf32, #tpu.memory_space<vmem>>, vector<2x32xf32>
      tpu.vector_store %arg7[%c0_473, %c0_474], %613 {strides = array<i32>} : memref<2x32xf32, #tpu.memory_space<vmem>>, vector<2x32xf32>,
    } else {
    }
    %c0_i32_1 = arith.constant 0 : i32
    %3 = arith.index_cast %c0_i32_1 : i32 to index
    %c0 = arith.constant 0 : index
    %c0_2 = arith.constant 0 : index
    %4 = vector.load %arg1[%3, %c0, %c0_2] : memref<8x2x32xf32, #tpu.memory_space<vmem>>, vector<1x2x32xf32>
    %5 = vector.shape_cast %4 : vector<1x2x32xf32> to vector<2x32xf32>
    %c0_3 = arith.constant 0 : index
    %c0_4 = arith.constant 0 : index
    %6 = vector.load %arg6[%c0_3, %c0_4] : memref<2x32xf32, #tpu.memory_space<vmem>>, vector<2x32xf32>
    %c0_5 = arith.constant 0 : index
    %c0_6 = arith.constant 0 : index
    %7 = vector.load %arg7[%c0_5, %c0_6] : memref<2x32xf32, #tpu.memory_space<vmem>>, vector<2x32xf32>
    %c0_7 = arith.constant 0 : index
    %c0_8 = arith.constant 0 : index
    %c0_9 = arith.constant 0 : index
    %8 = vector.load %arg2[%c0_7, %c0_8, %c0_9] : memref<4x32x32xf32, #tpu.memory_space<vmem>>, vector<1x32x32xf32>
    %9 = vector.shape_cast %8 : vector<1x32x32xf32> to vector<32x32xf32>
    %cst = arith.constant dense<0.000000e+00> : vector<2x32xf32>
    %10 = tpu.matmul %5, %9, %cst {dimension_numbers = #tpu.dot_dimension_numbers<[1], [0], [0], [1], [0, 0, 1, 1], [], []>} : vector<2x32xf32>, vector<32x32xf32>, vector<2x32xf32> -> vector<2x32xf32>
    %c0_10 = arith.constant 0 : index
    %c0_11 = arith.constant 0 : index
    %c0_12 = arith.constant 0 : index
    %11 = vector.load %arg3[%c0_10, %c0_11, %c0_12] : memref<4x32x32xf32, #tpu.memory_space<vmem>>, vector<1x32x32xf32>
    %12 = vector.shape_cast %11 : vector<1x32x32xf32> to vector<32x32xf32>
    %cst_13 = arith.constant dense<0.000000e+00> : vector<2x32xf32>
    %13 = tpu.matmul %6, %12, %cst_13 {dimension_numbers = #tpu.dot_dimension_numbers<[1], [0], [0], [1], [0, 0, 1, 1], [], []>} : vector<2x32xf32>, vector<32x32xf32>, vector<2x32xf32> -> vector<2x32xf32>
    %14 = arith.addf %10, %13 : vector<2x32xf32>
    %c0_14 = arith.constant 0 : index
    %c0_15 = arith.constant 0 : index
    %c0_16 = arith.constant 0 : index
    %15 = vector.load %arg4[%c0_14, %c0_15, %c0_16] : memref<4x1x32xf32, #tpu.memory_space<vmem>>, vector<1x1x32xf32>
    %16 = vector.shape_cast %15 : vector<1x1x32xf32> to vector<1x32xf32>
    %17 = vector.broadcast %16 : vector<1x32xf32> to vector<2x32xf32>
    %18 = arith.addf %14, %17 : vector<2x32xf32>
    %19 = arith.negf %18 : vector<2x32xf32>
    %20 = math.exp %19 : vector<2x32xf32>
    %cst_17 = arith.constant 1.000000e+00 : f32
    %21 = vector.broadcast %cst_17 : f32 to vector<2x32xf32>
    %22 = arith.addf %21, %20 : vector<2x32xf32>
    %23 = arith.divf %21, %22 : vector<2x32xf32>
    %c1 = arith.constant 1 : index
    %c0_18 = arith.constant 0 : index
    %c0_19 = arith.constant 0 : index
    %24 = vector.load %arg2[%c1, %c0_18, %c0_19] : memref<4x32x32xf32, #tpu.memory_space<vmem>>, vector<1x32x32xf32>
    %25 = vector.shape_cast %24 : vector<1x32x32xf32> to vector<32x32xf32>
    %cst_20 = arith.constant dense<0.000000e+00> : vector<2x32xf32>
    %26 = tpu.matmul %5, %25, %cst_20 {dimension_numbers = #tpu.dot_dimension_numbers<[1], [0], [0], [1], [0, 0, 1, 1], [], []>} : vector<2x32xf32>, vector<32x32xf32>, vector<2x32xf32> -> vector<2x32xf32>
    %c1_21 = arith.constant 1 : index
    %c0_22 = arith.constant 0 : index
    %c0_23 = arith.constant 0 : index
    %27 = vector.load %arg3[%c1_21, %c0_22, %c0_23] : memref<4x32x32xf32, #tpu.memory_space<vmem>>, vector<1x32x32xf32>
    %28 = vector.shape_cast %27 : vector<1x32x32xf32> to vector<32x32xf32>
    %cst_24 = arith.constant dense<0.000000e+00> : vector<2x32xf32>
    %29 = tpu.matmul %6, %28, %cst_24 {dimension_numbers = #tpu.dot_dimension_numbers<[1], [0], [0], [1], [0, 0, 1, 1], [], []>} : vector<2x32xf32>, vector<32x32xf32>, vector<2x32xf32> -> vector<2x32xf32>
    %30 = arith.addf %26, %29 : vector<2x32xf32>
    %c1_25 = arith.constant 1 : index
    %c0_26 = arith.constant 0 : index
    %c0_27 = arith.constant 0 : index
    %31 = vector.load %arg4[%c1_25, %c0_26, %c0_27] : memref<4x1x32xf32, #tpu.memory_space<vmem>>, vector<1x1x32xf32>
    %32 = vector.shape_cast %31 : vector<1x1x32xf32> to vector<1x32xf32>
    %33 = vector.broadcast %32 : vector<1x32xf32> to vector<2x32xf32>
    %34 = arith.addf %30, %33 : vector<2x32xf32>
    %35 = arith.negf %34 : vector<2x32xf32>
    %36 = math.exp %35 : vector<2x32xf32>
    %cst_28 = arith.constant 1.000000e+00 : f32
    %37 = vector.broadcast %cst_28 : f32 to vector<2x32xf32>
    %38 = arith.addf %37, %36 : vector<2x32xf32>
    %39 = arith.divf %37, %38 : vector<2x32xf32>
    %c2 = arith.constant 2 : index
    %c0_29 = arith.constant 0 : index
    %c0_30 = arith.constant 0 : index
    %40 = vector.load %arg2[%c2, %c0_29, %c0_30] : memref<4x32x32xf32, #tpu.memory_space<vmem>>, vector<1x32x32xf32>
    %41 = vector.shape_cast %40 : vector<1x32x32xf32> to vector<32x32xf32>
    %cst_31 = arith.constant dense<0.000000e+00> : vector<2x32xf32>
    %42 = tpu.matmul %5, %41, %cst_31 {dimension_numbers = #tpu.dot_dimension_numbers<[1], [0], [0], [1], [0, 0, 1, 1], [], []>} : vector<2x32xf32>, vector<32x32xf32>, vector<2x32xf32> -> vector<2x32xf32>
    %c2_32 = arith.constant 2 : index
    %c0_33 = arith.constant 0 : index
    %c0_34 = arith.constant 0 : index
    %43 = vector.load %arg3[%c2_32, %c0_33, %c0_34] : memref<4x32x32xf32, #tpu.memory_space<vmem>>, vector<1x32x32xf32>
    %44 = vector.shape_cast %43 : vector<1x32x32xf32> to vector<32x32xf32>
    %cst_35 = arith.constant dense<0.000000e+00> : vector<2x32xf32>
    %45 = tpu.matmul %6, %44, %cst_35 {dimension_numbers = #tpu.dot_dimension_numbers<[1], [0], [0], [1], [0, 0, 1, 1], [], []>} : vector<2x32xf32>, vector<32x32xf32>, vector<2x32xf32> -> vector<2x32xf32>
    %46 = arith.addf %42, %45 : vector<2x32xf32>
    %c2_36 = arith.constant 2 : index
    %c0_37 = arith.constant 0 : index
    %c0_38 = arith.constant 0 : index
    %47 = vector.load %arg4[%c2_36, %c0_37, %c0_38] : memref<4x1x32xf32, #tpu.memory_space<vmem>>, vector<1x1x32xf32>
    %48 = vector.shape_cast %47 : vector<1x1x32xf32> to vector<1x32xf32>
    %49 = vector.broadcast %48 : vector<1x32xf32> to vector<2x32xf32>
    %50 = arith.addf %46, %49 : vector<2x32xf32>
    %51 = math.tanh %50 : vector<2x32xf32>
    %c3 = arith.constant 3 : index
    %c0_39 = arith.constant 0 : index
    %c0_40 = arith.constant 0 : index
    %52 = vector.load %arg2[%c3, %c0_39, %c0_40] : memref<4x32x32xf32, #tpu.memory_space<vmem>>, vector<1x32x32xf32>
    %53 = vector.shape_cast %52 : vector<1x32x32xf32> to vector<32x32xf32>
    %cst_41 = arith.constant dense<0.000000e+00> : vector<2x32xf32>
    %54 = tpu.matmul %5, %53, %cst_41 {dimension_numbers = #tpu.dot_dimension_numbers<[1], [0], [0], [1], [0, 0, 1, 1], [], []>} : vector<2x32xf32>, vector<32x32xf32>, vector<2x32xf32> -> vector<2x32xf32>
    %c3_42 = arith.constant 3 : index
    %c0_43 = arith.constant 0 : index
    %c0_44 = arith.constant 0 : index
    %55 = vector.load %arg3[%c3_42, %c0_43, %c0_44] : memref<4x32x32xf32, #tpu.memory_space<vmem>>, vector<1x32x32xf32>
    %56 = vector.shape_cast %55 : vector<1x32x32xf32> to vector<32x32xf32>
    %cst_45 = arith.constant dense<0.000000e+00> : vector<2x32xf32>
    %57 = tpu.matmul %6, %56, %cst_45 {dimension_numbers = #tpu.dot_dimension_numbers<[1], [0], [0], [1], [0, 0, 1, 1], [], []>} : vector<2x32xf32>, vector<32x32xf32>, vector<2x32xf32> -> vector<2x32xf32>
    %58 = arith.addf %54, %57 : vector<2x32xf32>
    %c3_46 = arith.constant 3 : index
    %c0_47 = arith.constant 0 : index
    %c0_48 = arith.constant 0 : index
    %59 = vector.load %arg4[%c3_46, %c0_47, %c0_48] : memref<4x1x32xf32, #tpu.memory_space<vmem>>, vector<1x1x32xf32>
    %60 = vector.shape_cast %59 : vector<1x1x32xf32> to vector<1x32xf32>
    %61 = vector.broadcast %60 : vector<1x32xf32> to vector<2x32xf32>
    %62 = arith.addf %58, %61 : vector<2x32xf32>
    %63 = arith.negf %62 : vector<2x32xf32>
    %64 = math.exp %63 : vector<2x32xf32>
    %cst_49 = arith.constant 1.000000e+00 : f32
    %65 = vector.broadcast %cst_49 : f32 to vector<2x32xf32>
    %66 = arith.addf %65, %64 : vector<2x32xf32>
    %67 = arith.divf %65, %66 : vector<2x32xf32>
    %68 = arith.mulf %39, %7 : vector<2x32xf32>
    %69 = arith.mulf %23, %51 : vector<2x32xf32>
    %70 = arith.addf %68, %69 : vector<2x32xf32>
    %71 = math.tanh %70 : vector<2x32xf32>
    %72 = arith.mulf %67, %71 : vector<2x32xf32>
    %c0_50 = arith.constant 0 : index
    %c0_51 = arith.constant 0 : index
    %73 = vector.load %arg7[%c0_50, %c0_51] : memref<2x32xf32, #tpu.memory_space<vmem>>, vector<2x32xf32>
    tpu.vector_store %arg7[%c0_50, %c0_51], %70 {strides = array<i32>} : memref<2x32xf32, #tpu.memory_space<vmem>>, vector<2x32xf32>,
    %c0_52 = arith.constant 0 : index
    %c0_53 = arith.constant 0 : index
    %74 = vector.load %arg6[%c0_52, %c0_53] : memref<2x32xf32, #tpu.memory_space<vmem>>, vector<2x32xf32>
    tpu.vector_store %arg6[%c0_52, %c0_53], %72 {strides = array<i32>} : memref<2x32xf32, #tpu.memory_space<vmem>>, vector<2x32xf32>,
    %75 = arith.index_cast %c0_i32_1 : i32 to index
    %c0_54 = arith.constant 0 : index
    %c0_55 = arith.constant 0 : index
    %76 = vector.load %arg5[%75, %c0_54, %c0_55] : memref<8x2x32xf32, #tpu.memory_space<vmem>>, vector<1x2x32xf32>
    %77 = vector.shape_cast %76 : vector<1x2x32xf32> to vector<2x32xf32>
    %78 = vector.shape_cast %72 : vector<2x32xf32> to vector<1x2x32xf32>
    tpu.vector_store %arg5[%75, %c0_54, %c0_55], %78 {strides = array<i32>} : memref<8x2x32xf32, #tpu.memory_space<vmem>>, vector<1x2x32xf32>,
    %c1_i32 = arith.constant 1 : i32
    %79 = arith.index_cast %c1_i32 : i32 to index
    %c0_56 = arith.constant 0 : index
    %c0_57 = arith.constant 0 : index
    %80 = vector.load %arg1[%79, %c0_56, %c0_57] : memref<8x2x32xf32, #tpu.memory_space<vmem>>, vector<1x2x32xf32>
    %81 = vector.shape_cast %80 : vector<1x2x32xf32> to vector<2x32xf32>
    %c0_58 = arith.constant 0 : index
    %c0_59 = arith.constant 0 : index
    %82 = vector.load %arg6[%c0_58, %c0_59] : memref<2x32xf32, #tpu.memory_space<vmem>>, vector<2x32xf32>
    %c0_60 = arith.constant 0 : index
    %c0_61 = arith.constant 0 : index
    %83 = vector.load %arg7[%c0_60, %c0_61] : memref<2x32xf32, #tpu.memory_space<vmem>>, vector<2x32xf32>
    %c0_62 = arith.constant 0 : index
    %c0_63 = arith.constant 0 : index
    %c0_64 = arith.constant 0 : index
    %84 = vector.load %arg2[%c0_62, %c0_63, %c0_64] : memref<4x32x32xf32, #tpu.memory_space<vmem>>, vector<1x32x32xf32>
    %85 = vector.shape_cast %84 : vector<1x32x32xf32> to vector<32x32xf32>
    %cst_65 = arith.constant dense<0.000000e+00> : vector<2x32xf32>
    %86 = tpu.matmul %81, %85, %cst_65 {dimension_numbers = #tpu.dot_dimension_numbers<[1], [0], [0], [1], [0, 0, 1, 1], [], []>} : vector<2x32xf32>, vector<32x32xf32>, vector<2x32xf32> -> vector<2x32xf32>
    %c0_66 = arith.constant 0 : index
    %c0_67 = arith.constant 0 : index
    %c0_68 = arith.constant 0 : index
    %87 = vector.load %arg3[%c0_66, %c0_67, %c0_68] : memref<4x32x32xf32, #tpu.memory_space<vmem>>, vector<1x32x32xf32>
    %88 = vector.shape_cast %87 : vector<1x32x32xf32> to vector<32x32xf32>
    %cst_69 = arith.constant dense<0.000000e+00> : vector<2x32xf32>
    %89 = tpu.matmul %82, %88, %cst_69 {dimension_numbers = #tpu.dot_dimension_numbers<[1], [0], [0], [1], [0, 0, 1, 1], [], []>} : vector<2x32xf32>, vector<32x32xf32>, vector<2x32xf32> -> vector<2x32xf32>
    %90 = arith.addf %86, %89 : vector<2x32xf32>
    %c0_70 = arith.constant 0 : index
    %c0_71 = arith.constant 0 : index
    %c0_72 = arith.constant 0 : index
    %91 = vector.load %arg4[%c0_70, %c0_71, %c0_72] : memref<4x1x32xf32, #tpu.memory_space<vmem>>, vector<1x1x32xf32>
    %92 = vector.shape_cast %91 : vector<1x1x32xf32> to vector<1x32xf32>
    %93 = vector.broadcast %92 : vector<1x32xf32> to vector<2x32xf32>
    %94 = arith.addf %90, %93 : vector<2x32xf32>
    %95 = arith.negf %94 : vector<2x32xf32>
    %96 = math.exp %95 : vector<2x32xf32>
    %cst_73 = arith.constant 1.000000e+00 : f32
    %97 = vector.broadcast %cst_73 : f32 to vector<2x32xf32>
    %98 = arith.addf %97, %96 : vector<2x32xf32>
    %99 = arith.divf %97, %98 : vector<2x32xf32>
    %c1_74 = arith.constant 1 : index
    %c0_75 = arith.constant 0 : index
    %c0_76 = arith.constant 0 : index
    %100 = vector.load %arg2[%c1_74, %c0_75, %c0_76] : memref<4x32x32xf32, #tpu.memory_space<vmem>>, vector<1x32x32xf32>
    %101 = vector.shape_cast %100 : vector<1x32x32xf32> to vector<32x32xf32>
    %cst_77 = arith.constant dense<0.000000e+00> : vector<2x32xf32>
    %102 = tpu.matmul %81, %101, %cst_77 {dimension_numbers = #tpu.dot_dimension_numbers<[1], [0], [0], [1], [0, 0, 1, 1], [], []>} : vector<2x32xf32>, vector<32x32xf32>, vector<2x32xf32> -> vector<2x32xf32>
    %c1_78 = arith.constant 1 : index
    %c0_79 = arith.constant 0 : index
    %c0_80 = arith.constant 0 : index
    %103 = vector.load %arg3[%c1_78, %c0_79, %c0_80] : memref<4x32x32xf32, #tpu.memory_space<vmem>>, vector<1x32x32xf32>
    %104 = vector.shape_cast %103 : vector<1x32x32xf32> to vector<32x32xf32>
    %cst_81 = arith.constant dense<0.000000e+00> : vector<2x32xf32>
    %105 = tpu.matmul %82, %104, %cst_81 {dimension_numbers = #tpu.dot_dimension_numbers<[1], [0], [0], [1], [0, 0, 1, 1], [], []>} : vector<2x32xf32>, vector<32x32xf32>, vector<2x32xf32> -> vector<2x32xf32>
    %106 = arith.addf %102, %105 : vector<2x32xf32>
    %c1_82 = arith.constant 1 : index
    %c0_83 = arith.constant 0 : index
    %c0_84 = arith.constant 0 : index
    %107 = vector.load %arg4[%c1_82, %c0_83, %c0_84] : memref<4x1x32xf32, #tpu.memory_space<vmem>>, vector<1x1x32xf32>
    %108 = vector.shape_cast %107 : vector<1x1x32xf32> to vector<1x32xf32>
    %109 = vector.broadcast %108 : vector<1x32xf32> to vector<2x32xf32>
    %110 = arith.addf %106, %109 : vector<2x32xf32>
    %111 = arith.negf %110 : vector<2x32xf32>
    %112 = math.exp %111 : vector<2x32xf32>
    %cst_85 = arith.constant 1.000000e+00 : f32
    %113 = vector.broadcast %cst_85 : f32 to vector<2x32xf32>
    %114 = arith.addf %113, %112 : vector<2x32xf32>
    %115 = arith.divf %113, %114 : vector<2x32xf32>
    %c2_86 = arith.constant 2 : index
    %c0_87 = arith.constant 0 : index
    %c0_88 = arith.constant 0 : index
    %116 = vector.load %arg2[%c2_86, %c0_87, %c0_88] : memref<4x32x32xf32, #tpu.memory_space<vmem>>, vector<1x32x32xf32>
    %117 = vector.shape_cast %116 : vector<1x32x32xf32> to vector<32x32xf32>
    %cst_89 = arith.constant dense<0.000000e+00> : vector<2x32xf32>
    %118 = tpu.matmul %81, %117, %cst_89 {dimension_numbers = #tpu.dot_dimension_numbers<[1], [0], [0], [1], [0, 0, 1, 1], [], []>} : vector<2x32xf32>, vector<32x32xf32>, vector<2x32xf32> -> vector<2x32xf32>
    %c2_90 = arith.constant 2 : index
    %c0_91 = arith.constant 0 : index
    %c0_92 = arith.constant 0 : index
    %119 = vector.load %arg3[%c2_90, %c0_91, %c0_92] : memref<4x32x32xf32, #tpu.memory_space<vmem>>, vector<1x32x32xf32>
    %120 = vector.shape_cast %119 : vector<1x32x32xf32> to vector<32x32xf32>
    %cst_93 = arith.constant dense<0.000000e+00> : vector<2x32xf32>
    %121 = tpu.matmul %82, %120, %cst_93 {dimension_numbers = #tpu.dot_dimension_numbers<[1], [0], [0], [1], [0, 0, 1, 1], [], []>} : vector<2x32xf32>, vector<32x32xf32>, vector<2x32xf32> -> vector<2x32xf32>
    %122 = arith.addf %118, %121 : vector<2x32xf32>
    %c2_94 = arith.constant 2 : index
    %c0_95 = arith.constant 0 : index
    %c0_96 = arith.constant 0 : index
    %123 = vector.load %arg4[%c2_94, %c0_95, %c0_96] : memref<4x1x32xf32, #tpu.memory_space<vmem>>, vector<1x1x32xf32>
    %124 = vector.shape_cast %123 : vector<1x1x32xf32> to vector<1x32xf32>
    %125 = vector.broadcast %124 : vector<1x32xf32> to vector<2x32xf32>
    %126 = arith.addf %122, %125 : vector<2x32xf32>
    %127 = math.tanh %126 : vector<2x32xf32>
    %c3_97 = arith.constant 3 : index
    %c0_98 = arith.constant 0 : index
    %c0_99 = arith.constant 0 : index
    %128 = vector.load %arg2[%c3_97, %c0_98, %c0_99] : memref<4x32x32xf32, #tpu.memory_space<vmem>>, vector<1x32x32xf32>
    %129 = vector.shape_cast %128 : vector<1x32x32xf32> to vector<32x32xf32>
    %cst_100 = arith.constant dense<0.000000e+00> : vector<2x32xf32>
    %130 = tpu.matmul %81, %129, %cst_100 {dimension_numbers = #tpu.dot_dimension_numbers<[1], [0], [0], [1], [0, 0, 1, 1], [], []>} : vector<2x32xf32>, vector<32x32xf32>, vector<2x32xf32> -> vector<2x32xf32>
    %c3_101 = arith.constant 3 : index
    %c0_102 = arith.constant 0 : index
    %c0_103 = arith.constant 0 : index
    %131 = vector.load %arg3[%c3_101, %c0_102, %c0_103] : memref<4x32x32xf32, #tpu.memory_space<vmem>>, vector<1x32x32xf32>
    %132 = vector.shape_cast %131 : vector<1x32x32xf32> to vector<32x32xf32>
    %cst_104 = arith.constant dense<0.000000e+00> : vector<2x32xf32>
    %133 = tpu.matmul %82, %132, %cst_104 {dimension_numbers = #tpu.dot_dimension_numbers<[1], [0], [0], [1], [0, 0, 1, 1], [], []>} : vector<2x32xf32>, vector<32x32xf32>, vector<2x32xf32> -> vector<2x32xf32>
    %134 = arith.addf %130, %133 : vector<2x32xf32>
    %c3_105 = arith.constant 3 : index
    %c0_106 = arith.constant 0 : index
    %c0_107 = arith.constant 0 : index
    %135 = vector.load %arg4[%c3_105, %c0_106, %c0_107] : memref<4x1x32xf32, #tpu.memory_space<vmem>>, vector<1x1x32xf32>
    %136 = vector.shape_cast %135 : vector<1x1x32xf32> to vector<1x32xf32>
    %137 = vector.broadcast %136 : vector<1x32xf32> to vector<2x32xf32>
    %138 = arith.addf %134, %137 : vector<2x32xf32>
    %139 = arith.negf %138 : vector<2x32xf32>
    %140 = math.exp %139 : vector<2x32xf32>
    %cst_108 = arith.constant 1.000000e+00 : f32
    %141 = vector.broadcast %cst_108 : f32 to vector<2x32xf32>
    %142 = arith.addf %141, %140 : vector<2x32xf32>
    %143 = arith.divf %141, %142 : vector<2x32xf32>
    %144 = arith.mulf %115, %83 : vector<2x32xf32>
    %145 = arith.mulf %99, %127 : vector<2x32xf32>
    %146 = arith.addf %144, %145 : vector<2x32xf32>
    %147 = math.tanh %146 : vector<2x32xf32>
    %148 = arith.mulf %143, %147 : vector<2x32xf32>
    %c0_109 = arith.constant 0 : index
    %c0_110 = arith.constant 0 : index
    %149 = vector.load %arg7[%c0_109, %c0_110] : memref<2x32xf32, #tpu.memory_space<vmem>>, vector<2x32xf32>
    tpu.vector_store %arg7[%c0_109, %c0_110], %146 {strides = array<i32>} : memref<2x32xf32, #tpu.memory_space<vmem>>, vector<2x32xf32>,
    %c0_111 = arith.constant 0 : index
    %c0_112 = arith.constant 0 : index
    %150 = vector.load %arg6[%c0_111, %c0_112] : memref<2x32xf32, #tpu.memory_space<vmem>>, vector<2x32xf32>
    tpu.vector_store %arg6[%c0_111, %c0_112], %148 {strides = array<i32>} : memref<2x32xf32, #tpu.memory_space<vmem>>, vector<2x32xf32>,
    %151 = arith.index_cast %c1_i32 : i32 to index
    %c0_113 = arith.constant 0 : index
    %c0_114 = arith.constant 0 : index
    %152 = vector.load %arg5[%151, %c0_113, %c0_114] : memref<8x2x32xf32, #tpu.memory_space<vmem>>, vector<1x2x32xf32>
    %153 = vector.shape_cast %152 : vector<1x2x32xf32> to vector<2x32xf32>
    %154 = vector.shape_cast %148 : vector<2x32xf32> to vector<1x2x32xf32>
    tpu.vector_store %arg5[%151, %c0_113, %c0_114], %154 {strides = array<i32>} : memref<8x2x32xf32, #tpu.memory_space<vmem>>, vector<1x2x32xf32>,
    %c2_i32 = arith.constant 2 : i32
    %155 = arith.index_cast %c2_i32 : i32 to index
    %c0_115 = arith.constant 0 : index
    %c0_116 = arith.constant 0 : index
    %156 = vector.load %arg1[%155, %c0_115, %c0_116] : memref<8x2x32xf32, #tpu.memory_space<vmem>>, vector<1x2x32xf32>
    %157 = vector.shape_cast %156 : vector<1x2x32xf32> to vector<2x32xf32>
    %c0_117 = arith.constant 0 : index
    %c0_118 = arith.constant 0 : index
    %158 = vector.load %arg6[%c0_117, %c0_118] : memref<2x32xf32, #tpu.memory_space<vmem>>, vector<2x32xf32>
    %c0_119 = arith.constant 0 : index
    %c0_120 = arith.constant 0 : index
    %159 = vector.load %arg7[%c0_119, %c0_120] : memref<2x32xf32, #tpu.memory_space<vmem>>, vector<2x32xf32>
    %c0_121 = arith.constant 0 : index
    %c0_122 = arith.constant 0 : index
    %c0_123 = arith.constant 0 : index
    %160 = vector.load %arg2[%c0_121, %c0_122, %c0_123] : memref<4x32x32xf32, #tpu.memory_space<vmem>>, vector<1x32x32xf32>
    %161 = vector.shape_cast %160 : vector<1x32x32xf32> to vector<32x32xf32>
    %cst_124 = arith.constant dense<0.000000e+00> : vector<2x32xf32>
    %162 = tpu.matmul %157, %161, %cst_124 {dimension_numbers = #tpu.dot_dimension_numbers<[1], [0], [0], [1], [0, 0, 1, 1], [], []>} : vector<2x32xf32>, vector<32x32xf32>, vector<2x32xf32> -> vector<2x32xf32>
    %c0_125 = arith.constant 0 : index
    %c0_126 = arith.constant 0 : index
    %c0_127 = arith.constant 0 : index
    %163 = vector.load %arg3[%c0_125, %c0_126, %c0_127] : memref<4x32x32xf32, #tpu.memory_space<vmem>>, vector<1x32x32xf32>
    %164 = vector.shape_cast %163 : vector<1x32x32xf32> to vector<32x32xf32>
    %cst_128 = arith.constant dense<0.000000e+00> : vector<2x32xf32>
    %165 = tpu.matmul %158, %164, %cst_128 {dimension_numbers = #tpu.dot_dimension_numbers<[1], [0], [0], [1], [0, 0, 1, 1], [], []>} : vector<2x32xf32>, vector<32x32xf32>, vector<2x32xf32> -> vector<2x32xf32>
    %166 = arith.addf %162, %165 : vector<2x32xf32>
    %c0_129 = arith.constant 0 : index
    %c0_130 = arith.constant 0 : index
    %c0_131 = arith.constant 0 : index
    %167 = vector.load %arg4[%c0_129, %c0_130, %c0_131] : memref<4x1x32xf32, #tpu.memory_space<vmem>>, vector<1x1x32xf32>
    %168 = vector.shape_cast %167 : vector<1x1x32xf32> to vector<1x32xf32>
    %169 = vector.broadcast %168 : vector<1x32xf32> to vector<2x32xf32>
    %170 = arith.addf %166, %169 : vector<2x32xf32>
    %171 = arith.negf %170 : vector<2x32xf32>
    %172 = math.exp %171 : vector<2x32xf32>
    %cst_132 = arith.constant 1.000000e+00 : f32
    %173 = vector.broadcast %cst_132 : f32 to vector<2x32xf32>
    %174 = arith.addf %173, %172 : vector<2x32xf32>
    %175 = arith.divf %173, %174 : vector<2x32xf32>
    %c1_133 = arith.constant 1 : index
    %c0_134 = arith.constant 0 : index
    %c0_135 = arith.constant 0 : index
    %176 = vector.load %arg2[%c1_133, %c0_134, %c0_135] : memref<4x32x32xf32, #tpu.memory_space<vmem>>, vector<1x32x32xf32>
    %177 = vector.shape_cast %176 : vector<1x32x32xf32> to vector<32x32xf32>
    %cst_136 = arith.constant dense<0.000000e+00> : vector<2x32xf32>
    %178 = tpu.matmul %157, %177, %cst_136 {dimension_numbers = #tpu.dot_dimension_numbers<[1], [0], [0], [1], [0, 0, 1, 1], [], []>} : vector<2x32xf32>, vector<32x32xf32>, vector<2x32xf32> -> vector<2x32xf32>
    %c1_137 = arith.constant 1 : index
    %c0_138 = arith.constant 0 : index
    %c0_139 = arith.constant 0 : index
    %179 = vector.load %arg3[%c1_137, %c0_138, %c0_139] : memref<4x32x32xf32, #tpu.memory_space<vmem>>, vector<1x32x32xf32>
    %180 = vector.shape_cast %179 : vector<1x32x32xf32> to vector<32x32xf32>
    %cst_140 = arith.constant dense<0.000000e+00> : vector<2x32xf32>
    %181 = tpu.matmul %158, %180, %cst_140 {dimension_numbers = #tpu.dot_dimension_numbers<[1], [0], [0], [1], [0, 0, 1, 1], [], []>} : vector<2x32xf32>, vector<32x32xf32>, vector<2x32xf32> -> vector<2x32xf32>
    %182 = arith.addf %178, %181 : vector<2x32xf32>
    %c1_141 = arith.constant 1 : index
    %c0_142 = arith.constant 0 : index
    %c0_143 = arith.constant 0 : index
    %183 = vector.load %arg4[%c1_141, %c0_142, %c0_143] : memref<4x1x32xf32, #tpu.memory_space<vmem>>, vector<1x1x32xf32>
    %184 = vector.shape_cast %183 : vector<1x1x32xf32> to vector<1x32xf32>
    %185 = vector.broadcast %184 : vector<1x32xf32> to vector<2x32xf32>
    %186 = arith.addf %182, %185 : vector<2x32xf32>
    %187 = arith.negf %186 : vector<2x32xf32>
    %188 = math.exp %187 : vector<2x32xf32>
    %cst_144 = arith.constant 1.000000e+00 : f32
    %189 = vector.broadcast %cst_144 : f32 to vector<2x32xf32>
    %190 = arith.addf %189, %188 : vector<2x32xf32>
    %191 = arith.divf %189, %190 : vector<2x32xf32>
    %c2_145 = arith.constant 2 : index
    %c0_146 = arith.constant 0 : index
    %c0_147 = arith.constant 0 : index
    %192 = vector.load %arg2[%c2_145, %c0_146, %c0_147] : memref<4x32x32xf32, #tpu.memory_space<vmem>>, vector<1x32x32xf32>
    %193 = vector.shape_cast %192 : vector<1x32x32xf32> to vector<32x32xf32>
    %cst_148 = arith.constant dense<0.000000e+00> : vector<2x32xf32>
    %194 = tpu.matmul %157, %193, %cst_148 {dimension_numbers = #tpu.dot_dimension_numbers<[1], [0], [0], [1], [0, 0, 1, 1], [], []>} : vector<2x32xf32>, vector<32x32xf32>, vector<2x32xf32> -> vector<2x32xf32>
    %c2_149 = arith.constant 2 : index
    %c0_150 = arith.constant 0 : index
    %c0_151 = arith.constant 0 : index
    %195 = vector.load %arg3[%c2_149, %c0_150, %c0_151] : memref<4x32x32xf32, #tpu.memory_space<vmem>>, vector<1x32x32xf32>
    %196 = vector.shape_cast %195 : vector<1x32x32xf32> to vector<32x32xf32>
    %cst_152 = arith.constant dense<0.000000e+00> : vector<2x32xf32>
    %197 = tpu.matmul %158, %196, %cst_152 {dimension_numbers = #tpu.dot_dimension_numbers<[1], [0], [0], [1], [0, 0, 1, 1], [], []>} : vector<2x32xf32>, vector<32x32xf32>, vector<2x32xf32> -> vector<2x32xf32>
    %198 = arith.addf %194, %197 : vector<2x32xf32>
    %c2_153 = arith.constant 2 : index
    %c0_154 = arith.constant 0 : index
    %c0_155 = arith.constant 0 : index
    %199 = vector.load %arg4[%c2_153, %c0_154, %c0_155] : memref<4x1x32xf32, #tpu.memory_space<vmem>>, vector<1x1x32xf32>
    %200 = vector.shape_cast %199 : vector<1x1x32xf32> to vector<1x32xf32>
    %201 = vector.broadcast %200 : vector<1x32xf32> to vector<2x32xf32>
    %202 = arith.addf %198, %201 : vector<2x32xf32>
    %203 = math.tanh %202 : vector<2x32xf32>
    %c3_156 = arith.constant 3 : index
    %c0_157 = arith.constant 0 : index
    %c0_158 = arith.constant 0 : index
    %204 = vector.load %arg2[%c3_156, %c0_157, %c0_158] : memref<4x32x32xf32, #tpu.memory_space<vmem>>, vector<1x32x32xf32>
    %205 = vector.shape_cast %204 : vector<1x32x32xf32> to vector<32x32xf32>
    %cst_159 = arith.constant dense<0.000000e+00> : vector<2x32xf32>
    %206 = tpu.matmul %157, %205, %cst_159 {dimension_numbers = #tpu.dot_dimension_numbers<[1], [0], [0], [1], [0, 0, 1, 1], [], []>} : vector<2x32xf32>, vector<32x32xf32>, vector<2x32xf32> -> vector<2x32xf32>
    %c3_160 = arith.constant 3 : index
    %c0_161 = arith.constant 0 : index
    %c0_162 = arith.constant 0 : index
    %207 = vector.load %arg3[%c3_160, %c0_161, %c0_162] : memref<4x32x32xf32, #tpu.memory_space<vmem>>, vector<1x32x32xf32>
    %208 = vector.shape_cast %207 : vector<1x32x32xf32> to vector<32x32xf32>
    %cst_163 = arith.constant dense<0.000000e+00> : vector<2x32xf32>
    %209 = tpu.matmul %158, %208, %cst_163 {dimension_numbers = #tpu.dot_dimension_numbers<[1], [0], [0], [1], [0, 0, 1, 1], [], []>} : vector<2x32xf32>, vector<32x32xf32>, vector<2x32xf32> -> vector<2x32xf32>
    %210 = arith.addf %206, %209 : vector<2x32xf32>
    %c3_164 = arith.constant 3 : index
    %c0_165 = arith.constant 0 : index
    %c0_166 = arith.constant 0 : index
    %211 = vector.load %arg4[%c3_164, %c0_165, %c0_166] : memref<4x1x32xf32, #tpu.memory_space<vmem>>, vector<1x1x32xf32>
    %212 = vector.shape_cast %211 : vector<1x1x32xf32> to vector<1x32xf32>
    %213 = vector.broadcast %212 : vector<1x32xf32> to vector<2x32xf32>
    %214 = arith.addf %210, %213 : vector<2x32xf32>
    %215 = arith.negf %214 : vector<2x32xf32>
    %216 = math.exp %215 : vector<2x32xf32>
    %cst_167 = arith.constant 1.000000e+00 : f32
    %217 = vector.broadcast %cst_167 : f32 to vector<2x32xf32>
    %218 = arith.addf %217, %216 : vector<2x32xf32>
    %219 = arith.divf %217, %218 : vector<2x32xf32>
    %220 = arith.mulf %191, %159 : vector<2x32xf32>
    %221 = arith.mulf %175, %203 : vector<2x32xf32>
    %222 = arith.addf %220, %221 : vector<2x32xf32>
    %223 = math.tanh %222 : vector<2x32xf32>
    %224 = arith.mulf %219, %223 : vector<2x32xf32>
    %c0_168 = arith.constant 0 : index
    %c0_169 = arith.constant 0 : index
    %225 = vector.load %arg7[%c0_168, %c0_169] : memref<2x32xf32, #tpu.memory_space<vmem>>, vector<2x32xf32>
    tpu.vector_store %arg7[%c0_168, %c0_169], %222 {strides = array<i32>} : memref<2x32xf32, #tpu.memory_space<vmem>>, vector<2x32xf32>,
    %c0_170 = arith.constant 0 : index
    %c0_171 = arith.constant 0 : index
    %226 = vector.load %arg6[%c0_170, %c0_171] : memref<2x32xf32, #tpu.memory_space<vmem>>, vector<2x32xf32>
    tpu.vector_store %arg6[%c0_170, %c0_171], %224 {strides = array<i32>} : memref<2x32xf32, #tpu.memory_space<vmem>>, vector<2x32xf32>,
    %227 = arith.index_cast %c2_i32 : i32 to index
    %c0_172 = arith.constant 0 : index
    %c0_173 = arith.constant 0 : index
    %228 = vector.load %arg5[%227, %c0_172, %c0_173] : memref<8x2x32xf32, #tpu.memory_space<vmem>>, vector<1x2x32xf32>
    %229 = vector.shape_cast %228 : vector<1x2x32xf32> to vector<2x32xf32>
    %230 = vector.shape_cast %224 : vector<2x32xf32> to vector<1x2x32xf32>
    tpu.vector_store %arg5[%227, %c0_172, %c0_173], %230 {strides = array<i32>} : memref<8x2x32xf32, #tpu.memory_space<vmem>>, vector<1x2x32xf32>,
    %c3_i32 = arith.constant 3 : i32
    %231 = arith.index_cast %c3_i32 : i32 to index
    %c0_174 = arith.constant 0 : index
    %c0_175 = arith.constant 0 : index
    %232 = vector.load %arg1[%231, %c0_174, %c0_175] : memref<8x2x32xf32, #tpu.memory_space<vmem>>, vector<1x2x32xf32>
    %233 = vector.shape_cast %232 : vector<1x2x32xf32> to vector<2x32xf32>
    %c0_176 = arith.constant 0 : index
    %c0_177 = arith.constant 0 : index
    %234 = vector.load %arg6[%c0_176, %c0_177] : memref<2x32xf32, #tpu.memory_space<vmem>>, vector<2x32xf32>
    %c0_178 = arith.constant 0 : index
    %c0_179 = arith.constant 0 : index
    %235 = vector.load %arg7[%c0_178, %c0_179] : memref<2x32xf32, #tpu.memory_space<vmem>>, vector<2x32xf32>
    %c0_180 = arith.constant 0 : index
    %c0_181 = arith.constant 0 : index
    %c0_182 = arith.constant 0 : index
    %236 = vector.load %arg2[%c0_180, %c0_181, %c0_182] : memref<4x32x32xf32, #tpu.memory_space<vmem>>, vector<1x32x32xf32>
    %237 = vector.shape_cast %236 : vector<1x32x32xf32> to vector<32x32xf32>
    %cst_183 = arith.constant dense<0.000000e+00> : vector<2x32xf32>
    %238 = tpu.matmul %233, %237, %cst_183 {dimension_numbers = #tpu.dot_dimension_numbers<[1], [0], [0], [1], [0, 0, 1, 1], [], []>} : vector<2x32xf32>, vector<32x32xf32>, vector<2x32xf32> -> vector<2x32xf32>
    %c0_184 = arith.constant 0 : index
    %c0_185 = arith.constant 0 : index
    %c0_186 = arith.constant 0 : index
    %239 = vector.load %arg3[%c0_184, %c0_185, %c0_186] : memref<4x32x32xf32, #tpu.memory_space<vmem>>, vector<1x32x32xf32>
    %240 = vector.shape_cast %239 : vector<1x32x32xf32> to vector<32x32xf32>
    %cst_187 = arith.constant dense<0.000000e+00> : vector<2x32xf32>
    %241 = tpu.matmul %234, %240, %cst_187 {dimension_numbers = #tpu.dot_dimension_numbers<[1], [0], [0], [1], [0, 0, 1, 1], [], []>} : vector<2x32xf32>, vector<32x32xf32>, vector<2x32xf32> -> vector<2x32xf32>
    %242 = arith.addf %238, %241 : vector<2x32xf32>
    %c0_188 = arith.constant 0 : index
    %c0_189 = arith.constant 0 : index
    %c0_190 = arith.constant 0 : index
    %243 = vector.load %arg4[%c0_188, %c0_189, %c0_190] : memref<4x1x32xf32, #tpu.memory_space<vmem>>, vector<1x1x32xf32>
    %244 = vector.shape_cast %243 : vector<1x1x32xf32> to vector<1x32xf32>
    %245 = vector.broadcast %244 : vector<1x32xf32> to vector<2x32xf32>
    %246 = arith.addf %242, %245 : vector<2x32xf32>
    %247 = arith.negf %246 : vector<2x32xf32>
    %248 = math.exp %247 : vector<2x32xf32>
    %cst_191 = arith.constant 1.000000e+00 : f32
    %249 = vector.broadcast %cst_191 : f32 to vector<2x32xf32>
    %250 = arith.addf %249, %248 : vector<2x32xf32>
    %251 = arith.divf %249, %250 : vector<2x32xf32>
    %c1_192 = arith.constant 1 : index
    %c0_193 = arith.constant 0 : index
    %c0_194 = arith.constant 0 : index
    %252 = vector.load %arg2[%c1_192, %c0_193, %c0_194] : memref<4x32x32xf32, #tpu.memory_space<vmem>>, vector<1x32x32xf32>
    %253 = vector.shape_cast %252 : vector<1x32x32xf32> to vector<32x32xf32>
    %cst_195 = arith.constant dense<0.000000e+00> : vector<2x32xf32>
    %254 = tpu.matmul %233, %253, %cst_195 {dimension_numbers = #tpu.dot_dimension_numbers<[1], [0], [0], [1], [0, 0, 1, 1], [], []>} : vector<2x32xf32>, vector<32x32xf32>, vector<2x32xf32> -> vector<2x32xf32>
    %c1_196 = arith.constant 1 : index
    %c0_197 = arith.constant 0 : index
    %c0_198 = arith.constant 0 : index
    %255 = vector.load %arg3[%c1_196, %c0_197, %c0_198] : memref<4x32x32xf32, #tpu.memory_space<vmem>>, vector<1x32x32xf32>
    %256 = vector.shape_cast %255 : vector<1x32x32xf32> to vector<32x32xf32>
    %cst_199 = arith.constant dense<0.000000e+00> : vector<2x32xf32>
    %257 = tpu.matmul %234, %256, %cst_199 {dimension_numbers = #tpu.dot_dimension_numbers<[1], [0], [0], [1], [0, 0, 1, 1], [], []>} : vector<2x32xf32>, vector<32x32xf32>, vector<2x32xf32> -> vector<2x32xf32>
    %258 = arith.addf %254, %257 : vector<2x32xf32>
    %c1_200 = arith.constant 1 : index
    %c0_201 = arith.constant 0 : index
    %c0_202 = arith.constant 0 : index
    %259 = vector.load %arg4[%c1_200, %c0_201, %c0_202] : memref<4x1x32xf32, #tpu.memory_space<vmem>>, vector<1x1x32xf32>
    %260 = vector.shape_cast %259 : vector<1x1x32xf32> to vector<1x32xf32>
    %261 = vector.broadcast %260 : vector<1x32xf32> to vector<2x32xf32>
    %262 = arith.addf %258, %261 : vector<2x32xf32>
    %263 = arith.negf %262 : vector<2x32xf32>
    %264 = math.exp %263 : vector<2x32xf32>
    %cst_203 = arith.constant 1.000000e+00 : f32
    %265 = vector.broadcast %cst_203 : f32 to vector<2x32xf32>
    %266 = arith.addf %265, %264 : vector<2x32xf32>
    %267 = arith.divf %265, %266 : vector<2x32xf32>
    %c2_204 = arith.constant 2 : index
    %c0_205 = arith.constant 0 : index
    %c0_206 = arith.constant 0 : index
    %268 = vector.load %arg2[%c2_204, %c0_205, %c0_206] : memref<4x32x32xf32, #tpu.memory_space<vmem>>, vector<1x32x32xf32>
    %269 = vector.shape_cast %268 : vector<1x32x32xf32> to vector<32x32xf32>
    %cst_207 = arith.constant dense<0.000000e+00> : vector<2x32xf32>
    %270 = tpu.matmul %233, %269, %cst_207 {dimension_numbers = #tpu.dot_dimension_numbers<[1], [0], [0], [1], [0, 0, 1, 1], [], []>} : vector<2x32xf32>, vector<32x32xf32>, vector<2x32xf32> -> vector<2x32xf32>
    %c2_208 = arith.constant 2 : index
    %c0_209 = arith.constant 0 : index
    %c0_210 = arith.constant 0 : index
    %271 = vector.load %arg3[%c2_208, %c0_209, %c0_210] : memref<4x32x32xf32, #tpu.memory_space<vmem>>, vector<1x32x32xf32>
    %272 = vector.shape_cast %271 : vector<1x32x32xf32> to vector<32x32xf32>
    %cst_211 = arith.constant dense<0.000000e+00> : vector<2x32xf32>
    %273 = tpu.matmul %234, %272, %cst_211 {dimension_numbers = #tpu.dot_dimension_numbers<[1], [0], [0], [1], [0, 0, 1, 1], [], []>} : vector<2x32xf32>, vector<32x32xf32>, vector<2x32xf32> -> vector<2x32xf32>
    %274 = arith.addf %270, %273 : vector<2x32xf32>
    %c2_212 = arith.constant 2 : index
    %c0_213 = arith.constant 0 : index
    %c0_214 = arith.constant 0 : index
    %275 = vector.load %arg4[%c2_212, %c0_213, %c0_214] : memref<4x1x32xf32, #tpu.memory_space<vmem>>, vector<1x1x32xf32>
    %276 = vector.shape_cast %275 : vector<1x1x32xf32> to vector<1x32xf32>
    %277 = vector.broadcast %276 : vector<1x32xf32> to vector<2x32xf32>
    %278 = arith.addf %274, %277 : vector<2x32xf32>
    %279 = math.tanh %278 : vector<2x32xf32>
    %c3_215 = arith.constant 3 : index
    %c0_216 = arith.constant 0 : index
    %c0_217 = arith.constant 0 : index
    %280 = vector.load %arg2[%c3_215, %c0_216, %c0_217] : memref<4x32x32xf32, #tpu.memory_space<vmem>>, vector<1x32x32xf32>
    %281 = vector.shape_cast %280 : vector<1x32x32xf32> to vector<32x32xf32>
    %cst_218 = arith.constant dense<0.000000e+00> : vector<2x32xf32>
    %282 = tpu.matmul %233, %281, %cst_218 {dimension_numbers = #tpu.dot_dimension_numbers<[1], [0], [0], [1], [0, 0, 1, 1], [], []>} : vector<2x32xf32>, vector<32x32xf32>, vector<2x32xf32> -> vector<2x32xf32>
    %c3_219 = arith.constant 3 : index
    %c0_220 = arith.constant 0 : index
    %c0_221 = arith.constant 0 : index
    %283 = vector.load %arg3[%c3_219, %c0_220, %c0_221] : memref<4x32x32xf32, #tpu.memory_space<vmem>>, vector<1x32x32xf32>
    %284 = vector.shape_cast %283 : vector<1x32x32xf32> to vector<32x32xf32>
    %cst_222 = arith.constant dense<0.000000e+00> : vector<2x32xf32>
    %285 = tpu.matmul %234, %284, %cst_222 {dimension_numbers = #tpu.dot_dimension_numbers<[1], [0], [0], [1], [0, 0, 1, 1], [], []>} : vector<2x32xf32>, vector<32x32xf32>, vector<2x32xf32> -> vector<2x32xf32>
    %286 = arith.addf %282, %285 : vector<2x32xf32>
    %c3_223 = arith.constant 3 : index
    %c0_224 = arith.constant 0 : index
    %c0_225 = arith.constant 0 : index
    %287 = vector.load %arg4[%c3_223, %c0_224, %c0_225] : memref<4x1x32xf32, #tpu.memory_space<vmem>>, vector<1x1x32xf32>
    %288 = vector.shape_cast %287 : vector<1x1x32xf32> to vector<1x32xf32>
    %289 = vector.broadcast %288 : vector<1x32xf32> to vector<2x32xf32>
    %290 = arith.addf %286, %289 : vector<2x32xf32>
    %291 = arith.negf %290 : vector<2x32xf32>
    %292 = math.exp %291 : vector<2x32xf32>
    %cst_226 = arith.constant 1.000000e+00 : f32
    %293 = vector.broadcast %cst_226 : f32 to vector<2x32xf32>
    %294 = arith.addf %293, %292 : vector<2x32xf32>
    %295 = arith.divf %293, %294 : vector<2x32xf32>
    %296 = arith.mulf %267, %235 : vector<2x32xf32>
    %297 = arith.mulf %251, %279 : vector<2x32xf32>
    %298 = arith.addf %296, %297 : vector<2x32xf32>
    %299 = math.tanh %298 : vector<2x32xf32>
    %300 = arith.mulf %295, %299 : vector<2x32xf32>
    %c0_227 = arith.constant 0 : index
    %c0_228 = arith.constant 0 : index
    %301 = vector.load %arg7[%c0_227, %c0_228] : memref<2x32xf32, #tpu.memory_space<vmem>>, vector<2x32xf32>
    tpu.vector_store %arg7[%c0_227, %c0_228], %298 {strides = array<i32>} : memref<2x32xf32, #tpu.memory_space<vmem>>, vector<2x32xf32>,
    %c0_229 = arith.constant 0 : index
    %c0_230 = arith.constant 0 : index
    %302 = vector.load %arg6[%c0_229, %c0_230] : memref<2x32xf32, #tpu.memory_space<vmem>>, vector<2x32xf32>
    tpu.vector_store %arg6[%c0_229, %c0_230], %300 {strides = array<i32>} : memref<2x32xf32, #tpu.memory_space<vmem>>, vector<2x32xf32>,
    %303 = arith.index_cast %c3_i32 : i32 to index
    %c0_231 = arith.constant 0 : index
    %c0_232 = arith.constant 0 : index
    %304 = vector.load %arg5[%303, %c0_231, %c0_232] : memref<8x2x32xf32, #tpu.memory_space<vmem>>, vector<1x2x32xf32>
    %305 = vector.shape_cast %304 : vector<1x2x32xf32> to vector<2x32xf32>
    %306 = vector.shape_cast %300 : vector<2x32xf32> to vector<1x2x32xf32>
    tpu.vector_store %arg5[%303, %c0_231, %c0_232], %306 {strides = array<i32>} : memref<8x2x32xf32, #tpu.memory_space<vmem>>, vector<1x2x32xf32>,
    %c4_i32 = arith.constant 4 : i32
    %307 = arith.index_cast %c4_i32 : i32 to index
    %c0_233 = arith.constant 0 : index
    %c0_234 = arith.constant 0 : index
    %308 = vector.load %arg1[%307, %c0_233, %c0_234] : memref<8x2x32xf32, #tpu.memory_space<vmem>>, vector<1x2x32xf32>
    %309 = vector.shape_cast %308 : vector<1x2x32xf32> to vector<2x32xf32>
    %c0_235 = arith.constant 0 : index
    %c0_236 = arith.constant 0 : index
    %310 = vector.load %arg6[%c0_235, %c0_236] : memref<2x32xf32, #tpu.memory_space<vmem>>, vector<2x32xf32>
    %c0_237 = arith.constant 0 : index
    %c0_238 = arith.constant 0 : index
    %311 = vector.load %arg7[%c0_237, %c0_238] : memref<2x32xf32, #tpu.memory_space<vmem>>, vector<2x32xf32>
    %c0_239 = arith.constant 0 : index
    %c0_240 = arith.constant 0 : index
    %c0_241 = arith.constant 0 : index
    %312 = vector.load %arg2[%c0_239, %c0_240, %c0_241] : memref<4x32x32xf32, #tpu.memory_space<vmem>>, vector<1x32x32xf32>
    %313 = vector.shape_cast %312 : vector<1x32x32xf32> to vector<32x32xf32>
    %cst_242 = arith.constant dense<0.000000e+00> : vector<2x32xf32>
    %314 = tpu.matmul %309, %313, %cst_242 {dimension_numbers = #tpu.dot_dimension_numbers<[1], [0], [0], [1], [0, 0, 1, 1], [], []>} : vector<2x32xf32>, vector<32x32xf32>, vector<2x32xf32> -> vector<2x32xf32>
    %c0_243 = arith.constant 0 : index
    %c0_244 = arith.constant 0 : index
    %c0_245 = arith.constant 0 : index
    %315 = vector.load %arg3[%c0_243, %c0_244, %c0_245] : memref<4x32x32xf32, #tpu.memory_space<vmem>>, vector<1x32x32xf32>
    %316 = vector.shape_cast %315 : vector<1x32x32xf32> to vector<32x32xf32>
    %cst_246 = arith.constant dense<0.000000e+00> : vector<2x32xf32>
    %317 = tpu.matmul %310, %316, %cst_246 {dimension_numbers = #tpu.dot_dimension_numbers<[1], [0], [0], [1], [0, 0, 1, 1], [], []>} : vector<2x32xf32>, vector<32x32xf32>, vector<2x32xf32> -> vector<2x32xf32>
    %318 = arith.addf %314, %317 : vector<2x32xf32>
    %c0_247 = arith.constant 0 : index
    %c0_248 = arith.constant 0 : index
    %c0_249 = arith.constant 0 : index
    %319 = vector.load %arg4[%c0_247, %c0_248, %c0_249] : memref<4x1x32xf32, #tpu.memory_space<vmem>>, vector<1x1x32xf32>
    %320 = vector.shape_cast %319 : vector<1x1x32xf32> to vector<1x32xf32>
    %321 = vector.broadcast %320 : vector<1x32xf32> to vector<2x32xf32>
    %322 = arith.addf %318, %321 : vector<2x32xf32>
    %323 = arith.negf %322 : vector<2x32xf32>
    %324 = math.exp %323 : vector<2x32xf32>
    %cst_250 = arith.constant 1.000000e+00 : f32
    %325 = vector.broadcast %cst_250 : f32 to vector<2x32xf32>
    %326 = arith.addf %325, %324 : vector<2x32xf32>
    %327 = arith.divf %325, %326 : vector<2x32xf32>
    %c1_251 = arith.constant 1 : index
    %c0_252 = arith.constant 0 : index
    %c0_253 = arith.constant 0 : index
    %328 = vector.load %arg2[%c1_251, %c0_252, %c0_253] : memref<4x32x32xf32, #tpu.memory_space<vmem>>, vector<1x32x32xf32>
    %329 = vector.shape_cast %328 : vector<1x32x32xf32> to vector<32x32xf32>
    %cst_254 = arith.constant dense<0.000000e+00> : vector<2x32xf32>
    %330 = tpu.matmul %309, %329, %cst_254 {dimension_numbers = #tpu.dot_dimension_numbers<[1], [0], [0], [1], [0, 0, 1, 1], [], []>} : vector<2x32xf32>, vector<32x32xf32>, vector<2x32xf32> -> vector<2x32xf32>
    %c1_255 = arith.constant 1 : index
    %c0_256 = arith.constant 0 : index
    %c0_257 = arith.constant 0 : index
    %331 = vector.load %arg3[%c1_255, %c0_256, %c0_257] : memref<4x32x32xf32, #tpu.memory_space<vmem>>, vector<1x32x32xf32>
    %332 = vector.shape_cast %331 : vector<1x32x32xf32> to vector<32x32xf32>
    %cst_258 = arith.constant dense<0.000000e+00> : vector<2x32xf32>
    %333 = tpu.matmul %310, %332, %cst_258 {dimension_numbers = #tpu.dot_dimension_numbers<[1], [0], [0], [1], [0, 0, 1, 1], [], []>} : vector<2x32xf32>, vector<32x32xf32>, vector<2x32xf32> -> vector<2x32xf32>
    %334 = arith.addf %330, %333 : vector<2x32xf32>
    %c1_259 = arith.constant 1 : index
    %c0_260 = arith.constant 0 : index
    %c0_261 = arith.constant 0 : index
    %335 = vector.load %arg4[%c1_259, %c0_260, %c0_261] : memref<4x1x32xf32, #tpu.memory_space<vmem>>, vector<1x1x32xf32>
    %336 = vector.shape_cast %335 : vector<1x1x32xf32> to vector<1x32xf32>
    %337 = vector.broadcast %336 : vector<1x32xf32> to vector<2x32xf32>
    %338 = arith.addf %334, %337 : vector<2x32xf32>
    %339 = arith.negf %338 : vector<2x32xf32>
    %340 = math.exp %339 : vector<2x32xf32>
    %cst_262 = arith.constant 1.000000e+00 : f32
    %341 = vector.broadcast %cst_262 : f32 to vector<2x32xf32>
    %342 = arith.addf %341, %340 : vector<2x32xf32>
    %343 = arith.divf %341, %342 : vector<2x32xf32>
    %c2_263 = arith.constant 2 : index
    %c0_264 = arith.constant 0 : index
    %c0_265 = arith.constant 0 : index
    %344 = vector.load %arg2[%c2_263, %c0_264, %c0_265] : memref<4x32x32xf32, #tpu.memory_space<vmem>>, vector<1x32x32xf32>
    %345 = vector.shape_cast %344 : vector<1x32x32xf32> to vector<32x32xf32>
    %cst_266 = arith.constant dense<0.000000e+00> : vector<2x32xf32>
    %346 = tpu.matmul %309, %345, %cst_266 {dimension_numbers = #tpu.dot_dimension_numbers<[1], [0], [0], [1], [0, 0, 1, 1], [], []>} : vector<2x32xf32>, vector<32x32xf32>, vector<2x32xf32> -> vector<2x32xf32>
    %c2_267 = arith.constant 2 : index
    %c0_268 = arith.constant 0 : index
    %c0_269 = arith.constant 0 : index
    %347 = vector.load %arg3[%c2_267, %c0_268, %c0_269] : memref<4x32x32xf32, #tpu.memory_space<vmem>>, vector<1x32x32xf32>
    %348 = vector.shape_cast %347 : vector<1x32x32xf32> to vector<32x32xf32>
    %cst_270 = arith.constant dense<0.000000e+00> : vector<2x32xf32>
    %349 = tpu.matmul %310, %348, %cst_270 {dimension_numbers = #tpu.dot_dimension_numbers<[1], [0], [0], [1], [0, 0, 1, 1], [], []>} : vector<2x32xf32>, vector<32x32xf32>, vector<2x32xf32> -> vector<2x32xf32>
    %350 = arith.addf %346, %349 : vector<2x32xf32>
    %c2_271 = arith.constant 2 : index
    %c0_272 = arith.constant 0 : index
    %c0_273 = arith.constant 0 : index
    %351 = vector.load %arg4[%c2_271, %c0_272, %c0_273] : memref<4x1x32xf32, #tpu.memory_space<vmem>>, vector<1x1x32xf32>
    %352 = vector.shape_cast %351 : vector<1x1x32xf32> to vector<1x32xf32>
    %353 = vector.broadcast %352 : vector<1x32xf32> to vector<2x32xf32>
    %354 = arith.addf %350, %353 : vector<2x32xf32>
    %355 = math.tanh %354 : vector<2x32xf32>
    %c3_274 = arith.constant 3 : index
    %c0_275 = arith.constant 0 : index
    %c0_276 = arith.constant 0 : index
    %356 = vector.load %arg2[%c3_274, %c0_275, %c0_276] : memref<4x32x32xf32, #tpu.memory_space<vmem>>, vector<1x32x32xf32>
    %357 = vector.shape_cast %356 : vector<1x32x32xf32> to vector<32x32xf32>
    %cst_277 = arith.constant dense<0.000000e+00> : vector<2x32xf32>
    %358 = tpu.matmul %309, %357, %cst_277 {dimension_numbers = #tpu.dot_dimension_numbers<[1], [0], [0], [1], [0, 0, 1, 1], [], []>} : vector<2x32xf32>, vector<32x32xf32>, vector<2x32xf32> -> vector<2x32xf32>
    %c3_278 = arith.constant 3 : index
    %c0_279 = arith.constant 0 : index
    %c0_280 = arith.constant 0 : index
    %359 = vector.load %arg3[%c3_278, %c0_279, %c0_280] : memref<4x32x32xf32, #tpu.memory_space<vmem>>, vector<1x32x32xf32>
    %360 = vector.shape_cast %359 : vector<1x32x32xf32> to vector<32x32xf32>
    %cst_281 = arith.constant dense<0.000000e+00> : vector<2x32xf32>
    %361 = tpu.matmul %310, %360, %cst_281 {dimension_numbers = #tpu.dot_dimension_numbers<[1], [0], [0], [1], [0, 0, 1, 1], [], []>} : vector<2x32xf32>, vector<32x32xf32>, vector<2x32xf32> -> vector<2x32xf32>
    %362 = arith.addf %358, %361 : vector<2x32xf32>
    %c3_282 = arith.constant 3 : index
    %c0_283 = arith.constant 0 : index
    %c0_284 = arith.constant 0 : index
    %363 = vector.load %arg4[%c3_282, %c0_283, %c0_284] : memref<4x1x32xf32, #tpu.memory_space<vmem>>, vector<1x1x32xf32>
    %364 = vector.shape_cast %363 : vector<1x1x32xf32> to vector<1x32xf32>
    %365 = vector.broadcast %364 : vector<1x32xf32> to vector<2x32xf32>
    %366 = arith.addf %362, %365 : vector<2x32xf32>
    %367 = arith.negf %366 : vector<2x32xf32>
    %368 = math.exp %367 : vector<2x32xf32>
    %cst_285 = arith.constant 1.000000e+00 : f32
    %369 = vector.broadcast %cst_285 : f32 to vector<2x32xf32>
    %370 = arith.addf %369, %368 : vector<2x32xf32>
    %371 = arith.divf %369, %370 : vector<2x32xf32>
    %372 = arith.mulf %343, %311 : vector<2x32xf32>
    %373 = arith.mulf %327, %355 : vector<2x32xf32>
    %374 = arith.addf %372, %373 : vector<2x32xf32>
    %375 = math.tanh %374 : vector<2x32xf32>
    %376 = arith.mulf %371, %375 : vector<2x32xf32>
    %c0_286 = arith.constant 0 : index
    %c0_287 = arith.constant 0 : index
    %377 = vector.load %arg7[%c0_286, %c0_287] : memref<2x32xf32, #tpu.memory_space<vmem>>, vector<2x32xf32>
    tpu.vector_store %arg7[%c0_286, %c0_287], %374 {strides = array<i32>} : memref<2x32xf32, #tpu.memory_space<vmem>>, vector<2x32xf32>,
    %c0_288 = arith.constant 0 : index
    %c0_289 = arith.constant 0 : index
    %378 = vector.load %arg6[%c0_288, %c0_289] : memref<2x32xf32, #tpu.memory_space<vmem>>, vector<2x32xf32>
    tpu.vector_store %arg6[%c0_288, %c0_289], %376 {strides = array<i32>} : memref<2x32xf32, #tpu.memory_space<vmem>>, vector<2x32xf32>,
    %379 = arith.index_cast %c4_i32 : i32 to index
    %c0_290 = arith.constant 0 : index
    %c0_291 = arith.constant 0 : index
    %380 = vector.load %arg5[%379, %c0_290, %c0_291] : memref<8x2x32xf32, #tpu.memory_space<vmem>>, vector<1x2x32xf32>
    %381 = vector.shape_cast %380 : vector<1x2x32xf32> to vector<2x32xf32>
    %382 = vector.shape_cast %376 : vector<2x32xf32> to vector<1x2x32xf32>
    tpu.vector_store %arg5[%379, %c0_290, %c0_291], %382 {strides = array<i32>} : memref<8x2x32xf32, #tpu.memory_space<vmem>>, vector<1x2x32xf32>,
    %c5_i32 = arith.constant 5 : i32
    %383 = arith.index_cast %c5_i32 : i32 to index
    %c0_292 = arith.constant 0 : index
    %c0_293 = arith.constant 0 : index
    %384 = vector.load %arg1[%383, %c0_292, %c0_293] : memref<8x2x32xf32, #tpu.memory_space<vmem>>, vector<1x2x32xf32>
    %385 = vector.shape_cast %384 : vector<1x2x32xf32> to vector<2x32xf32>
    %c0_294 = arith.constant 0 : index
    %c0_295 = arith.constant 0 : index
    %386 = vector.load %arg6[%c0_294, %c0_295] : memref<2x32xf32, #tpu.memory_space<vmem>>, vector<2x32xf32>
    %c0_296 = arith.constant 0 : index
    %c0_297 = arith.constant 0 : index
    %387 = vector.load %arg7[%c0_296, %c0_297] : memref<2x32xf32, #tpu.memory_space<vmem>>, vector<2x32xf32>
    %c0_298 = arith.constant 0 : index
    %c0_299 = arith.constant 0 : index
    %c0_300 = arith.constant 0 : index
    %388 = vector.load %arg2[%c0_298, %c0_299, %c0_300] : memref<4x32x32xf32, #tpu.memory_space<vmem>>, vector<1x32x32xf32>
    %389 = vector.shape_cast %388 : vector<1x32x32xf32> to vector<32x32xf32>
    %cst_301 = arith.constant dense<0.000000e+00> : vector<2x32xf32>
    %390 = tpu.matmul %385, %389, %cst_301 {dimension_numbers = #tpu.dot_dimension_numbers<[1], [0], [0], [1], [0, 0, 1, 1], [], []>} : vector<2x32xf32>, vector<32x32xf32>, vector<2x32xf32> -> vector<2x32xf32>
    %c0_302 = arith.constant 0 : index
    %c0_303 = arith.constant 0 : index
    %c0_304 = arith.constant 0 : index
    %391 = vector.load %arg3[%c0_302, %c0_303, %c0_304] : memref<4x32x32xf32, #tpu.memory_space<vmem>>, vector<1x32x32xf32>
    %392 = vector.shape_cast %391 : vector<1x32x32xf32> to vector<32x32xf32>
    %cst_305 = arith.constant dense<0.000000e+00> : vector<2x32xf32>
    %393 = tpu.matmul %386, %392, %cst_305 {dimension_numbers = #tpu.dot_dimension_numbers<[1], [0], [0], [1], [0, 0, 1, 1], [], []>} : vector<2x32xf32>, vector<32x32xf32>, vector<2x32xf32> -> vector<2x32xf32>
    %394 = arith.addf %390, %393 : vector<2x32xf32>
    %c0_306 = arith.constant 0 : index
    %c0_307 = arith.constant 0 : index
    %c0_308 = arith.constant 0 : index
    %395 = vector.load %arg4[%c0_306, %c0_307, %c0_308] : memref<4x1x32xf32, #tpu.memory_space<vmem>>, vector<1x1x32xf32>
    %396 = vector.shape_cast %395 : vector<1x1x32xf32> to vector<1x32xf32>
    %397 = vector.broadcast %396 : vector<1x32xf32> to vector<2x32xf32>
    %398 = arith.addf %394, %397 : vector<2x32xf32>
    %399 = arith.negf %398 : vector<2x32xf32>
    %400 = math.exp %399 : vector<2x32xf32>
    %cst_309 = arith.constant 1.000000e+00 : f32
    %401 = vector.broadcast %cst_309 : f32 to vector<2x32xf32>
    %402 = arith.addf %401, %400 : vector<2x32xf32>
    %403 = arith.divf %401, %402 : vector<2x32xf32>
    %c1_310 = arith.constant 1 : index
    %c0_311 = arith.constant 0 : index
    %c0_312 = arith.constant 0 : index
    %404 = vector.load %arg2[%c1_310, %c0_311, %c0_312] : memref<4x32x32xf32, #tpu.memory_space<vmem>>, vector<1x32x32xf32>
    %405 = vector.shape_cast %404 : vector<1x32x32xf32> to vector<32x32xf32>
    %cst_313 = arith.constant dense<0.000000e+00> : vector<2x32xf32>
    %406 = tpu.matmul %385, %405, %cst_313 {dimension_numbers = #tpu.dot_dimension_numbers<[1], [0], [0], [1], [0, 0, 1, 1], [], []>} : vector<2x32xf32>, vector<32x32xf32>, vector<2x32xf32> -> vector<2x32xf32>
    %c1_314 = arith.constant 1 : index
    %c0_315 = arith.constant 0 : index
    %c0_316 = arith.constant 0 : index
    %407 = vector.load %arg3[%c1_314, %c0_315, %c0_316] : memref<4x32x32xf32, #tpu.memory_space<vmem>>, vector<1x32x32xf32>
    %408 = vector.shape_cast %407 : vector<1x32x32xf32> to vector<32x32xf32>
    %cst_317 = arith.constant dense<0.000000e+00> : vector<2x32xf32>
    %409 = tpu.matmul %386, %408, %cst_317 {dimension_numbers = #tpu.dot_dimension_numbers<[1], [0], [0], [1], [0, 0, 1, 1], [], []>} : vector<2x32xf32>, vector<32x32xf32>, vector<2x32xf32> -> vector<2x32xf32>
    %410 = arith.addf %406, %409 : vector<2x32xf32>
    %c1_318 = arith.constant 1 : index
    %c0_319 = arith.constant 0 : index
    %c0_320 = arith.constant 0 : index
    %411 = vector.load %arg4[%c1_318, %c0_319, %c0_320] : memref<4x1x32xf32, #tpu.memory_space<vmem>>, vector<1x1x32xf32>
    %412 = vector.shape_cast %411 : vector<1x1x32xf32> to vector<1x32xf32>
    %413 = vector.broadcast %412 : vector<1x32xf32> to vector<2x32xf32>
    %414 = arith.addf %410, %413 : vector<2x32xf32>
    %415 = arith.negf %414 : vector<2x32xf32>
    %416 = math.exp %415 : vector<2x32xf32>
    %cst_321 = arith.constant 1.000000e+00 : f32
    %417 = vector.broadcast %cst_321 : f32 to vector<2x32xf32>
    %418 = arith.addf %417, %416 : vector<2x32xf32>
    %419 = arith.divf %417, %418 : vector<2x32xf32>
    %c2_322 = arith.constant 2 : index
    %c0_323 = arith.constant 0 : index
    %c0_324 = arith.constant 0 : index
    %420 = vector.load %arg2[%c2_322, %c0_323, %c0_324] : memref<4x32x32xf32, #tpu.memory_space<vmem>>, vector<1x32x32xf32>
    %421 = vector.shape_cast %420 : vector<1x32x32xf32> to vector<32x32xf32>
    %cst_325 = arith.constant dense<0.000000e+00> : vector<2x32xf32>
    %422 = tpu.matmul %385, %421, %cst_325 {dimension_numbers = #tpu.dot_dimension_numbers<[1], [0], [0], [1], [0, 0, 1, 1], [], []>} : vector<2x32xf32>, vector<32x32xf32>, vector<2x32xf32> -> vector<2x32xf32>
    %c2_326 = arith.constant 2 : index
    %c0_327 = arith.constant 0 : index
    %c0_328 = arith.constant 0 : index
    %423 = vector.load %arg3[%c2_326, %c0_327, %c0_328] : memref<4x32x32xf32, #tpu.memory_space<vmem>>, vector<1x32x32xf32>
    %424 = vector.shape_cast %423 : vector<1x32x32xf32> to vector<32x32xf32>
    %cst_329 = arith.constant dense<0.000000e+00> : vector<2x32xf32>
    %425 = tpu.matmul %386, %424, %cst_329 {dimension_numbers = #tpu.dot_dimension_numbers<[1], [0], [0], [1], [0, 0, 1, 1], [], []>} : vector<2x32xf32>, vector<32x32xf32>, vector<2x32xf32> -> vector<2x32xf32>
    %426 = arith.addf %422, %425 : vector<2x32xf32>
    %c2_330 = arith.constant 2 : index
    %c0_331 = arith.constant 0 : index
    %c0_332 = arith.constant 0 : index
    %427 = vector.load %arg4[%c2_330, %c0_331, %c0_332] : memref<4x1x32xf32, #tpu.memory_space<vmem>>, vector<1x1x32xf32>
    %428 = vector.shape_cast %427 : vector<1x1x32xf32> to vector<1x32xf32>
    %429 = vector.broadcast %428 : vector<1x32xf32> to vector<2x32xf32>
    %430 = arith.addf %426, %429 : vector<2x32xf32>
    %431 = math.tanh %430 : vector<2x32xf32>
    %c3_333 = arith.constant 3 : index
    %c0_334 = arith.constant 0 : index
    %c0_335 = arith.constant 0 : index
    %432 = vector.load %arg2[%c3_333, %c0_334, %c0_335] : memref<4x32x32xf32, #tpu.memory_space<vmem>>, vector<1x32x32xf32>
    %433 = vector.shape_cast %432 : vector<1x32x32xf32> to vector<32x32xf32>
    %cst_336 = arith.constant dense<0.000000e+00> : vector<2x32xf32>
    %434 = tpu.matmul %385, %433, %cst_336 {dimension_numbers = #tpu.dot_dimension_numbers<[1], [0], [0], [1], [0, 0, 1, 1], [], []>} : vector<2x32xf32>, vector<32x32xf32>, vector<2x32xf32> -> vector<2x32xf32>
    %c3_337 = arith.constant 3 : index
    %c0_338 = arith.constant 0 : index
    %c0_339 = arith.constant 0 : index
    %435 = vector.load %arg3[%c3_337, %c0_338, %c0_339] : memref<4x32x32xf32, #tpu.memory_space<vmem>>, vector<1x32x32xf32>
    %436 = vector.shape_cast %435 : vector<1x32x32xf32> to vector<32x32xf32>
    %cst_340 = arith.constant dense<0.000000e+00> : vector<2x32xf32>
    %437 = tpu.matmul %386, %436, %cst_340 {dimension_numbers = #tpu.dot_dimension_numbers<[1], [0], [0], [1], [0, 0, 1, 1], [], []>} : vector<2x32xf32>, vector<32x32xf32>, vector<2x32xf32> -> vector<2x32xf32>
    %438 = arith.addf %434, %437 : vector<2x32xf32>
    %c3_341 = arith.constant 3 : index
    %c0_342 = arith.constant 0 : index
    %c0_343 = arith.constant 0 : index
    %439 = vector.load %arg4[%c3_341, %c0_342, %c0_343] : memref<4x1x32xf32, #tpu.memory_space<vmem>>, vector<1x1x32xf32>
    %440 = vector.shape_cast %439 : vector<1x1x32xf32> to vector<1x32xf32>
    %441 = vector.broadcast %440 : vector<1x32xf32> to vector<2x32xf32>
    %442 = arith.addf %438, %441 : vector<2x32xf32>
    %443 = arith.negf %442 : vector<2x32xf32>
    %444 = math.exp %443 : vector<2x32xf32>
    %cst_344 = arith.constant 1.000000e+00 : f32
    %445 = vector.broadcast %cst_344 : f32 to vector<2x32xf32>
    %446 = arith.addf %445, %444 : vector<2x32xf32>
    %447 = arith.divf %445, %446 : vector<2x32xf32>
    %448 = arith.mulf %419, %387 : vector<2x32xf32>
    %449 = arith.mulf %403, %431 : vector<2x32xf32>
    %450 = arith.addf %448, %449 : vector<2x32xf32>
    %451 = math.tanh %450 : vector<2x32xf32>
    %452 = arith.mulf %447, %451 : vector<2x32xf32>
    %c0_345 = arith.constant 0 : index
    %c0_346 = arith.constant 0 : index
    %453 = vector.load %arg7[%c0_345, %c0_346] : memref<2x32xf32, #tpu.memory_space<vmem>>, vector<2x32xf32>
    tpu.vector_store %arg7[%c0_345, %c0_346], %450 {strides = array<i32>} : memref<2x32xf32, #tpu.memory_space<vmem>>, vector<2x32xf32>,
    %c0_347 = arith.constant 0 : index
    %c0_348 = arith.constant 0 : index
    %454 = vector.load %arg6[%c0_347, %c0_348] : memref<2x32xf32, #tpu.memory_space<vmem>>, vector<2x32xf32>
    tpu.vector_store %arg6[%c0_347, %c0_348], %452 {strides = array<i32>} : memref<2x32xf32, #tpu.memory_space<vmem>>, vector<2x32xf32>,
    %455 = arith.index_cast %c5_i32 : i32 to index
    %c0_349 = arith.constant 0 : index
    %c0_350 = arith.constant 0 : index
    %456 = vector.load %arg5[%455, %c0_349, %c0_350] : memref<8x2x32xf32, #tpu.memory_space<vmem>>, vector<1x2x32xf32>
    %457 = vector.shape_cast %456 : vector<1x2x32xf32> to vector<2x32xf32>
    %458 = vector.shape_cast %452 : vector<2x32xf32> to vector<1x2x32xf32>
    tpu.vector_store %arg5[%455, %c0_349, %c0_350], %458 {strides = array<i32>} : memref<8x2x32xf32, #tpu.memory_space<vmem>>, vector<1x2x32xf32>,
    %c6_i32 = arith.constant 6 : i32
    %459 = arith.index_cast %c6_i32 : i32 to index
    %c0_351 = arith.constant 0 : index
    %c0_352 = arith.constant 0 : index
    %460 = vector.load %arg1[%459, %c0_351, %c0_352] : memref<8x2x32xf32, #tpu.memory_space<vmem>>, vector<1x2x32xf32>
    %461 = vector.shape_cast %460 : vector<1x2x32xf32> to vector<2x32xf32>
    %c0_353 = arith.constant 0 : index
    %c0_354 = arith.constant 0 : index
    %462 = vector.load %arg6[%c0_353, %c0_354] : memref<2x32xf32, #tpu.memory_space<vmem>>, vector<2x32xf32>
    %c0_355 = arith.constant 0 : index
    %c0_356 = arith.constant 0 : index
    %463 = vector.load %arg7[%c0_355, %c0_356] : memref<2x32xf32, #tpu.memory_space<vmem>>, vector<2x32xf32>
    %c0_357 = arith.constant 0 : index
    %c0_358 = arith.constant 0 : index
    %c0_359 = arith.constant 0 : index
    %464 = vector.load %arg2[%c0_357, %c0_358, %c0_359] : memref<4x32x32xf32, #tpu.memory_space<vmem>>, vector<1x32x32xf32>
    %465 = vector.shape_cast %464 : vector<1x32x32xf32> to vector<32x32xf32>
    %cst_360 = arith.constant dense<0.000000e+00> : vector<2x32xf32>
    %466 = tpu.matmul %461, %465, %cst_360 {dimension_numbers = #tpu.dot_dimension_numbers<[1], [0], [0], [1], [0, 0, 1, 1], [], []>} : vector<2x32xf32>, vector<32x32xf32>, vector<2x32xf32> -> vector<2x32xf32>
    %c0_361 = arith.constant 0 : index
    %c0_362 = arith.constant 0 : index
    %c0_363 = arith.constant 0 : index
    %467 = vector.load %arg3[%c0_361, %c0_362, %c0_363] : memref<4x32x32xf32, #tpu.memory_space<vmem>>, vector<1x32x32xf32>
    %468 = vector.shape_cast %467 : vector<1x32x32xf32> to vector<32x32xf32>
    %cst_364 = arith.constant dense<0.000000e+00> : vector<2x32xf32>
    %469 = tpu.matmul %462, %468, %cst_364 {dimension_numbers = #tpu.dot_dimension_numbers<[1], [0], [0], [1], [0, 0, 1, 1], [], []>} : vector<2x32xf32>, vector<32x32xf32>, vector<2x32xf32> -> vector<2x32xf32>
    %470 = arith.addf %466, %469 : vector<2x32xf32>
    %c0_365 = arith.constant 0 : index
    %c0_366 = arith.constant 0 : index
    %c0_367 = arith.constant 0 : index
    %471 = vector.load %arg4[%c0_365, %c0_366, %c0_367] : memref<4x1x32xf32, #tpu.memory_space<vmem>>, vector<1x1x32xf32>
    %472 = vector.shape_cast %471 : vector<1x1x32xf32> to vector<1x32xf32>
    %473 = vector.broadcast %472 : vector<1x32xf32> to vector<2x32xf32>
    %474 = arith.addf %470, %473 : vector<2x32xf32>
    %475 = arith.negf %474 : vector<2x32xf32>
    %476 = math.exp %475 : vector<2x32xf32>
    %cst_368 = arith.constant 1.000000e+00 : f32
    %477 = vector.broadcast %cst_368 : f32 to vector<2x32xf32>
    %478 = arith.addf %477, %476 : vector<2x32xf32>
    %479 = arith.divf %477, %478 : vector<2x32xf32>
    %c1_369 = arith.constant 1 : index
    %c0_370 = arith.constant 0 : index
    %c0_371 = arith.constant 0 : index
    %480 = vector.load %arg2[%c1_369, %c0_370, %c0_371] : memref<4x32x32xf32, #tpu.memory_space<vmem>>, vector<1x32x32xf32>
    %481 = vector.shape_cast %480 : vector<1x32x32xf32> to vector<32x32xf32>
    %cst_372 = arith.constant dense<0.000000e+00> : vector<2x32xf32>
    %482 = tpu.matmul %461, %481, %cst_372 {dimension_numbers = #tpu.dot_dimension_numbers<[1], [0], [0], [1], [0, 0, 1, 1], [], []>} : vector<2x32xf32>, vector<32x32xf32>, vector<2x32xf32> -> vector<2x32xf32>
    %c1_373 = arith.constant 1 : index
    %c0_374 = arith.constant 0 : index
    %c0_375 = arith.constant 0 : index
    %483 = vector.load %arg3[%c1_373, %c0_374, %c0_375] : memref<4x32x32xf32, #tpu.memory_space<vmem>>, vector<1x32x32xf32>
    %484 = vector.shape_cast %483 : vector<1x32x32xf32> to vector<32x32xf32>
    %cst_376 = arith.constant dense<0.000000e+00> : vector<2x32xf32>
    %485 = tpu.matmul %462, %484, %cst_376 {dimension_numbers = #tpu.dot_dimension_numbers<[1], [0], [0], [1], [0, 0, 1, 1], [], []>} : vector<2x32xf32>, vector<32x32xf32>, vector<2x32xf32> -> vector<2x32xf32>
    %486 = arith.addf %482, %485 : vector<2x32xf32>
    %c1_377 = arith.constant 1 : index
    %c0_378 = arith.constant 0 : index
    %c0_379 = arith.constant 0 : index
    %487 = vector.load %arg4[%c1_377, %c0_378, %c0_379] : memref<4x1x32xf32, #tpu.memory_space<vmem>>, vector<1x1x32xf32>
    %488 = vector.shape_cast %487 : vector<1x1x32xf32> to vector<1x32xf32>
    %489 = vector.broadcast %488 : vector<1x32xf32> to vector<2x32xf32>
    %490 = arith.addf %486, %489 : vector<2x32xf32>
    %491 = arith.negf %490 : vector<2x32xf32>
    %492 = math.exp %491 : vector<2x32xf32>
    %cst_380 = arith.constant 1.000000e+00 : f32
    %493 = vector.broadcast %cst_380 : f32 to vector<2x32xf32>
    %494 = arith.addf %493, %492 : vector<2x32xf32>
    %495 = arith.divf %493, %494 : vector<2x32xf32>
    %c2_381 = arith.constant 2 : index
    %c0_382 = arith.constant 0 : index
    %c0_383 = arith.constant 0 : index
    %496 = vector.load %arg2[%c2_381, %c0_382, %c0_383] : memref<4x32x32xf32, #tpu.memory_space<vmem>>, vector<1x32x32xf32>
    %497 = vector.shape_cast %496 : vector<1x32x32xf32> to vector<32x32xf32>
    %cst_384 = arith.constant dense<0.000000e+00> : vector<2x32xf32>
    %498 = tpu.matmul %461, %497, %cst_384 {dimension_numbers = #tpu.dot_dimension_numbers<[1], [0], [0], [1], [0, 0, 1, 1], [], []>} : vector<2x32xf32>, vector<32x32xf32>, vector<2x32xf32> -> vector<2x32xf32>
    %c2_385 = arith.constant 2 : index
    %c0_386 = arith.constant 0 : index
    %c0_387 = arith.constant 0 : index
    %499 = vector.load %arg3[%c2_385, %c0_386, %c0_387] : memref<4x32x32xf32, #tpu.memory_space<vmem>>, vector<1x32x32xf32>
    %500 = vector.shape_cast %499 : vector<1x32x32xf32> to vector<32x32xf32>
    %cst_388 = arith.constant dense<0.000000e+00> : vector<2x32xf32>
    %501 = tpu.matmul %462, %500, %cst_388 {dimension_numbers = #tpu.dot_dimension_numbers<[1], [0], [0], [1], [0, 0, 1, 1], [], []>} : vector<2x32xf32>, vector<32x32xf32>, vector<2x32xf32> -> vector<2x32xf32>
    %502 = arith.addf %498, %501 : vector<2x32xf32>
    %c2_389 = arith.constant 2 : index
    %c0_390 = arith.constant 0 : index
    %c0_391 = arith.constant 0 : index
    %503 = vector.load %arg4[%c2_389, %c0_390, %c0_391] : memref<4x1x32xf32, #tpu.memory_space<vmem>>, vector<1x1x32xf32>
    %504 = vector.shape_cast %503 : vector<1x1x32xf32> to vector<1x32xf32>
    %505 = vector.broadcast %504 : vector<1x32xf32> to vector<2x32xf32>
    %506 = arith.addf %502, %505 : vector<2x32xf32>
    %507 = math.tanh %506 : vector<2x32xf32>
    %c3_392 = arith.constant 3 : index
    %c0_393 = arith.constant 0 : index
    %c0_394 = arith.constant 0 : index
    %508 = vector.load %arg2[%c3_392, %c0_393, %c0_394] : memref<4x32x32xf32, #tpu.memory_space<vmem>>, vector<1x32x32xf32>
    %509 = vector.shape_cast %508 : vector<1x32x32xf32> to vector<32x32xf32>
    %cst_395 = arith.constant dense<0.000000e+00> : vector<2x32xf32>
    %510 = tpu.matmul %461, %509, %cst_395 {dimension_numbers = #tpu.dot_dimension_numbers<[1], [0], [0], [1], [0, 0, 1, 1], [], []>} : vector<2x32xf32>, vector<32x32xf32>, vector<2x32xf32> -> vector<2x32xf32>
    %c3_396 = arith.constant 3 : index
    %c0_397 = arith.constant 0 : index
    %c0_398 = arith.constant 0 : index
    %511 = vector.load %arg3[%c3_396, %c0_397, %c0_398] : memref<4x32x32xf32, #tpu.memory_space<vmem>>, vector<1x32x32xf32>
    %512 = vector.shape_cast %511 : vector<1x32x32xf32> to vector<32x32xf32>
    %cst_399 = arith.constant dense<0.000000e+00> : vector<2x32xf32>
    %513 = tpu.matmul %462, %512, %cst_399 {dimension_numbers = #tpu.dot_dimension_numbers<[1], [0], [0], [1], [0, 0, 1, 1], [], []>} : vector<2x32xf32>, vector<32x32xf32>, vector<2x32xf32> -> vector<2x32xf32>
    %514 = arith.addf %510, %513 : vector<2x32xf32>
    %c3_400 = arith.constant 3 : index
    %c0_401 = arith.constant 0 : index
    %c0_402 = arith.constant 0 : index
    %515 = vector.load %arg4[%c3_400, %c0_401, %c0_402] : memref<4x1x32xf32, #tpu.memory_space<vmem>>, vector<1x1x32xf32>
    %516 = vector.shape_cast %515 : vector<1x1x32xf32> to vector<1x32xf32>
    %517 = vector.broadcast %516 : vector<1x32xf32> to vector<2x32xf32>
    %518 = arith.addf %514, %517 : vector<2x32xf32>
    %519 = arith.negf %518 : vector<2x32xf32>
    %520 = math.exp %519 : vector<2x32xf32>
    %cst_403 = arith.constant 1.000000e+00 : f32
    %521 = vector.broadcast %cst_403 : f32 to vector<2x32xf32>
    %522 = arith.addf %521, %520 : vector<2x32xf32>
    %523 = arith.divf %521, %522 : vector<2x32xf32>
    %524 = arith.mulf %495, %463 : vector<2x32xf32>
    %525 = arith.mulf %479, %507 : vector<2x32xf32>
    %526 = arith.addf %524, %525 : vector<2x32xf32>
    %527 = math.tanh %526 : vector<2x32xf32>
    %528 = arith.mulf %523, %527 : vector<2x32xf32>
    %c0_404 = arith.constant 0 : index
    %c0_405 = arith.constant 0 : index
    %529 = vector.load %arg7[%c0_404, %c0_405] : memref<2x32xf32, #tpu.memory_space<vmem>>, vector<2x32xf32>
    tpu.vector_store %arg7[%c0_404, %c0_405], %526 {strides = array<i32>} : memref<2x32xf32, #tpu.memory_space<vmem>>, vector<2x32xf32>,
    %c0_406 = arith.constant 0 : index
    %c0_407 = arith.constant 0 : index
    %530 = vector.load %arg6[%c0_406, %c0_407] : memref<2x32xf32, #tpu.memory_space<vmem>>, vector<2x32xf32>
    tpu.vector_store %arg6[%c0_406, %c0_407], %528 {strides = array<i32>} : memref<2x32xf32, #tpu.memory_space<vmem>>, vector<2x32xf32>,
    %531 = arith.index_cast %c6_i32 : i32 to index
    %c0_408 = arith.constant 0 : index
    %c0_409 = arith.constant 0 : index
    %532 = vector.load %arg5[%531, %c0_408, %c0_409] : memref<8x2x32xf32, #tpu.memory_space<vmem>>, vector<1x2x32xf32>
    %533 = vector.shape_cast %532 : vector<1x2x32xf32> to vector<2x32xf32>
    %534 = vector.shape_cast %528 : vector<2x32xf32> to vector<1x2x32xf32>
    tpu.vector_store %arg5[%531, %c0_408, %c0_409], %534 {strides = array<i32>} : memref<8x2x32xf32, #tpu.memory_space<vmem>>, vector<1x2x32xf32>,
    %c7_i32 = arith.constant 7 : i32
    %535 = arith.index_cast %c7_i32 : i32 to index
    %c0_410 = arith.constant 0 : index
    %c0_411 = arith.constant 0 : index
    %536 = vector.load %arg1[%535, %c0_410, %c0_411] : memref<8x2x32xf32, #tpu.memory_space<vmem>>, vector<1x2x32xf32>
    %537 = vector.shape_cast %536 : vector<1x2x32xf32> to vector<2x32xf32>
    %c0_412 = arith.constant 0 : index
    %c0_413 = arith.constant 0 : index
    %538 = vector.load %arg6[%c0_412, %c0_413] : memref<2x32xf32, #tpu.memory_space<vmem>>, vector<2x32xf32>
    %c0_414 = arith.constant 0 : index
    %c0_415 = arith.constant 0 : index
    %539 = vector.load %arg7[%c0_414, %c0_415] : memref<2x32xf32, #tpu.memory_space<vmem>>, vector<2x32xf32>
    %c0_416 = arith.constant 0 : index
    %c0_417 = arith.constant 0 : index
    %c0_418 = arith.constant 0 : index
    %540 = vector.load %arg2[%c0_416, %c0_417, %c0_418] : memref<4x32x32xf32, #tpu.memory_space<vmem>>, vector<1x32x32xf32>
    %541 = vector.shape_cast %540 : vector<1x32x32xf32> to vector<32x32xf32>
    %cst_419 = arith.constant dense<0.000000e+00> : vector<2x32xf32>
    %542 = tpu.matmul %537, %541, %cst_419 {dimension_numbers = #tpu.dot_dimension_numbers<[1], [0], [0], [1], [0, 0, 1, 1], [], []>} : vector<2x32xf32>, vector<32x32xf32>, vector<2x32xf32> -> vector<2x32xf32>
    %c0_420 = arith.constant 0 : index
    %c0_421 = arith.constant 0 : index
    %c0_422 = arith.constant 0 : index
    %543 = vector.load %arg3[%c0_420, %c0_421, %c0_422] : memref<4x32x32xf32, #tpu.memory_space<vmem>>, vector<1x32x32xf32>
    %544 = vector.shape_cast %543 : vector<1x32x32xf32> to vector<32x32xf32>
    %cst_423 = arith.constant dense<0.000000e+00> : vector<2x32xf32>
    %545 = tpu.matmul %538, %544, %cst_423 {dimension_numbers = #tpu.dot_dimension_numbers<[1], [0], [0], [1], [0, 0, 1, 1], [], []>} : vector<2x32xf32>, vector<32x32xf32>, vector<2x32xf32> -> vector<2x32xf32>
    %546 = arith.addf %542, %545 : vector<2x32xf32>
    %c0_424 = arith.constant 0 : index
    %c0_425 = arith.constant 0 : index
    %c0_426 = arith.constant 0 : index
    %547 = vector.load %arg4[%c0_424, %c0_425, %c0_426] : memref<4x1x32xf32, #tpu.memory_space<vmem>>, vector<1x1x32xf32>
    %548 = vector.shape_cast %547 : vector<1x1x32xf32> to vector<1x32xf32>
    %549 = vector.broadcast %548 : vector<1x32xf32> to vector<2x32xf32>
    %550 = arith.addf %546, %549 : vector<2x32xf32>
    %551 = arith.negf %550 : vector<2x32xf32>
    %552 = math.exp %551 : vector<2x32xf32>
    %cst_427 = arith.constant 1.000000e+00 : f32
    %553 = vector.broadcast %cst_427 : f32 to vector<2x32xf32>
    %554 = arith.addf %553, %552 : vector<2x32xf32>
    %555 = arith.divf %553, %554 : vector<2x32xf32>
    %c1_428 = arith.constant 1 : index
    %c0_429 = arith.constant 0 : index
    %c0_430 = arith.constant 0 : index
    %556 = vector.load %arg2[%c1_428, %c0_429, %c0_430] : memref<4x32x32xf32, #tpu.memory_space<vmem>>, vector<1x32x32xf32>
    %557 = vector.shape_cast %556 : vector<1x32x32xf32> to vector<32x32xf32>
    %cst_431 = arith.constant dense<0.000000e+00> : vector<2x32xf32>
    %558 = tpu.matmul %537, %557, %cst_431 {dimension_numbers = #tpu.dot_dimension_numbers<[1], [0], [0], [1], [0, 0, 1, 1], [], []>} : vector<2x32xf32>, vector<32x32xf32>, vector<2x32xf32> -> vector<2x32xf32>
    %c1_432 = arith.constant 1 : index
    %c0_433 = arith.constant 0 : index
    %c0_434 = arith.constant 0 : index
    %559 = vector.load %arg3[%c1_432, %c0_433, %c0_434] : memref<4x32x32xf32, #tpu.memory_space<vmem>>, vector<1x32x32xf32>
    %560 = vector.shape_cast %559 : vector<1x32x32xf32> to vector<32x32xf32>
    %cst_435 = arith.constant dense<0.000000e+00> : vector<2x32xf32>
    %561 = tpu.matmul %538, %560, %cst_435 {dimension_numbers = #tpu.dot_dimension_numbers<[1], [0], [0], [1], [0, 0, 1, 1], [], []>} : vector<2x32xf32>, vector<32x32xf32>, vector<2x32xf32> -> vector<2x32xf32>
    %562 = arith.addf %558, %561 : vector<2x32xf32>
    %c1_436 = arith.constant 1 : index
    %c0_437 = arith.constant 0 : index
    %c0_438 = arith.constant 0 : index
    %563 = vector.load %arg4[%c1_436, %c0_437, %c0_438] : memref<4x1x32xf32, #tpu.memory_space<vmem>>, vector<1x1x32xf32>
    %564 = vector.shape_cast %563 : vector<1x1x32xf32> to vector<1x32xf32>
    %565 = vector.broadcast %564 : vector<1x32xf32> to vector<2x32xf32>
    %566 = arith.addf %562, %565 : vector<2x32xf32>
    %567 = arith.negf %566 : vector<2x32xf32>
    %568 = math.exp %567 : vector<2x32xf32>
    %cst_439 = arith.constant 1.000000e+00 : f32
    %569 = vector.broadcast %cst_439 : f32 to vector<2x32xf32>
    %570 = arith.addf %569, %568 : vector<2x32xf32>
    %571 = arith.divf %569, %570 : vector<2x32xf32>
    %c2_440 = arith.constant 2 : index
    %c0_441 = arith.constant 0 : index
    %c0_442 = arith.constant 0 : index
    %572 = vector.load %arg2[%c2_440, %c0_441, %c0_442] : memref<4x32x32xf32, #tpu.memory_space<vmem>>, vector<1x32x32xf32>
    %573 = vector.shape_cast %572 : vector<1x32x32xf32> to vector<32x32xf32>
    %cst_443 = arith.constant dense<0.000000e+00> : vector<2x32xf32>
    %574 = tpu.matmul %537, %573, %cst_443 {dimension_numbers = #tpu.dot_dimension_numbers<[1], [0], [0], [1], [0, 0, 1, 1], [], []>} : vector<2x32xf32>, vector<32x32xf32>, vector<2x32xf32> -> vector<2x32xf32>
    %c2_444 = arith.constant 2 : index
    %c0_445 = arith.constant 0 : index
    %c0_446 = arith.constant 0 : index
    %575 = vector.load %arg3[%c2_444, %c0_445, %c0_446] : memref<4x32x32xf32, #tpu.memory_space<vmem>>, vector<1x32x32xf32>
    %576 = vector.shape_cast %575 : vector<1x32x32xf32> to vector<32x32xf32>
    %cst_447 = arith.constant dense<0.000000e+00> : vector<2x32xf32>
    %577 = tpu.matmul %538, %576, %cst_447 {dimension_numbers = #tpu.dot_dimension_numbers<[1], [0], [0], [1], [0, 0, 1, 1], [], []>} : vector<2x32xf32>, vector<32x32xf32>, vector<2x32xf32> -> vector<2x32xf32>
    %578 = arith.addf %574, %577 : vector<2x32xf32>
    %c2_448 = arith.constant 2 : index
    %c0_449 = arith.constant 0 : index
    %c0_450 = arith.constant 0 : index
    %579 = vector.load %arg4[%c2_448, %c0_449, %c0_450] : memref<4x1x32xf32, #tpu.memory_space<vmem>>, vector<1x1x32xf32>
    %580 = vector.shape_cast %579 : vector<1x1x32xf32> to vector<1x32xf32>
    %581 = vector.broadcast %580 : vector<1x32xf32> to vector<2x32xf32>
    %582 = arith.addf %578, %581 : vector<2x32xf32>
    %583 = math.tanh %582 : vector<2x32xf32>
    %c3_451 = arith.constant 3 : index
    %c0_452 = arith.constant 0 : index
    %c0_453 = arith.constant 0 : index
    %584 = vector.load %arg2[%c3_451, %c0_452, %c0_453] : memref<4x32x32xf32, #tpu.memory_space<vmem>>, vector<1x32x32xf32>
    %585 = vector.shape_cast %584 : vector<1x32x32xf32> to vector<32x32xf32>
    %cst_454 = arith.constant dense<0.000000e+00> : vector<2x32xf32>
    %586 = tpu.matmul %537, %585, %cst_454 {dimension_numbers = #tpu.dot_dimension_numbers<[1], [0], [0], [1], [0, 0, 1, 1], [], []>} : vector<2x32xf32>, vector<32x32xf32>, vector<2x32xf32> -> vector<2x32xf32>
    %c3_455 = arith.constant 3 : index
    %c0_456 = arith.constant 0 : index
    %c0_457 = arith.constant 0 : index
    %587 = vector.load %arg3[%c3_455, %c0_456, %c0_457] : memref<4x32x32xf32, #tpu.memory_space<vmem>>, vector<1x32x32xf32>
    %588 = vector.shape_cast %587 : vector<1x32x32xf32> to vector<32x32xf32>
    %cst_458 = arith.constant dense<0.000000e+00> : vector<2x32xf32>
    %589 = tpu.matmul %538, %588, %cst_458 {dimension_numbers = #tpu.dot_dimension_numbers<[1], [0], [0], [1], [0, 0, 1, 1], [], []>} : vector<2x32xf32>, vector<32x32xf32>, vector<2x32xf32> -> vector<2x32xf32>
    %590 = arith.addf %586, %589 : vector<2x32xf32>
    %c3_459 = arith.constant 3 : index
    %c0_460 = arith.constant 0 : index
    %c0_461 = arith.constant 0 : index
    %591 = vector.load %arg4[%c3_459, %c0_460, %c0_461] : memref<4x1x32xf32, #tpu.memory_space<vmem>>, vector<1x1x32xf32>
    %592 = vector.shape_cast %591 : vector<1x1x32xf32> to vector<1x32xf32>
    %593 = vector.broadcast %592 : vector<1x32xf32> to vector<2x32xf32>
    %594 = arith.addf %590, %593 : vector<2x32xf32>
    %595 = arith.negf %594 : vector<2x32xf32>
    %596 = math.exp %595 : vector<2x32xf32>
    %cst_462 = arith.constant 1.000000e+00 : f32
    %597 = vector.broadcast %cst_462 : f32 to vector<2x32xf32>
    %598 = arith.addf %597, %596 : vector<2x32xf32>
    %599 = arith.divf %597, %598 : vector<2x32xf32>
    %600 = arith.mulf %571, %539 : vector<2x32xf32>
    %601 = arith.mulf %555, %583 : vector<2x32xf32>
    %602 = arith.addf %600, %601 : vector<2x32xf32>
    %603 = math.tanh %602 : vector<2x32xf32>
    %604 = arith.mulf %599, %603 : vector<2x32xf32>
    %c0_463 = arith.constant 0 : index
    %c0_464 = arith.constant 0 : index
    %605 = vector.load %arg7[%c0_463, %c0_464] : memref<2x32xf32, #tpu.memory_space<vmem>>, vector<2x32xf32>
    tpu.vector_store %arg7[%c0_463, %c0_464], %602 {strides = array<i32>} : memref<2x32xf32, #tpu.memory_space<vmem>>, vector<2x32xf32>,
    %c0_465 = arith.constant 0 : index
    %c0_466 = arith.constant 0 : index
    %606 = vector.load %arg6[%c0_465, %c0_466] : memref<2x32xf32, #tpu.memory_space<vmem>>, vector<2x32xf32>
    tpu.vector_store %arg6[%c0_465, %c0_466], %604 {strides = array<i32>} : memref<2x32xf32, #tpu.memory_space<vmem>>, vector<2x32xf32>,
    %607 = arith.index_cast %c7_i32 : i32 to index
    %c0_467 = arith.constant 0 : index
    %c0_468 = arith.constant 0 : index
    %608 = vector.load %arg5[%607, %c0_467, %c0_468] : memref<8x2x32xf32, #tpu.memory_space<vmem>>, vector<1x2x32xf32>
    %609 = vector.shape_cast %608 : vector<1x2x32xf32> to vector<2x32xf32>
    %610 = vector.shape_cast %604 : vector<2x32xf32> to vector<1x2x32xf32>
    tpu.vector_store %arg5[%607, %c0_467, %c0_468], %610 {strides = array<i32>} : memref<8x2x32xf32, #tpu.memory_space<vmem>>, vector<1x2x32xf32>,
    %c8_i32 = arith.constant 8 : i32
    return
  }
  func.func @transform_0(%arg0: i32) -> (i32, i32, i32) {
    %c0_i32 = arith.constant 0 : i32
    %c0_i32_0 = arith.constant 0 : i32
    %c0_i32_1 = arith.constant 0 : i32
    return %arg0, %c0_i32, %c0_i32_0 : i32, i32, i32
  }
  func.func @transform_1(%arg0: i32) -> (i32, i32, i32) {
    %c0_i32 = arith.constant 0 : i32
    %c0_i32_0 = arith.constant 0 : i32
    %c0_i32_1 = arith.constant 0 : i32
    %c0_i32_2 = arith.constant 0 : i32
    return %c0_i32, %c0_i32_0, %c0_i32_1 : i32, i32, i32
  }
  func.func @transform_2(%arg0: i32) -> (i32, i32, i32) {
    %c0_i32 = arith.constant 0 : i32
    %c0_i32_0 = arith.constant 0 : i32
    %c0_i32_1 = arith.constant 0 : i32
    %c0_i32_2 = arith.constant 0 : i32
    return %c0_i32, %c0_i32_0, %c0_i32_1 : i32, i32, i32
  }
  func.func @transform_3(%arg0: i32) -> (i32, i32, i32) {
    %c0_i32 = arith.constant 0 : i32
    %c0_i32_0 = arith.constant 0 : i32
    %c0_i32_1 = arith.constant 0 : i32
    %c0_i32_2 = arith.constant 0 : i32
    return %c0_i32, %c0_i32_0, %c0_i32_1 : i32, i32, i32
  }
  func.func @transform_4(%arg0: i32) -> (i32, i32, i32) {
    %c0_i32 = arith.constant 0 : i32
    %c0_i32_0 = arith.constant 0 : i32
    %c0_i32_1 = arith.constant 0 : i32
    return %arg0, %c0_i32, %c0_i32_0 : i32, i32, i32
  }
}

</mosaic_0001>

<llo_original>
// kernel: decoder_rnn_forward.3
$region0: #{decoder_rnn_forward.3}
  #allocation0 [shape = 'u32[]', space=smem, size = 0x4, offset = 0x4, fixed_abs, tag = 'smem constant byte address 0x4 - core index']
  #allocation1 [shape = 'u32[72,128]{1,0:T(1,128)}', space=vmem, size = 0x9000, scoped, tag = 'internal scratch']
  %s0 = inlined_call_operand.vmem [shape: f32[16,32], index: 0, kind: input, shape index: {}]
  %s1 = inlined_call_operand.vmem [shape: f32[32,128], index: 1, kind: input, shape index: {}]
  %s2 = inlined_call_operand.vmem [shape: f32[1,128], index: 2, kind: input, shape index: {}]
  %s3 = inlined_call_operand.vmem [shape: f32[16,128], index: 3, kind: output, shape index: {}]
  %s4 = sld [smem:[#allocation0]]
  $region22: #{decoder_rnn_forward.3} parent=0
    _
  %s6 = ssub.s32 1, %s4
  %s7 = scalar_select 0, %s6, %s4
  // Predicated region
  $region2: #{decoder_rnn_forward.3} parent=0 // pred_check
    _
  $region3: #{decoder_rnn_forward.3} parent=0 // pred_check_branch
    %9 = sbr.rel (0) target = $region5
  $region4: #{decoder_rnn_forward.3} parent=0 // pred_region
    _
  $region5: #{decoder_rnn_forward.3} parent=0 // pred_fallthru
    _
  // Predicated region
  $region6: #{decoder_rnn_forward.3} parent=0 // pred_check
    _
  $region7: #{decoder_rnn_forward.3} parent=0 // pred_check_branch
    %11 = sbr.rel (0) target = $region9
  $region8: #{decoder_rnn_forward.3} parent=0 // pred_region
    _
  $region9: #{decoder_rnn_forward.3} parent=0 // pred_fallthru
    _
  // Predicated region
  $region10: #{decoder_rnn_forward.3} parent=0 // pred_check
    _
  $region11: #{decoder_rnn_forward.3} parent=0 // pred_check_branch
    %13 = sbr.rel (0) target = $region13
  $region12: #{decoder_rnn_forward.3} parent=0 // pred_region
    _
  $region13: #{decoder_rnn_forward.3} parent=0 // pred_fallthru
    _
  %v14 = vld [vmem:[%s0] sm:$0xff]
  %v15 = vld [vmem:[%s0 + $0x8] sm:$0xff]
  %v16 = vld [vmem:[%s1] sm:$0xff]
  %v17 = vld [vmem:[%s1 + $0x8] sm:$0xff]
  %v18 = vld [vmem:[%s1 + $0x10] sm:$0xff]
  %v19 = vld [vmem:[%s1 + $0x18] sm:$0xff]
  %v20 = vld [vmem:[%s2] sm:$0x1]
  %v22 = vperm.slane %v20, 0
  %vm24 = vcmask 261120
  %v26 = vsel %vm24, %v14, 0
  %v29 = vsel %vm24, %v15, 0
  %31 = vmatpush.msra.mxu0 0.0
  %32 = vmatpush.msra.mxu0 0.0
  %33 = vmatpush.msra.mxu0 0.0
  %34 = vmatpush.msra.mxu0 0.0
  %35 = vmatpush.msra.mxu0 0.0
  %36 = vmatpush.msra.mxu0 0.0
  %37 = vmatpush.msra.mxu0 0.0
  %38 = vmatpush.msra.mxu0 0.0
  %39 = vmatpush.msra.mxu0 0.0
  %40 = vmatpush.msra.mxu0 0.0
  %41 = vmatpush.msra.mxu0 0.0
  %42 = vmatpush.msra.mxu0 0.0
  %43 = vmatpush.msra.mxu0 %v19
  %44 = vmatpush.msra.mxu0 %v18
  %45 = vmatpush.msra.mxu0 %v17
  %46 = vmatpush.msra.mxu0 %v16
  %47 = vmatmul.f32.gmra.mxu0 %v26
  %v48 = vpop.f32.mrf.mxu0
  %v49 = vadd.f32 %v22, %v48
  %50 = vmatmul.f32.gmra.mxu0 %v29
  %v51 = vpop.f32.mrf.mxu0
  %v52 = vadd.f32 %v22, %v51
  %53 = vdwg.mxu0
  %54 = vst [vmem:[%s3] sm:$0xff] %v49
  %55 = vst [vmem:[%s3 + $0x8] sm:$0xff] %v52
  // Predicated region
  $region14: #{decoder_rnn_forward.3} parent=0 // pred_check
    _
  $region15: #{decoder_rnn_forward.3} parent=0 // pred_check_branch
    %57 = sbr.rel (0) target = $region17
  $region16: #{decoder_rnn_forward.3} parent=0 // pred_region
    _
  $region17: #{decoder_rnn_forward.3} parent=0 // pred_fallthru
    _
  // Predicated region
  $region18: #{decoder_rnn_forward.3} parent=0 // pred_check
    _
  $region19: #{decoder_rnn_forward.3} parent=0 // pred_check_branch
    %59 = sbr.rel (0) target = $region21
  $region20: #{decoder_rnn_forward.3} parent=0 // pred_region
    _
  $region21: #{decoder_rnn_forward.3} parent=0 // pred_fallthru
    _

// kernel: decoder_rnn_forward.2
$region0: #{decoder_rnn_forward.2}
  #allocation0 [shape = 'u32[]', space=smem, size = 0x4, offset = 0x4, fixed_abs, tag = 'smem constant byte address 0x4 - core index']
  #allocation1 [shape = 'u32[72,128]{1,0:T(1,128)}', space=vmem, size = 0x9000, scoped, tag = 'internal scratch']
  #allocation2 [shape = 'f32[2,32]{1,0:T(2,128)}', space=vmem, size = 0x400, scoped, tag = 'scratch operand']
  #allocation3 [shape = 'f32[2,32]{1,0:T(2,128)}', space=vmem, size = 0x400, scoped, tag = 'scratch operand']
  %s0 = inlined_call_operand.vmem [shape: f32[8,2,32], index: 0, kind: input, shape index: {}]
  %s1 = inlined_call_operand.vmem [shape: f32[4,32,32], index: 1, kind: input, shape index: {}]
  %s2 = inlined_call_operand.vmem [shape: f32[4,32,32], index: 2, kind: input, shape index: {}]
  %s3 = inlined_call_operand.vmem [shape: f32[4,1,32], index: 3, kind: input, shape index: {}]
  %s4 = inlined_call_operand.vmem [shape: f32[8,2,32], index: 4, kind: output, shape index: {}]
  %s5 = sld [smem:[#allocation0]]
  $region30: #{decoder_rnn_forward.2} parent=0
    _
  %s7 = ssub.s32 1, %s5
  %s8 = scalar_select 0, %s7, %s5
  // Predicated region
  $region2: #{decoder_rnn_forward.2} parent=0 // pred_check
    _
  $region3: #{decoder_rnn_forward.2} parent=0 // pred_check_branch
    %10 = sbr.rel (0) target = $region5
  $region4: #{decoder_rnn_forward.2} parent=0 // pred_region
    _
  $region5: #{decoder_rnn_forward.2} parent=0 // pred_fallthru
    _
  // Predicated region
  $region6: #{decoder_rnn_forward.2} parent=0 // pred_check
    _
  $region7: #{decoder_rnn_forward.2} parent=0 // pred_check_branch
    %12 = sbr.rel (0) target = $region9
  $region8: #{decoder_rnn_forward.2} parent=0 // pred_region
    _
  $region9: #{decoder_rnn_forward.2} parent=0 // pred_fallthru
    _
  // Predicated region
  $region10: #{decoder_rnn_forward.2} parent=0 // pred_check
    _
  $region11: #{decoder_rnn_forward.2} parent=0 // pred_check_branch
    %14 = sbr.rel (0) target = $region13
  $region12: #{decoder_rnn_forward.2} parent=0 // pred_region
    _
  $region13: #{decoder_rnn_forward.2} parent=0 // pred_fallthru
    _
  // Predicated region
  $region14: #{decoder_rnn_forward.2} parent=0 // pred_check
    _
  $region15: #{decoder_rnn_forward.2} parent=0 // pred_check_branch
    %16 = sbr.rel (0) target = $region17
  $region16: #{decoder_rnn_forward.2} parent=0 // pred_region
    _
  $region17: #{decoder_rnn_forward.2} parent=0 // pred_fallthru
    _
  %p17 = scmp.eq.s32.totalorder 0, 0
  // Predicated region
  $region18: #{decoder_rnn_forward.2} parent=0 // pred_check
    %p18 = pneg %p17
  $region19: #{decoder_rnn_forward.2} parent=0 // pred_check_branch
    %20 = sbr.rel (%p18) target = $region21
  $region20: #{decoder_rnn_forward.2} parent=0 // pred_region
    %vm21 = vcmask 254976
    %22 = vst.msk [vmem:[#allocation2] sm:$0x3] %vm21, 0.0
    %23 = vst.msk [vmem:[#allocation3] sm:$0x3] %vm21, 0.0
  $region21: #{decoder_rnn_forward.2} parent=0 // pred_fallthru
    _
  %v24 = vld [vmem:[%s0] sm:$0x3]
  %v25 = vld [vmem:[#allocation2] sm:$0x3]
  %v26 = vld [vmem:[#allocation3] sm:$0x3]
  %v27 = vld [vmem:[%s1] sm:$0xff]
  %v28 = vld [vmem:[%s1 + $0x8] sm:$0xff]
  %v29 = vld [vmem:[%s1 + $0x10] sm:$0xff]
  %v30 = vld [vmem:[%s1 + $0x18] sm:$0xff]
  %v31 = vld [vmem:[%s2] sm:$0xff]
  %v32 = vld [vmem:[%s2 + $0x8] sm:$0xff]
  %v33 = vld [vmem:[%s2 + $0x10] sm:$0xff]
  %v34 = vld [vmem:[%s2 + $0x18] sm:$0xff]
  %vm35 = vcmask 261120
  %v37 = vsel %vm35, %v25, 0
  %39 = vmatpush.msra.mxu0 0.0
  %40 = vmatpush.msra.mxu0 0.0
  %41 = vmatpush.msra.mxu0 0.0
  %42 = vmatpush.msra.mxu0 0.0
  %43 = vmatpush.msra.mxu0 0.0
  %44 = vmatpush.msra.mxu0 0.0
  %45 = vmatpush.msra.mxu0 0.0
  %46 = vmatpush.msra.mxu0 0.0
  %47 = vmatpush.msra.mxu0 0.0
  %48 = vmatpush.msra.mxu0 0.0
  %49 = vmatpush.msra.mxu0 0.0
  %50 = vmatpush.msra.mxu0 0.0
  %51 = vmatpush.msra.mxu0 %v34
  %52 = vmatpush.msra.mxu0 %v33
  %53 = vmatpush.msra.mxu0 %v32
  %54 = vmatpush.msra.mxu0 %v31
  %55 = vmatmul.f32.gmra.mxu0 %v37
  %v56 = vpop.f32.mrf.mxu0
  %v57 = vadd.f32 0.0, %v56
  %58 = vdwg.mxu0
  %v60 = vsel %vm35, %v24, 0
  %62 = vmatpush.msra.mxu0 0.0
  %63 = vmatpush.msra.mxu0 0.0
  %64 = vmatpush.msra.mxu0 0.0
  %65 = vmatpush.msra.mxu0 0.0
  %66 = vmatpush.msra.mxu0 0.0
  %67 = vmatpush.msra.mxu0 0.0
  %68 = vmatpush.msra.mxu0 0.0
  %69 = vmatpush.msra.mxu0 0.0
  %70 = vmatpush.msra.mxu0 0.0
  %71 = vmatpush.msra.mxu0 0.0
  %72 = vmatpush.msra.mxu0 0.0
  %73 = vmatpush.msra.mxu0 0.0
  %74 = vmatpush.msra.mxu0 %v30
  %75 = vmatpush.msra.mxu0 %v29
  %76 = vmatpush.msra.mxu0 %v28
  %77 = vmatpush.msra.mxu0 %v27
  %78 = vmatmul.f32.gmra.mxu0 %v60
  %v79 = vpop.f32.mrf.mxu0
  %v80 = vadd.f32 %v57, %v79
  %81 = vdwg.mxu0
  %v82 = vld [vmem:[%s3] sm:$0x1]
  %v84 = vperm.slane %v82, 0
  %v86 = vadd.f32 %v80, %v84
  %v87 = vxor.u32 %v86, 2147483648
  %v88 = vmul.f32 %v87, 1.442695
  %v89 = vpow.pop %v88
  %v90 = vadd.f32 %v89, 1.0
  %v91 = vrcp.pop %v90
  %v92 = vmul.f32 %v90, %v91
  %v93 = vsub.f32 1.0, %v92
  %v94 = vmul.f32 %v91, %v93
  %v95 = vadd.f32 %v91, %v94
  %vm96 = vweird.f32 %v90
  %vm97 = vweird.f32 %v91
  %vm98 = vmor %vm96, %vm97
  %v99 = vsel %vm98, %v91, %v95
  %v100 = vand.u32 2147483647, %v90
  %vm101 = vcmp.eq.f32.partialorder %v100, 8.507059e+37
  %v102 = vand.u32 %v90, 2147483648
  %v103 = vor.u32 1.1754944e-38, %v102
  %v104 = vsel %vm101, %v103, %v99
  %v105 = vmul.f32 1.0, %v104
  %s106 = scalar_lea.vmem %s1, 32
  %v107 = vld [vmem:[%s106] sm:$0xff]
  %v108 = vld [vmem:[%s106 + $0x8] sm:$0xff]
  %v109 = vld [vmem:[%s106 + $0x10] sm:$0xff]
  %v110 = vld [vmem:[%s106 + $0x18] sm:$0xff]
  %s111 = scalar_lea.vmem %s2, 32
  %v112 = vld [vmem:[%s111] sm:$0xff]
  %v113 = vld [vmem:[%s111 + $0x8] sm:$0xff]
  %v114 = vld [vmem:[%s111 + $0x10] sm:$0xff]
  %v115 = vld [vmem:[%s111 + $0x18] sm:$0xff]
  %116 = vmatpush.msra.mxu0 0.0
  %117 = vmatpush.msra.mxu0 0.0
  %118 = vmatpush.msra.mxu0 0.0
  %119 = vmatpush.msra.mxu0 0.0
  %120 = vmatpush.msra.mxu0 0.0
  %121 = vmatpush.msra.mxu0 0.0
  %122 = vmatpush.msra.mxu0 0.0
  %123 = vmatpush.msra.mxu0 0.0
  %124 = vmatpush.msra.mxu0 0.0
  %125 = vmatpush.msra.mxu0 0.0
  %126 = vmatpush.msra.mxu0 0.0
  %127 = vmatpush.msra.mxu0 0.0
  %128 = vmatpush.msra.mxu0 %v115
  %129 = vmatpush.msra.mxu0 %v114
  %130 = vmatpush.msra.mxu0 %v113
  %131 = vmatpush.msra.mxu0 %v112
  %132 = vmatmul.f32.gmra.mxu0 %v37
  %v133 = vpop.f32.mrf.mxu0
  %v134 = vadd.f32 0.0, %v133
  %135 = vdwg.mxu0
  %136 = vmatpush.msra.mxu0 0.0
  %137 = vmatpush.msra.mxu0 0.0
  %138 = vmatpush.msra.mxu0 0.0
  %139 = vmatpush.msra.mxu0 0.0
  %140 = vmatpush.msra.mxu0 0.0
  %141 = vmatpush.msra.mxu0 0.0
  %142 = vmatpush.msra.mxu0 0.0
  %143 = vmatpush.msra.mxu0 0.0
  %144 = vmatpush.msra.mxu0 0.0
  %145 = vmatpush.msra.mxu0 0.0
  %146 = vmatpush.msra.mxu0 0.0
  %147 = vmatpush.msra.mxu0 0.0
  %148 = vmatpush.msra.mxu0 %v110
  %149 = vmatpush.msra.mxu0 %v109
  %150 = vmatpush.msra.mxu0 %v108
  %151 = vmatpush.msra.mxu0 %v107
  %152 = vmatmul.f32.gmra.mxu0 %v60
  %v153 = vpop.f32.mrf.mxu0
  %v154 = vadd.f32 %v134, %v153
  %155 = vdwg.mxu0
  %s156 = scalar_lea.vmem %s3, 1
  %v157 = vld [vmem:[%s156] sm:$0x1]
  %v159 = vperm.slane %v157, 0
  %v161 = vadd.f32 %v154, %v159
  %v162 = vxor.u32 %v161, 2147483648
  %v163 = vmul.f32 %v162, 1.442695
  %v164 = vpow.pop %v163
  %v165 = vadd.f32 %v164, 1.0
  %v166 = vrcp.pop %v165
  %v167 = vmul.f32 %v165, %v166
  %v168 = vsub.f32 1.0, %v167
  %v169 = vmul.f32 %v166, %v168
  %v170 = vadd.f32 %v166, %v169
  %vm171 = vweird.f32 %v165
  %vm172 = vweird.f32 %v166
  %vm173 = vmor %vm171, %vm172
  %v174 = vsel %vm173, %v166, %v170
  %v175 = vand.u32 2147483647, %v165
  %vm176 = vcmp.eq.f32.partialorder %v175, 8.507059e+37
  %v177 = vand.u32 %v165, 2147483648
  %v178 = vor.u32 1.1754944e-38, %v177
  %v179 = vsel %vm176, %v178, %v174
  %v180 = vmul.f32 1.0, %v179
  %s181 = scalar_lea.vmem %s1, 64
  %v182 = vld [vmem:[%s181] sm:$0xff]
  %v183 = vld [vmem:[%s181 + $0x8] sm:$0xff]
  %v184 = vld [vmem:[%s181 + $0x10] sm:$0xff]
  %v185 = vld [vmem:[%s181 + $0x18] sm:$0xff]
  %s186 = scalar_lea.vmem %s2, 64
  %v187 = vld [vmem:[%s186] sm:$0xff]
  %v188 = vld [vmem:[%s186 + $0x8] sm:$0xff]
  %v189 = vld [vmem:[%s186 + $0x10] sm:$0xff]
  %v190 = vld [vmem:[%s186 + $0x18] sm:$0xff]
  %191 = vmatpush.msra.mxu0 0.0
  %192 = vmatpush.msra.mxu0 0.0
  %193 = vmatpush.msra.mxu0 0.0
  %194 = vmatpush.msra.mxu0 0.0
  %195 = vmatpush.msra.mxu0 0.0
  %196 = vmatpush.msra.mxu0 0.0
  %197 = vmatpush.msra.mxu0 0.0
  %198 = vmatpush.msra.mxu0 0.0
  %199 = vmatpush.msra.mxu0 0.0
  %200 = vmatpush.msra.mxu0 0.0
  %201 = vmatpush.msra.mxu0 0.0
  %202 = vmatpush.msra.mxu0 0.0
  %203 = vmatpush.msra.mxu0 %v190
  %204 = vmatpush.msra.mxu0 %v189
  %205 = vmatpush.msra.mxu0 %v188
  %206 = vmatpush.msra.mxu0 %v187
  %207 = vmatmul.f32.gmra.mxu0 %v37
  %v208 = vpop.f32.mrf.mxu0
  %v209 = vadd.f32 0.0, %v208
  %210 = vdwg.mxu0
  %211 = vmatpush.msra.mxu0 0.0
  %212 = vmatpush.msra.mxu0 0.0
  %213 = vmatpush.msra.mxu0 0.0
  %214 = vmatpush.msra.mxu0 0.0
  %215 = vmatpush.msra.mxu0 0.0
  %216 = vmatpush.msra.mxu0 0.0
  %217 = vmatpush.msra.mxu0 0.0
  %218 = vmatpush.msra.mxu0 0.0
  %219 = vmatpush.msra.mxu0 0.0
  %220 = vmatpush.msra.mxu0 0.0
  %221 = vmatpush.msra.mxu0 0.0
  %222 = vmatpush.msra.mxu0 0.0
  %223 = vmatpush.msra.mxu0 %v185
  %224 = vmatpush.msra.mxu0 %v184
  %225 = vmatpush.msra.mxu0 %v183
  %226 = vmatpush.msra.mxu0 %v182
  %227 = vmatmul.f32.gmra.mxu0 %v60
  %v228 = vpop.f32.mrf.mxu0
  %v229 = vadd.f32 %v209, %v228
  %230 = vdwg.mxu0
  %s231 = scalar_lea.vmem %s3, 2
  %v232 = vld [vmem:[%s231] sm:$0x1]
  %v234 = vperm.slane %v232, 0
  %v236 = vadd.f32 %v229, %v234
  %v237 = vtanh.pop %v236
  %s238 = scalar_lea.vmem %s1, 96
  %v239 = vld [vmem:[%s238] sm:$0xff]
  %v240 = vld [vmem:[%s238 + $0x8] sm:$0xff]
  %v241 = vld [vmem:[%s238 + $0x10] sm:$0xff]
  %v242 = vld [vmem:[%s238 + $0x18] sm:$0xff]
  %s243 = scalar_lea.vmem %s2, 96
  %v244 = vld [vmem:[%s243] sm:$0xff]
  %v245 = vld [vmem:[%s243 + $0x8] sm:$0xff]
  %v246 = vld [vmem:[%s243 + $0x10] sm:$0xff]
  %v247 = vld [vmem:[%s243 + $0x18] sm:$0xff]
  %248 = vmatpush.msra.mxu0 0.0
  %249 = vmatpush.msra.mxu0 0.0
  %250 = vmatpush.msra.mxu0 0.0
  %251 = vmatpush.msra.mxu0 0.0
  %252 = vmatpush.msra.mxu0 0.0
  %253 = vmatpush.msra.mxu0 0.0
  %254 = vmatpush.msra.mxu0 0.0
  %255 = vmatpush.msra.mxu0 0.0
  %256 = vmatpush.msra.mxu0 0.0
  %257 = vmatpush.msra.mxu0 0.0
  %258 = vmatpush.msra.mxu0 0.0
  %259 = vmatpush.msra.mxu0 0.0
  %260 = vmatpush.msra.mxu0 %v247
  %261 = vmatpush.msra.mxu0 %v246
  %262 = vmatpush.msra.mxu0 %v245
  %263 = vmatpush.msra.mxu0 %v244
  %264 = vmatmul.f32.gmra.mxu0 %v37
  %v265 = vpop.f32.mrf.mxu0
  %v266 = vadd.f32 0.0, %v265
  %267 = vdwg.mxu0
  %268 = vmatpush.msra.mxu0 0.0
  %269 = vmatpush.msra.mxu0 0.0
  %270 = vmatpush.msra.mxu0 0.0
  %271 = vmatpush.msra.mxu0 0.0
  %272 = vmatpush.msra.mxu0 0.0
  %273 = vmatpush.msra.mxu0 0.0
  %274 = vmatpush.msra.mxu0 0.0
  %275 = vmatpush.msra.mxu0 0.0
  %276 = vmatpush.msra.mxu0 0.0
  %277 = vmatpush.msra.mxu0 0.0
  %278 = vmatpush.msra.mxu0 0.0
  %279 = vmatpush.msra.mxu0 0.0
  %280 = vmatpush.msra.mxu0 %v242
  %281 = vmatpush.msra.mxu0 %v241
  %282 = vmatpush.msra.mxu0 %v240
  %283 = vmatpush.msra.mxu0 %v239
  %284 = vmatmul.f32.gmra.mxu0 %v60
  %v285 = vpop.f32.mrf.mxu0
  %v286 = vadd.f32 %v266, %v285
  %287 = vdwg.mxu0
  %s288 = scalar_lea.vmem %s3, 3
  %v289 = vld [vmem:[%s288] sm:$0x1]
  %v291 = vperm.slane %v289, 0
  %v293 = vadd.f32 %v286, %v291
  %v294 = vxor.u32 %v293, 2147483648
  %v295 = vmul.f32 %v294, 1.442695
  %v296 = vpow.pop %v295
  %v297 = vadd.f32 %v296, 1.0
  %v298 = vrcp.pop %v297
  %v299 = vmul.f32 %v297, %v298
  %v300 = vsub.f32 1.0, %v299
  %v301 = vmul.f32 %v298, %v300
  %v302 = vadd.f32 %v298, %v301
  %vm303 = vweird.f32 %v297
  %vm304 = vweird.f32 %v298
  %vm305 = vmor %vm303, %vm304
  %v306 = vsel %vm305, %v298, %v302
  %v307 = vand.u32 2147483647, %v297
  %vm308 = vcmp.eq.f32.partialorder %v307, 8.507059e+37
  %v309 = vand.u32 %v297, 2147483648
  %v310 = vor.u32 1.1754944e-38, %v309
  %v311 = vsel %vm308, %v310, %v306
  %v312 = vmul.f32 1.0, %v311
  %v313 = vmul.f32 %v180, %v26
  %v314 = vmul.f32 %v105, %v237
  %v315 = vadd.f32 %v313, %v314
  %v316 = vtanh.pop %v315
  %v317 = vmul.f32 %v312, %v316
  %vm318 = vcmask 254976
  %319 = vst.msk [vmem:[#allocation3] sm:$0x3] %vm318, %v315
  %320 = vst.msk [vmem:[#allocation2] sm:$0x3] %vm318, %v317
  %321 = vst.msk [vmem:[%s4] sm:$0x3] %vm318, %v317
  %s322 = scalar_lea.vmem %s0, 2
  %v323 = vld [vmem:[%s322] sm:$0x3]
  %v324 = vld [vmem:[#allocation2] sm:$0x3]
  %v325 = vld [vmem:[#allocation3] sm:$0x3]
  %v326 = vld [vmem:[%s1] sm:$0xff]
  %v327 = vld [vmem:[%s1 + $0x8] sm:$0xff]
  %v328 = vld [vmem:[%s1 + $0x10] sm:$0xff]
  %v329 = vld [vmem:[%s1 + $0x18] sm:$0xff]
  %v330 = vld [vmem:[%s2] sm:$0xff]
  %v331 = vld [vmem:[%s2 + $0x8] sm:$0xff]
  %v332 = vld [vmem:[%s2 + $0x10] sm:$0xff]
  %v333 = vld [vmem:[%s2 + $0x18] sm:$0xff]
  %v335 = vsel %vm35, %v324, 0
  %337 = vmatpush.msra.mxu0 0.0
  %338 = vmatpush.msra.mxu0 0.0
  %339 = vmatpush.msra.mxu0 0.0
  %340 = vmatpush.msra.mxu0 0.0
  %341 = vmatpush.msra.mxu0 0.0
  %342 = vmatpush.msra.mxu0 0.0
  %343 = vmatpush.msra.mxu0 0.0
  %344 = vmatpush.msra.mxu0 0.0
  %345 = vmatpush.msra.mxu0 0.0
  %346 = vmatpush.msra.mxu0 0.0
  %347 = vmatpush.msra.mxu0 0.0
  %348 = vmatpush.msra.mxu0 0.0
  %349 = vmatpush.msra.mxu0 %v333
  %350 = vmatpush.msra.mxu0 %v332
  %351 = vmatpush.msra.mxu0 %v331
  %352 = vmatpush.msra.mxu0 %v330
  %353 = vmatmul.f32.gmra.mxu0 %v335
  %v354 = vpop.f32.mrf.mxu0
  %v355 = vadd.f32 0.0, %v354
  %356 = vdwg.mxu0
  %v358 = vsel %vm35, %v323, 0
  %360 = vmatpush.msra.mxu0 0.0
  %361 = vmatpush.msra.mxu0 0.0
  %362 = vmatpush.msra.mxu0 0.0
  %363 = vmatpush.msra.mxu0 0.0
  %364 = vmatpush.msra.mxu0 0.0
  %365 = vmatpush.msra.mxu0 0.0
  %366 = vmatpush.msra.mxu0 0.0
  %367 = vmatpush.msra.mxu0 0.0
  %368 = vmatpush.msra.mxu0 0.0
  %369 = vmatpush.msra.mxu0 0.0
  %370 = vmatpush.msra.mxu0 0.0
  %371 = vmatpush.msra.mxu0 0.0
  %372 = vmatpush.msra.mxu0 %v329
  %373 = vmatpush.msra.mxu0 %v328
  %374 = vmatpush.msra.mxu0 %v327
  %375 = vmatpush.msra.mxu0 %v326
  %376 = vmatmul.f32.gmra.mxu0 %v358
  %v377 = vpop.f32.mrf.mxu0
  %v378 = vadd.f32 %v355, %v377
  %379 = vdwg.mxu0
  %v380 = vld [vmem:[%s3] sm:$0x1]
  %v382 = vperm.slane %v380, 0
  %v384 = vadd.f32 %v378, %v382
  %v385 = vxor.u32 %v384, 2147483648
  %v386 = vmul.f32 %v385, 1.442695
  %v387 = vpow.pop %v386
  %v388 = vadd.f32 %v387, 1.0
  %v389 = vrcp.pop %v388
  %v390 = vmul.f32 %v388, %v389
  %v391 = vsub.f32 1.0, %v390
  %v392 = vmul.f32 %v389, %v391
  %v393 = vadd.f32 %v389, %v392
  %vm394 = vweird.f32 %v388
  %vm395 = vweird.f32 %v389
  %vm396 = vmor %vm394, %vm395
  %v397 = vsel %vm396, %v389, %v393
  %v398 = vand.u32 2147483647, %v388
  %vm399 = vcmp.eq.f32.partialorder %v398, 8.507059e+37
  %v400 = vand.u32 %v388, 2147483648
  %v401 = vor.u32 1.1754944e-38, %v400
  %v402 = vsel %vm399, %v401, %v397
  %v403 = vmul.f32 1.0, %v402
  %v404 = vld [vmem:[%s106] sm:$0xff]
  %v405 = vld [vmem:[%s106 + $0x8] sm:$0xff]
  %v406 = vld [vmem:[%s106 + $0x10] sm:$0xff]
  %v407 = vld [vmem:[%s106 + $0x18] sm:$0xff]
  %v408 = vld [vmem:[%s111] sm:$0xff]
  %v409 = vld [vmem:[%s111 + $0x8] sm:$0xff]
  %v410 = vld [vmem:[%s111 + $0x10] sm:$0xff]
  %v411 = vld [vmem:[%s111 + $0x18] sm:$0xff]
  %412 = vmatpush.msra.mxu0 0.0
  %413 = vmatpush.msra.mxu0 0.0
  %414 = vmatpush.msra.mxu0 0.0
  %415 = vmatpush.msra.mxu0 0.0
  %416 = vmatpush.msra.mxu0 0.0
  %417 = vmatpush.msra.mxu0 0.0
  %418 = vmatpush.msra.mxu0 0.0
  %419 = vmatpush.msra.mxu0 0.0
  %420 = vmatpush.msra.mxu0 0.0
  %421 = vmatpush.msra.mxu0 0.0
  %422 = vmatpush.msra.mxu0 0.0
  %423 = vmatpush.msra.mxu0 0.0
  %424 = vmatpush.msra.mxu0 %v411
  %425 = vmatpush.msra.mxu0 %v410
  %426 = vmatpush.msra.mxu0 %v409
  %427 = vmatpush.msra.mxu0 %v408
  %428 = vmatmul.f32.gmra.mxu0 %v335
  %v429 = vpop.f32.mrf.mxu0
  %v430 = vadd.f32 0.0, %v429
  %431 = vdwg.mxu0
  %432 = vmatpush.msra.mxu0 0.0
  %433 = vmatpush.msra.mxu0 0.0
  %434 = vmatpush.msra.mxu0 0.0
  %435 = vmatpush.msra.mxu0 0.0
  %436 = vmatpush.msra.mxu0 0.0
  %437 = vmatpush.msra.mxu0 0.0
  %438 = vmatpush.msra.mxu0 0.0
  %439 = vmatpush.msra.mxu0 0.0
  %440 = vmatpush.msra.mxu0 0.0
  %441 = vmatpush.msra.mxu0 0.0
  %442 = vmatpush.msra.mxu0 0.0
  %443 = vmatpush.msra.mxu0 0.0
  %444 = vmatpush.msra.mxu0 %v407
  %445 = vmatpush.msra.mxu0 %v406
  %446 = vmatpush.msra.mxu0 %v405
  %447 = vmatpush.msra.mxu0 %v404
  %448 = vmatmul.f32.gmra.mxu0 %v358
  %v449 = vpop.f32.mrf.mxu0
  %v450 = vadd.f32 %v430, %v449
  %451 = vdwg.mxu0
  %v452 = vld [vmem:[%s156] sm:$0x1]
  %v454 = vperm.slane %v452, 0
  %v456 = vadd.f32 %v450, %v454
  %v457 = vxor.u32 %v456, 2147483648
  %v458 = vmul.f32 %v457, 1.442695
  %v459 = vpow.pop %v458
  %v460 = vadd.f32 %v459, 1.0
  %v461 = vrcp.pop %v460
  %v462 = vmul.f32 %v460, %v461
  %v463 = vsub.f32 1.0, %v462
  %v464 = vmul.f32 %v461, %v463
  %v465 = vadd.f32 %v461, %v464
  %vm466 = vweird.f32 %v460
  %vm467 = vweird.f32 %v461
  %vm468 = vmor %vm466, %vm467
  %v469 = vsel %vm468, %v461, %v465
  %v470 = vand.u32 2147483647, %v460
  %vm471 = vcmp.eq.f32.partialorder %v470, 8.507059e+37
  %v472 = vand.u32 %v460, 2147483648
  %v473 = vor.u32 1.1754944e-38, %v472
  %v474 = vsel %vm471, %v473, %v469
  %v475 = vmul.f32 1.0, %v474
  %v476 = vld [vmem:[%s181] sm:$0xff]
  %v477 = vld [vmem:[%s181 + $0x8] sm:$0xff]
  %v478 = vld [vmem:[%s181 + $0x10] sm:$0xff]
  %v479 = vld [vmem:[%s181 + $0x18] sm:$0xff]
  %v480 = vld [vmem:[%s186] sm:$0xff]
  %v481 = vld [vmem:[%s186 + $0x8] sm:$0xff]
  %v482 = vld [vmem:[%s186 + $0x10] sm:$0xff]
  %v483 = vld [vmem:[%s186 + $0x18] sm:$0xff]
  %484 = vmatpush.msra.mxu0 0.0
  %485 = vmatpush.msra.mxu0 0.0
  %486 = vmatpush.msra.mxu0 0.0
  %487 = vmatpush.msra.mxu0 0.0
  %488 = vmatpush.msra.mxu0 0.0
  %489 = vmatpush.msra.mxu0 0.0
  %490 = vmatpush.msra.mxu0 0.0
  %491 = vmatpush.msra.mxu0 0.0
  %492 = vmatpush.msra.mxu0 0.0
  %493 = vmatpush.msra.mxu0 0.0
  %494 = vmatpush.msra.mxu0 0.0
  %495 = vmatpush.msra.mxu0 0.0
  %496 = vmatpush.msra.mxu0 %v483
  %497 = vmatpush.msra.mxu0 %v482
  %498 = vmatpush.msra.mxu0 %v481
  %499 = vmatpush.msra.mxu0 %v480
  %500 = vmatmul.f32.gmra.mxu0 %v335
  %v501 = vpop.f32.mrf.mxu0
  %v502 = vadd.f32 0.0, %v501
  %503 = vdwg.mxu0
  %504 = vmatpush.msra.mxu0 0.0
  %505 = vmatpush.msra.mxu0 0.0
  %506 = vmatpush.msra.mxu0 0.0
  %507 = vmatpush.msra.mxu0 0.0
  %508 = vmatpush.msra.mxu0 0.0
  %509 = vmatpush.msra.mxu0 0.0
  %510 = vmatpush.msra.mxu0 0.0
  %511 = vmatpush.msra.mxu0 0.0
  %512 = vmatpush.msra.mxu0 0.0
  %513 = vmatpush.msra.mxu0 0.0
  %514 = vmatpush.msra.mxu0 0.0
  %515 = vmatpush.msra.mxu0 0.0
  %516 = vmatpush.msra.mxu0 %v479
  %517 = vmatpush.msra.mxu0 %v478
  %518 = vmatpush.msra.mxu0 %v477
  %519 = vmatpush.msra.mxu0 %v476
  %520 = vmatmul.f32.gmra.mxu0 %v358
  %v521 = vpop.f32.mrf.mxu0
  %v522 = vadd.f32 %v502, %v521
  %523 = vdwg.mxu0
  %v524 = vld [vmem:[%s231] sm:$0x1]
  %v526 = vperm.slane %v524, 0
  %v528 = vadd.f32 %v522, %v526
  %v529 = vtanh.pop %v528
  %v530 = vld [vmem:[%s238] sm:$0xff]
  %v531 = vld [vmem:[%s238 + $0x8] sm:$0xff]
  %v532 = vld [vmem:[%s238 + $0x10] sm:$0xff]
  %v533 = vld [vmem:[%s238 + $0x18] sm:$0xff]
  %v534 = vld [vmem:[%s243] sm:$0xff]
  %v535 = vld [vmem:[%s243 + $0x8] sm:$0xff]
  %v536 = vld [vmem:[%s243 + $0x10] sm:$0xff]
  %v537 = vld [vmem:[%s243 + $0x18] sm:$0xff]
  %538 = vmatpush.msra.mxu0 0.0
  %539 = vmatpush.msra.mxu0 0.0
  %540 = vmatpush.msra.mxu0 0.0
  %541 = vmatpush.msra.mxu0 0.0
  %542 = vmatpush.msra.mxu0 0.0
  %543 = vmatpush.msra.mxu0 0.0
  %544 = vmatpush.msra.mxu0 0.0
  %545 = vmatpush.msra.mxu0 0.0
  %546 = vmatpush.msra.mxu0 0.0
  %547 = vmatpush.msra.mxu0 0.0
  %548 = vmatpush.msra.mxu0 0.0
  %549 = vmatpush.msra.mxu0 0.0
  %550 = vmatpush.msra.mxu0 %v537
  %551 = vmatpush.msra.mxu0 %v536
  %552 = vmatpush.msra.mxu0 %v535
  %553 = vmatpush.msra.mxu0 %v534
  %554 = vmatmul.f32.gmra.mxu0 %v335
  %v555 = vpop.f32.mrf.mxu0
  %v556 = vadd.f32 0.0, %v555
  %557 = vdwg.mxu0
  %558 = vmatpush.msra.mxu0 0.0
  %559 = vmatpush.msra.mxu0 0.0
  %560 = vmatpush.msra.mxu0 0.0
  %561 = vmatpush.msra.mxu0 0.0
  %562 = vmatpush.msra.mxu0 0.0
  %563 = vmatpush.msra.mxu0 0.0
  %564 = vmatpush.msra.mxu0 0.0
  %565 = vmatpush.msra.mxu0 0.0
  %566 = vmatpush.msra.mxu0 0.0
  %567 = vmatpush.msra.mxu0 0.0
  %568 = vmatpush.msra.mxu0 0.0
  %569 = vmatpush.msra.mxu0 0.0
  %570 = vmatpush.msra.mxu0 %v533
  %571 = vmatpush.msra.mxu0 %v532
  %572 = vmatpush.msra.mxu0 %v531
  %573 = vmatpush.msra.mxu0 %v530
  %574 = vmatmul.f32.gmra.mxu0 %v358
  %v575 = vpop.f32.mrf.mxu0
  %v576 = vadd.f32 %v556, %v575
  %577 = vdwg.mxu0
  %v578 = vld [vmem:[%s288] sm:$0x1]
  %v580 = vperm.slane %v578, 0
  %v582 = vadd.f32 %v576, %v580
  %v583 = vxor.u32 %v582, 2147483648
  %v584 = vmul.f32 %v583, 1.442695
  %v585 = vpow.pop %v584
  %v586 = vadd.f32 %v585, 1.0
  %v587 = vrcp.pop %v586
  %v588 = vmul.f32 %v586, %v587
  %v589 = vsub.f32 1.0, %v588
  %v590 = vmul.f32 %v587, %v589
  %v591 = vadd.f32 %v587, %v590
  %vm592 = vweird.f32 %v586
  %vm593 = vweird.f32 %v587
  %vm594 = vmor %vm592, %vm593
  %v595 = vsel %vm594, %v587, %v591
  %v596 = vand.u32 2147483647, %v586
  %vm597 = vcmp.eq.f32.partialorder %v596, 8.507059e+37
  %v598 = vand.u32 %v586, 2147483648
  %v599 = vor.u32 1.1754944e-38, %v598
  %v600 = vsel %vm597, %v599, %v595
  %v601 = vmul.f32 1.0, %v600
  %v602 = vmul.f32 %v475, %v325
  %v603 = vmul.f32 %v403, %v529
  %v604 = vadd.f32 %v602, %v603
  %v605 = vtanh.pop %v604
  %v606 = vmul.f32 %v601, %v605
  %607 = vst.msk [vmem:[#allocation3] sm:$0x3] %vm318, %v604
  %608 = vst.msk [vmem:[#allocation2] sm:$0x3] %vm318, %v606
  %s609 = scalar_lea.vmem %s4, 2
  %610 = vst.msk [vmem:[%s609] sm:$0x3] %vm318, %v606
  %s611 = scalar_lea.vmem %s0, 4
  %v612 = vld [vmem:[%s611] sm:$0x3]
  %v613 = vld [vmem:[#allocation2] sm:$0x3]
  %v614 = vld [vmem:[#allocation3] sm:$0x3]
  %v615 = vld [vmem:[%s1] sm:$0xff]
  %v616 = vld [vmem:[%s1 + $0x8] sm:$0xff]
  %v617 = vld [vmem:[%s1 + $0x10] sm:$0xff]
  %v618 = vld [vmem:[%s1 + $0x18] sm:$0xff]
  %v619 = vld [vmem:[%s2] sm:$0xff]
  %v620 = vld [vmem:[%s2 + $0x8] sm:$0xff]
  %v621 = vld [vmem:[%s2 + $0x10] sm:$0xff]
  %v622 = vld [vmem:[%s2 + $0x18] sm:$0xff]
  %v624 = vsel %vm35, %v613, 0
  %626 = vmatpush.msra.mxu0 0.0
  %627 = vmatpush.msra.mxu0 0.0
  %628 = vmatpush.msra.mxu0 0.0
  %629 = vmatpush.msra.mxu0 0.0
  %630 = vmatpush.msra.mxu0 0.0
  %631 = vmatpush.msra.mxu0 0.0
  %632 = vmatpush.msra.mxu0 0.0
  %633 = vmatpush.msra.mxu0 0.0
  %634 = vmatpush.msra.mxu0 0.0
  %635 = vmatpush.msra.mxu0 0.0
  %636 = vmatpush.msra.mxu0 0.0
  %637 = vmatpush.msra.mxu0 0.0
  %638 = vmatpush.msra.mxu0 %v622
  %639 = vmatpush.msra.mxu0 %v621
  %640 = vmatpush.msra.mxu0 %v620
  %641 = vmatpush.msra.mxu0 %v619
  %642 = vmatmul.f32.gmra.mxu0 %v624
  %v643 = vpop.f32.mrf.mxu0
  %v644 = vadd.f32 0.0, %v643
  %645 = vdwg.mxu0
  %v647 = vsel %vm35, %v612, 0
  %649 = vmatpush.msra.mxu0 0.0
  %650 = vmatpush.msra.mxu0 0.0
  %651 = vmatpush.msra.mxu0 0.0
  %652 = vmatpush.msra.mxu0 0.0
  %653 = vmatpush.msra.mxu0 0.0
  %654 = vmatpush.msra.mxu0 0.0
  %655 = vmatpush.msra.mxu0 0.0
  %656 = vmatpush.msra.mxu0 0.0
  %657 = vmatpush.msra.mxu0 0.0
  %658 = vmatpush.msra.mxu0 0.0
  %659 = vmatpush.msra.mxu0 0.0
  %660 = vmatpush.msra.mxu0 0.0
  %661 = vmatpush.msra.mxu0 %v618
  %662 = vmatpush.msra.mxu0 %v617
  %663 = vmatpush.msra.mxu0 %v616
  %664 = vmatpush.msra.mxu0 %v615
  %665 = vmatmul.f32.gmra.mxu0 %v647
  %v666 = vpop.f32.mrf.mxu0
  %v667 = vadd.f32 %v644, %v666
  %668 = vdwg.mxu0
  %v669 = vld [vmem:[%s3] sm:$0x1]
  %v671 = vperm.slane %v669, 0
  %v673 = vadd.f32 %v667, %v671
  %v674 = vxor.u32 %v673, 2147483648
  %v675 = vmul.f32 %v674, 1.442695
  %v676 = vpow.pop %v675
  %v677 = vadd.f32 %v676, 1.0
  %v678 = vrcp.pop %v677
  %v679 = vmul.f32 %v677, %v678
  %v680 = vsub.f32 1.0, %v679
  %v681 = vmul.f32 %v678, %v680
  %v682 = vadd.f32 %v678, %v681
  %vm683 = vweird.f32 %v677
  %vm684 = vweird.f32 %v678
  %vm685 = vmor %vm683, %vm684
  %v686 = vsel %vm685, %v678, %v682
  %v687 = vand.u32 2147483647, %v677
  %vm688 = vcmp.eq.f32.partialorder %v687, 8.507059e+37
  %v689 = vand.u32 %v677, 2147483648
  %v690 = vor.u32 1.1754944e-38, %v689
  %v691 = vsel %vm688, %v690, %v686
  %v692 = vmul.f32 1.0, %v691
  %v693 = vld [vmem:[%s106] sm:$0xff]
  %v694 = vld [vmem:[%s106 + $0x8] sm:$0xff]
  %v695 = vld [vmem:[%s106 + $0x10] sm:$0xff]
  %v696 = vld [vmem:[%s106 + $0x18] sm:$0xff]
  %v697 = vld [vmem:[%s111] sm:$0xff]
  %v698 = vld [vmem:[%s111 + $0x8] sm:$0xff]
  %v699 = vld [vmem:[%s111 + $0x10] sm:$0xff]
  %v700 = vld [vmem:[%s111 + $0x18] sm:$0xff]
  %701 = vmatpush.msra.mxu0 0.0
  %702 = vmatpush.msra.mxu0 0.0
  %703 = vmatpush.msra.mxu0 0.0
  %704 = vmatpush.msra.mxu0 0.0
  %705 = vmatpush.msra.mxu0 0.0
  %706 = vmatpush.msra.mxu0 0.0
  %707 = vmatpush.msra.mxu0 0.0
  %708 = vmatpush.msra.mxu0 0.0
  %709 = vmatpush.msra.mxu0 0.0
  %710 = vmatpush.msra.mxu0 0.0
  %711 = vmatpush.msra.mxu0 0.0
  %712 = vmatpush.msra.mxu0 0.0
  %713 = vmatpush.msra.mxu0 %v700
  %714 = vmatpush.msra.mxu0 %v699
  %715 = vmatpush.msra.mxu0 %v698
  %716 = vmatpush.msra.mxu0 %v697
  %717 = vmatmul.f32.gmra.mxu0 %v624
  %v718 = vpop.f32.mrf.mxu0
  %v719 = vadd.f32 0.0, %v718
  %720 = vdwg.mxu0
  %721 = vmatpush.msra.mxu0 0.0
  %722 = vmatpush.msra.mxu0 0.0
  %723 = vmatpush.msra.mxu0 0.0
  %724 = vmatpush.msra.mxu0 0.0
  %725 = vmatpush.msra.mxu0 0.0
  %726 = vmatpush.msra.mxu0 0.0
  %727 = vmatpush.msra.mxu0 0.0
  %728 = vmatpush.msra.mxu0 0.0
  %729 = vmatpush.msra.mxu0 0.0
  %730 = vmatpush.msra.mxu0 0.0
  %731 = vmatpush.msra.mxu0 0.0
  %732 = vmatpush.msra.mxu0 0.0
  %733 = vmatpush.msra.mxu0 %v696
  %734 = vmatpush.msra.mxu0 %v695
  %735 = vmatpush.msra.mxu0 %v694
  %736 = vmatpush.msra.mxu0 %v693
  %737 = vmatmul.f32.gmra.mxu0 %v647
  %v738 = vpop.f32.mrf.mxu0
  %v739 = vadd.f32 %v719, %v738
  %740 = vdwg.mxu0
  %v741 = vld [vmem:[%s156] sm:$0x1]
  %v743 = vperm.slane %v741, 0
  %v745 = vadd.f32 %v739, %v743
  %v746 = vxor.u32 %v745, 2147483648
  %v747 = vmul.f32 %v746, 1.442695
  %v748 = vpow.pop %v747
  %v749 = vadd.f32 %v748, 1.0
  %v750 = vrcp.pop %v749
  %v751 = vmul.f32 %v749, %v750
  %v752 = vsub.f32 1.0, %v751
  %v753 = vmul.f32 %v750, %v752
  %v754 = vadd.f32 %v750, %v753
  %vm755 = vweird.f32 %v749
  %vm756 = vweird.f32 %v750
  %vm757 = vmor %vm755, %vm756
  %v758 = vsel %vm757, %v750, %v754
  %v759 = vand.u32 2147483647, %v749
  %vm760 = vcmp.eq.f32.partialorder %v759, 8.507059e+37
  %v761 = vand.u32 %v749, 2147483648
  %v762 = vor.u32 1.1754944e-38, %v761
  %v763 = vsel %vm760, %v762, %v758
  %v764 = vmul.f32 1.0, %v763
  %v765 = vld [vmem:[%s181] sm:$0xff]
  %v766 = vld [vmem:[%s181 + $0x8] sm:$0xff]
  %v767 = vld [vmem:[%s181 + $0x10] sm:$0xff]
  %v768 = vld [vmem:[%s181 + $0x18] sm:$0xff]
  %v769 = vld [vmem:[%s186] sm:$0xff]
  %v770 = vld [vmem:[%s186 + $0x8] sm:$0xff]
  %v771 = vld [vmem:[%s186 + $0x10] sm:$0xff]
  %v772 = vld [vmem:[%s186 + $0x18] sm:$0xff]
  %773 = vmatpush.msra.mxu0 0.0
  %774 = vmatpush.msra.mxu0 0.0
  %775 = vmatpush.msra.mxu0 0.0
  %776 = vmatpush.msra.mxu0 0.0
  %777 = vmatpush.msra.mxu0 0.0
  %778 = vmatpush.msra.mxu0 0.0
  %779 = vmatpush.msra.mxu0 0.0
  %780 = vmatpush.msra.mxu0 0.0
  %781 = vmatpush.msra.mxu0 0.0
  %782 = vmatpush.msra.mxu0 0.0
  %783 = vmatpush.msra.mxu0 0.0
  %784 = vmatpush.msra.mxu0 0.0
  %785 = vmatpush.msra.mxu0 %v772
  %786 = vmatpush.msra.mxu0 %v771
  %787 = vmatpush.msra.mxu0 %v770
  %788 = vmatpush.msra.mxu0 %v769
  %789 = vmatmul.f32.gmra.mxu0 %v624
  %v790 = vpop.f32.mrf.mxu0
  %v791 = vadd.f32 0.0, %v790
  %792 = vdwg.mxu0
  %793 = vmatpush.msra.mxu0 0.0
  %794 = vmatpush.msra.mxu0 0.0
  %795 = vmatpush.msra.mxu0 0.0
  %796 = vmatpush.msra.mxu0 0.0
  %797 = vmatpush.msra.mxu0 0.0
  %798 = vmatpush.msra.mxu0 0.0
  %799 = vmatpush.msra.mxu0 0.0
  %800 = vmatpush.msra.mxu0 0.0
  %801 = vmatpush.msra.mxu0 0.0
  %802 = vmatpush.msra.mxu0 0.0
  %803 = vmatpush.msra.mxu0 0.0
  %804 = vmatpush.msra.mxu0 0.0
  %805 = vmatpush.msra.mxu0 %v768
  %806 = vmatpush.msra.mxu0 %v767
  %807 = vmatpush.msra.mxu0 %v766
  %808 = vmatpush.msra.mxu0 %v765
  %809 = vmatmul.f32.gmra.mxu0 %v647
  %v810 = vpop.f32.mrf.mxu0
  %v811 = vadd.f32 %v791, %v810
  %812 = vdwg.mxu0
  %v813 = vld [vmem:[%s231] sm:$0x1]
  %v815 = vperm.slane %v813, 0
  %v817 = vadd.f32 %v811, %v815
  %v818 = vtanh.pop %v817
  %v819 = vld [vmem:[%s238] sm:$0xff]
  %v820 = vld [vmem:[%s238 + $0x8] sm:$0xff]
  %v821 = vld [vmem:[%s238 + $0x10] sm:$0xff]
  %v822 = vld [vmem:[%s238 + $0x18] sm:$0xff]
  %v823 = vld [vmem:[%s243] sm:$0xff]
  %v824 = vld [vmem:[%s243 + $0x8] sm:$0xff]
  %v825 = vld [vmem:[%s243 + $0x10] sm:$0xff]
  %v826 = vld [vmem:[%s243 + $0x18] sm:$0xff]
  %827 = vmatpush.msra.mxu0 0.0
  %828 = vmatpush.msra.mxu0 0.0
  %829 = vmatpush.msra.mxu0 0.0
  %830 = vmatpush.msra.mxu0 0.0
  %831 = vmatpush.msra.mxu0 0.0
  %832 = vmatpush.msra.mxu0 0.0
  %833 = vmatpush.msra.mxu0 0.0
  %834 = vmatpush.msra.mxu0 0.0
  %835 = vmatpush.msra.mxu0 0.0
  %836 = vmatpush.msra.mxu0 0.0
  %837 = vmatpush.msra.mxu0 0.0
  %838 = vmatpush.msra.mxu0 0.0
  %839 = vmatpush.msra.mxu0 %v826
  %840 = vmatpush.msra.mxu0 %v825
  %841 = vmatpush.msra.mxu0 %v824
  %842 = vmatpush.msra.mxu0 %v823
  %843 = vmatmul.f32.gmra.mxu0 %v624
  %v844 = vpop.f32.mrf.mxu0
  %v845 = vadd.f32 0.0, %v844
  %846 = vdwg.mxu0
  %847 = vmatpush.msra.mxu0 0.0
  %848 = vmatpush.msra.mxu0 0.0
  %849 = vmatpush.msra.mxu0 0.0
  %850 = vmatpush.msra.mxu0 0.0
  %851 = vmatpush.msra.mxu0 0.0
  %852 = vmatpush.msra.mxu0 0.0
  %853 = vmatpush.msra.mxu0 0.0
  %854 = vmatpush.msra.mxu0 0.0
  %855 = vmatpush.msra.mxu0 0.0
  %856 = vmatpush.msra.mxu0 0.0
  %857 = vmatpush.msra.mxu0 0.0
  %858 = vmatpush.msra.mxu0 0.0
  %859 = vmatpush.msra.mxu0 %v822
  %860 = vmatpush.msra.mxu0 %v821
  %861 = vmatpush.msra.mxu0 %v820
  %862 = vmatpush.msra.mxu0 %v819
  %863 = vmatmul.f32.gmra.mxu0 %v647
  %v864 = vpop.f32.mrf.mxu0
  %v865 = vadd.f32 %v845, %v864
  %866 = vdwg.mxu0
  %v867 = vld [vmem:[%s288] sm:$0x1]
  %v869 = vperm.slane %v867, 0
  %v871 = vadd.f32 %v865, %v869
  %v872 = vxor.u32 %v871, 2147483648
  %v873 = vmul.f32 %v872, 1.442695
  %v874 = vpow.pop %v873
  %v875 = vadd.f32 %v874, 1.0
  %v876 = vrcp.pop %v875
  %v877 = vmul.f32 %v875, %v876
  %v878 = vsub.f32 1.0, %v877
  %v879 = vmul.f32 %v876, %v878
  %v880 = vadd.f32 %v876, %v879
  %vm881 = vweird.f32 %v875
  %vm882 = vweird.f32 %v876
  %vm883 = vmor %vm881, %vm882
  %v884 = vsel %vm883, %v876, %v880
  %v885 = vand.u32 2147483647, %v875
  %vm886 = vcmp.eq.f32.partialorder %v885, 8.507059e+37
  %v887 = vand.u32 %v875, 2147483648
  %v888 = vor.u32 1.1754944e-38, %v887
  %v889 = vsel %vm886, %v888, %v884
  %v890 = vmul.f32 1.0, %v889
  %v891 = vmul.f32 %v764, %v614
  %v892 = vmul.f32 %v692, %v818
  %v893 = vadd.f32 %v891, %v892
  %v894 = vtanh.pop %v893
  %v895 = vmul.f32 %v890, %v894
  %896 = vst.msk [vmem:[#allocation3] sm:$0x3] %vm318, %v893
  %897 = vst.msk [vmem:[#allocation2] sm:$0x3] %vm318, %v895
  %s898 = scalar_lea.vmem %s4, 4
  %899 = vst.msk [vmem:[%s898] sm:$0x3] %vm318, %v895
  %s900 = scalar_lea.vmem %s0, 6
  %v901 = vld [vmem:[%s900] sm:$0x3]
  %v902 = vld [vmem:[#allocation2] sm:$0x3]
  %v903 = vld [vmem:[#allocation3] sm:$0x3]
  %v904 = vld [vmem:[%s1] sm:$0xff]
  %v905 = vld [vmem:[%s1 + $0x8] sm:$0xff]
  %v906 = vld [vmem:[%s1 + $0x10] sm:$0xff]
  %v907 = vld [vmem:[%s1 + $0x18] sm:$0xff]
  %v908 = vld [vmem:[%s2] sm:$0xff]
  %v909 = vld [vmem:[%s2 + $0x8] sm:$0xff]
  %v910 = vld [vmem:[%s2 + $0x10] sm:$0xff]
  %v911 = vld [vmem:[%s2 + $0x18] sm:$0xff]
  %v913 = vsel %vm35, %v902, 0
  %915 = vmatpush.msra.mxu0 0.0
  %916 = vmatpush.msra.mxu0 0.0
  %917 = vmatpush.msra.mxu0 0.0
  %918 = vmatpush.msra.mxu0 0.0
  %919 = vmatpush.msra.mxu0 0.0
  %920 = vmatpush.msra.mxu0 0.0
  %921 = vmatpush.msra.mxu0 0.0
  %922 = vmatpush.msra.mxu0 0.0
  %923 = vmatpush.msra.mxu0 0.0
  %924 = vmatpush.msra.mxu0 0.0
  %925 = vmatpush.msra.mxu0 0.0
  %926 = vmatpush.msra.mxu0 0.0
  %927 = vmatpush.msra.mxu0 %v911
  %928 = vmatpush.msra.mxu0 %v910
  %929 = vmatpush.msra.mxu0 %v909
  %930 = vmatpush.msra.mxu0 %v908
  %931 = vmatmul.f32.gmra.mxu0 %v913
  %v932 = vpop.f32.mrf.mxu0
  %v933 = vadd.f32 0.0, %v932
  %934 = vdwg.mxu0
  %v936 = vsel %vm35, %v901, 0
  %938 = vmatpush.msra.mxu0 0.0
  %939 = vmatpush.msra.mxu0 0.0
  %940 = vmatpush.msra.mxu0 0.0
  %941 = vmatpush.msra.mxu0 0.0
  %942 = vmatpush.msra.mxu0 0.0
  %943 = vmatpush.msra.mxu0 0.0
  %944 = vmatpush.msra.mxu0 0.0
  %945 = vmatpush.msra.mxu0 0.0
  %946 = vmatpush.msra.mxu0 0.0
  %947 = vmatpush.msra.mxu0 0.0
  %948 = vmatpush.msra.mxu0 0.0
  %949 = vmatpush.msra.mxu0 0.0
  %950 = vmatpush.msra.mxu0 %v907
  %951 = vmatpush.msra.mxu0 %v906
  %952 = vmatpush.msra.mxu0 %v905
  %953 = vmatpush.msra.mxu0 %v904
  %954 = vmatmul.f32.gmra.mxu0 %v936
  %v955 = vpop.f32.mrf.mxu0
  %v956 = vadd.f32 %v933, %v955
  %957 = vdwg.mxu0
  %v958 = vld [vmem:[%s3] sm:$0x1]
  %v960 = vperm.slane %v958, 0
  %v962 = vadd.f32 %v956, %v960
  %v963 = vxor.u32 %v962, 2147483648
  %v964 = vmul.f32 %v963, 1.442695
  %v965 = vpow.pop %v964
  %v966 = vadd.f32 %v965, 1.0
  %v967 = vrcp.pop %v966
  %v968 = vmul.f32 %v966, %v967
  %v969 = vsub.f32 1.0, %v968
  %v970 = vmul.f32 %v967, %v969
  %v971 = vadd.f32 %v967, %v970
  %vm972 = vweird.f32 %v966
  %vm973 = vweird.f32 %v967
  %vm974 = vmor %vm972, %vm973
  %v975 = vsel %vm974, %v967, %v971
  %v976 = vand.u32 2147483647, %v966
  %vm977 = vcmp.eq.f32.partialorder %v976, 8.507059e+37
  %v978 = vand.u32 %v966, 2147483648
  %v979 = vor.u32 1.1754944e-38, %v978
  %v980 = vsel %vm977, %v979, %v975
  %v981 = vmul.f32 1.0, %v980
  %v982 = vld [vmem:[%s106] sm:$0xff]
  %v983 = vld [vmem:[%s106 + $0x8] sm:$0xff]
  %v984 = vld [vmem:[%s106 + $0x10] sm:$0xff]
  %v985 = vld [vmem:[%s106 + $0x18] sm:$0xff]
  %v986 = vld [vmem:[%s111] sm:$0xff]
  %v987 = vld [vmem:[%s111 + $0x8] sm:$0xff]
  %v988 = vld [vmem:[%s111 + $0x10] sm:$0xff]
  %v989 = vld [vmem:[%s111 + $0x18] sm:$0xff]
  %990 = vmatpush.msra.mxu0 0.0
  %991 = vmatpush.msra.mxu0 0.0
  %992 = vmatpush.msra.mxu0 0.0
  %993 = vmatpush.msra.mxu0 0.0
  %994 = vmatpush.msra.mxu0 0.0
  %995 = vmatpush.msra.mxu0 0.0
  %996 = vmatpush.msra.mxu0 0.0
  %997 = vmatpush.msra.mxu0 0.0
  %998 = vmatpush.msra.mxu0 0.0
  %999 = vmatpush.msra.mxu0 0.0
  %1000 = vmatpush.msra.mxu0 0.0
  %1001 = vmatpush.msra.mxu0 0.0
  %1002 = vmatpush.msra.mxu0 %v989
  %1003 = vmatpush.msra.mxu0 %v988
  %1004 = vmatpush.msra.mxu0 %v987
  %1005 = vmatpush.msra.mxu0 %v986
  %1006 = vmatmul.f32.gmra.mxu0 %v913
  %v1007 = vpop.f32.mrf.mxu0
  %v1008 = vadd.f32 0.0, %v1007
  %1009 = vdwg.mxu0
  %1010 = vmatpush.msra.mxu0 0.0
  %1011 = vmatpush.msra.mxu0 0.0
  %1012 = vmatpush.msra.mxu0 0.0
  %1013 = vmatpush.msra.mxu0 0.0
  %1014 = vmatpush.msra.mxu0 0.0
  %1015 = vmatpush.msra.mxu0 0.0
  %1016 = vmatpush.msra.mxu0 0.0
  %1017 = vmatpush.msra.mxu0 0.0
  %1018 = vmatpush.msra.mxu0 0.0
  %1019 = vmatpush.msra.mxu0 0.0
  %1020 = vmatpush.msra.mxu0 0.0
  %1021 = vmatpush.msra.mxu0 0.0
  %1022 = vmatpush.msra.mxu0 %v985
  %1023 = vmatpush.msra.mxu0 %v984
  %1024 = vmatpush.msra.mxu0 %v983
  %1025 = vmatpush.msra.mxu0 %v982
  %1026 = vmatmul.f32.gmra.mxu0 %v936
  %v1027 = vpop.f32.mrf.mxu0
  %v1028 = vadd.f32 %v1008, %v1027
  %1029 = vdwg.mxu0
  %v1030 = vld [vmem:[%s156] sm:$0x1]
  %v1032 = vperm.slane %v1030, 0
  %v1034 = vadd.f32 %v1028, %v1032
  %v1035 = vxor.u32 %v1034, 2147483648
  %v1036 = vmul.f32 %v1035, 1.442695
  %v1037 = vpow.pop %v1036
  %v1038 = vadd.f32 %v1037, 1.0
  %v1039 = vrcp.pop %v1038
  %v1040 = vmul.f32 %v1038, %v1039
  %v1041 = vsub.f32 1.0, %v1040
  %v1042 = vmul.f32 %v1039, %v1041
  %v1043 = vadd.f32 %v1039, %v1042
  %vm1044 = vweird.f32 %v1038
  %vm1045 = vweird.f32 %v1039
  %vm1046 = vmor %vm1044, %vm1045
  %v1047 = vsel %vm1046, %v1039, %v1043
  %v1048 = vand.u32 2147483647, %v1038
  %vm1049 = vcmp.eq.f32.partialorder %v1048, 8.507059e+37
  %v1050 = vand.u32 %v1038, 2147483648
  %v1051 = vor.u32 1.1754944e-38, %v1050
  %v1052 = vsel %vm1049, %v1051, %v1047
  %v1053 = vmul.f32 1.0, %v1052
  %v1054 = vld [vmem:[%s181] sm:$0xff]
  %v1055 = vld [vmem:[%s181 + $0x8] sm:$0xff]
  %v1056 = vld [vmem:[%s181 + $0x10] sm:$0xff]
  %v1057 = vld [vmem:[%s181 + $0x18] sm:$0xff]
  %v1058 = vld [vmem:[%s186] sm:$0xff]
  %v1059 = vld [vmem:[%s186 + $0x8] sm:$0xff]
  %v1060 = vld [vmem:[%s186 + $0x10] sm:$0xff]
  %v1061 = vld [vmem:[%s186 + $0x18] sm:$0xff]
  %1062 = vmatpush.msra.mxu0 0.0
  %1063 = vmatpush.msra.mxu0 0.0
  %1064 = vmatpush.msra.mxu0 0.0
  %1065 = vmatpush.msra.mxu0 0.0
  %1066 = vmatpush.msra.mxu0 0.0
  %1067 = vmatpush.msra.mxu0 0.0
  %1068 = vmatpush.msra.mxu0 0.0
  %1069 = vmatpush.msra.mxu0 0.0
  %1070 = vmatpush.msra.mxu0 0.0
  %1071 = vmatpush.msra.mxu0 0.0
  %1072 = vmatpush.msra.mxu0 0.0
  %1073 = vmatpush.msra.mxu0 0.0
  %1074 = vmatpush.msra.mxu0 %v1061
  %1075 = vmatpush.msra.mxu0 %v1060
  %1076 = vmatpush.msra.mxu0 %v1059
  %1077 = vmatpush.msra.mxu0 %v1058
  %1078 = vmatmul.f32.gmra.mxu0 %v913
  %v1079 = vpop.f32.mrf.mxu0
  %v1080 = vadd.f32 0.0, %v1079
  %1081 = vdwg.mxu0
  %1082 = vmatpush.msra.mxu0 0.0
  %1083 = vmatpush.msra.mxu0 0.0
  %1084 = vmatpush.msra.mxu0 0.0
  %1085 = vmatpush.msra.mxu0 0.0
  %1086 = vmatpush.msra.mxu0 0.0
  %1087 = vmatpush.msra.mxu0 0.0
  %1088 = vmatpush.msra.mxu0 0.0
  %1089 = vmatpush.msra.mxu0 0.0
  %1090 = vmatpush.msra.mxu0 0.0
  %1091 = vmatpush.msra.mxu0 0.0
  %1092 = vmatpush.msra.mxu0 0.0
  %1093 = vmatpush.msra.mxu0 0.0
  %1094 = vmatpush.msra.mxu0 %v1057
  %1095 = vmatpush.msra.mxu0 %v1056
  %1096 = vmatpush.msra.mxu0 %v1055
  %1097 = vmatpush.msra.mxu0 %v1054
  %1098 = vmatmul.f32.gmra.mxu0 %v936
  %v1099 = vpop.f32.mrf.mxu0
  %v1100 = vadd.f32 %v1080, %v1099
  %1101 = vdwg.mxu0
  %v1102 = vld [vmem:[%s231] sm:$0x1]
  %v1104 = vperm.slane %v1102, 0
  %v1106 = vadd.f32 %v1100, %v1104
  %v1107 = vtanh.pop %v1106
  %v1108 = vld [vmem:[%s238] sm:$0xff]
  %v1109 = vld [vmem:[%s238 + $0x8] sm:$0xff]
  %v1110 = vld [vmem:[%s238 + $0x10] sm:$0xff]
  %v1111 = vld [vmem:[%s238 + $0x18] sm:$0xff]
  %v1112 = vld [vmem:[%s243] sm:$0xff]
  %v1113 = vld [vmem:[%s243 + $0x8] sm:$0xff]
  %v1114 = vld [vmem:[%s243 + $0x10] sm:$0xff]
  %v1115 = vld [vmem:[%s243 + $0x18] sm:$0xff]
  %1116 = vmatpush.msra.mxu0 0.0
  %1117 = vmatpush.msra.mxu0 0.0
  %1118 = vmatpush.msra.mxu0 0.0
  %1119 = vmatpush.msra.mxu0 0.0
  %1120 = vmatpush.msra.mxu0 0.0
  %1121 = vmatpush.msra.mxu0 0.0
  %1122 = vmatpush.msra.mxu0 0.0
  %1123 = vmatpush.msra.mxu0 0.0
  %1124 = vmatpush.msra.mxu0 0.0
  %1125 = vmatpush.msra.mxu0 0.0
  %1126 = vmatpush.msra.mxu0 0.0
  %1127 = vmatpush.msra.mxu0 0.0
  %1128 = vmatpush.msra.mxu0 %v1115
  %1129 = vmatpush.msra.mxu0 %v1114
  %1130 = vmatpush.msra.mxu0 %v1113
  %1131 = vmatpush.msra.mxu0 %v1112
  %1132 = vmatmul.f32.gmra.mxu0 %v913
  %v1133 = vpop.f32.mrf.mxu0
  %v1134 = vadd.f32 0.0, %v1133
  %1135 = vdwg.mxu0
  %1136 = vmatpush.msra.mxu0 0.0
  %1137 = vmatpush.msra.mxu0 0.0
  %1138 = vmatpush.msra.mxu0 0.0
  %1139 = vmatpush.msra.mxu0 0.0
  %1140 = vmatpush.msra.mxu0 0.0
  %1141 = vmatpush.msra.mxu0 0.0
  %1142 = vmatpush.msra.mxu0 0.0
  %1143 = vmatpush.msra.mxu0 0.0
  %1144 = vmatpush.msra.mxu0 0.0
  %1145 = vmatpush.msra.mxu0 0.0
  %1146 = vmatpush.msra.mxu0 0.0
  %1147 = vmatpush.msra.mxu0 0.0
  %1148 = vmatpush.msra.mxu0 %v1111
  %1149 = vmatpush.msra.mxu0 %v1110
  %1150 = vmatpush.msra.mxu0 %v1109
  %1151 = vmatpush.msra.mxu0 %v1108
  %1152 = vmatmul.f32.gmra.mxu0 %v936
  %v1153 = vpop.f32.mrf.mxu0
  %v1154 = vadd.f32 %v1134, %v1153
  %1155 = vdwg.mxu0
  %v1156 = vld [vmem:[%s288] sm:$0x1]
  %v1158 = vperm.slane %v1156, 0
  %v1160 = vadd.f32 %v1154, %v1158
  %v1161 = vxor.u32 %v1160, 2147483648
  %v1162 = vmul.f32 %v1161, 1.442695
  %v1163 = vpow.pop %v1162
  %v1164 = vadd.f32 %v1163, 1.0
  %v1165 = vrcp.pop %v1164
  %v1166 = vmul.f32 %v1164, %v1165
  %v1167 = vsub.f32 1.0, %v1166
  %v1168 = vmul.f32 %v1165, %v1167
  %v1169 = vadd.f32 %v1165, %v1168
  %vm1170 = vweird.f32 %v1164
  %vm1171 = vweird.f32 %v1165
  %vm1172 = vmor %vm1170, %vm1171
  %v1173 = vsel %vm1172, %v1165, %v1169
  %v1174 = vand.u32 2147483647, %v1164
  %vm1175 = vcmp.eq.f32.partialorder %v1174, 8.507059e+37
  %v1176 = vand.u32 %v1164, 2147483648
  %v1177 = vor.u32 1.1754944e-38, %v1176
  %v1178 = vsel %vm1175, %v1177, %v1173
  %v1179 = vmul.f32 1.0, %v1178
  %v1180 = vmul.f32 %v1053, %v903
  %v1181 = vmul.f32 %v981, %v1107
  %v1182 = vadd.f32 %v1180, %v1181
  %v1183 = vtanh.pop %v1182
  %v1184 = vmul.f32 %v1179, %v1183
  %1185 = vst.msk [vmem:[#allocation3] sm:$0x3] %vm318, %v1182
  %1186 = vst.msk [vmem:[#allocation2] sm:$0x3] %vm318, %v1184
  %s1187 = scalar_lea.vmem %s4, 6
  %1188 = vst.msk [vmem:[%s1187] sm:$0x3] %vm318, %v1184
  %s1189 = scalar_lea.vmem %s0, 8
  %v1190 = vld [vmem:[%s1189] sm:$0x3]
  %v1191 = vld [vmem:[#allocation2] sm:$0x3]
  %v1192 = vld [vmem:[#allocation3] sm:$0x3]
  %v1193 = vld [vmem:[%s1] sm:$0xff]
  %v1194 = vld [vmem:[%s1 + $0x8] sm:$0xff]
  %v1195 = vld [vmem:[%s1 + $0x10] sm:$0xff]
  %v1196 = vld [vmem:[%s1 + $0x18] sm:$0xff]
  %v1197 = vld [vmem:[%s2] sm:$0xff]
  %v1198 = vld [vmem:[%s2 + $0x8] sm:$0xff]
  %v1199 = vld [vmem:[%s2 + $0x10] sm:$0xff]
  %v1200 = vld [vmem:[%s2 + $0x18] sm:$0xff]
  %v1202 = vsel %vm35, %v1191, 0
  %1204 = vmatpush.msra.mxu0 0.0
  %1205 = vmatpush.msra.mxu0 0.0
  %1206 = vmatpush.msra.mxu0 0.0
  %1207 = vmatpush.msra.mxu0 0.0
  %1208 = vmatpush.msra.mxu0 0.0
  %1209 = vmatpush.msra.mxu0 0.0
  %1210 = vmatpush.msra.mxu0 0.0
  %1211 = vmatpush.msra.mxu0 0.0
  %1212 = vmatpush.msra.mxu0 0.0
  %1213 = vmatpush.msra.mxu0 0.0
  %1214 = vmatpush.msra.mxu0 0.0
  %1215 = vmatpush.msra.mxu0 0.0
  %1216 = vmatpush.msra.mxu0 %v1200
  %1217 = vmatpush.msra.mxu0 %v1199
  %1218 = vmatpush.msra.mxu0 %v1198
  %1219 = vmatpush.msra.mxu0 %v1197
  %1220 = vmatmul.f32.gmra.mxu0 %v1202
  %v1221 = vpop.f32.mrf.mxu0
  %v1222 = vadd.f32 0.0, %v1221
  %1223 = vdwg.mxu0
  %v1225 = vsel %vm35, %v1190, 0
  %1227 = vmatpush.msra.mxu0 0.0
  %1228 = vmatpush.msra.mxu0 0.0
  %1229 = vmatpush.msra.mxu0 0.0
  %1230 = vmatpush.msra.mxu0 0.0
  %1231 = vmatpush.msra.mxu0 0.0
  %1232 = vmatpush.msra.mxu0 0.0
  %1233 = vmatpush.msra.mxu0 0.0
  %1234 = vmatpush.msra.mxu0 0.0
  %1235 = vmatpush.msra.mxu0 0.0
  %1236 = vmatpush.msra.mxu0 0.0
  %1237 = vmatpush.msra.mxu0 0.0
  %1238 = vmatpush.msra.mxu0 0.0
  %1239 = vmatpush.msra.mxu0 %v1196
  %1240 = vmatpush.msra.mxu0 %v1195
  %1241 = vmatpush.msra.mxu0 %v1194
  %1242 = vmatpush.msra.mxu0 %v1193
  %1243 = vmatmul.f32.gmra.mxu0 %v1225
  %v1244 = vpop.f32.mrf.mxu0
  %v1245 = vadd.f32 %v1222, %v1244
  %1246 = vdwg.mxu0
  %v1247 = vld [vmem:[%s3] sm:$0x1]
  %v1249 = vperm.slane %v1247, 0
  %v1251 = vadd.f32 %v1245, %v1249
  %v1252 = vxor.u32 %v1251, 2147483648
  %v1253 = vmul.f32 %v1252, 1.442695
  %v1254 = vpow.pop %v1253
  %v1255 = vadd.f32 %v1254, 1.0
  %v1256 = vrcp.pop %v1255
  %v1257 = vmul.f32 %v1255, %v1256
  %v1258 = vsub.f32 1.0, %v1257
  %v1259 = vmul.f32 %v1256, %v1258
  %v1260 = vadd.f32 %v1256, %v1259
  %vm1261 = vweird.f32 %v1255
  %vm1262 = vweird.f32 %v1256
  %vm1263 = vmor %vm1261, %vm1262
  %v1264 = vsel %vm1263, %v1256, %v1260
  %v1265 = vand.u32 2147483647, %v1255
  %vm1266 = vcmp.eq.f32.partialorder %v1265, 8.507059e+37
  %v1267 = vand.u32 %v1255, 2147483648
  %v1268 = vor.u32 1.1754944e-38, %v1267
  %v1269 = vsel %vm1266, %v1268, %v1264
  %v1270 = vmul.f32 1.0, %v1269
  %v1271 = vld [vmem:[%s106] sm:$0xff]
  %v1272 = vld [vmem:[%s106 + $0x8] sm:$0xff]
  %v1273 = vld [vmem:[%s106 + $0x10] sm:$0xff]
  %v1274 = vld [vmem:[%s106 + $0x18] sm:$0xff]
  %v1275 = vld [vmem:[%s111] sm:$0xff]
  %v1276 = vld [vmem:[%s111 + $0x8] sm:$0xff]
  %v1277 = vld [vmem:[%s111 + $0x10] sm:$0xff]
  %v1278 = vld [vmem:[%s111 + $0x18] sm:$0xff]
  %1279 = vmatpush.msra.mxu0 0.0
  %1280 = vmatpush.msra.mxu0 0.0
  %1281 = vmatpush.msra.mxu0 0.0
  %1282 = vmatpush.msra.mxu0 0.0
  %1283 = vmatpush.msra.mxu0 0.0
  %1284 = vmatpush.msra.mxu0 0.0
  %1285 = vmatpush.msra.mxu0 0.0
  %1286 = vmatpush.msra.mxu0 0.0
  %1287 = vmatpush.msra.mxu0 0.0
  %1288 = vmatpush.msra.mxu0 0.0
  %1289 = vmatpush.msra.mxu0 0.0
  %1290 = vmatpush.msra.mxu0 0.0
  %1291 = vmatpush.msra.mxu0 %v1278
  %1292 = vmatpush.msra.mxu0 %v1277
  %1293 = vmatpush.msra.mxu0 %v1276
  %1294 = vmatpush.msra.mxu0 %v1275
  %1295 = vmatmul.f32.gmra.mxu0 %v1202
  %v1296 = vpop.f32.mrf.mxu0
  %v1297 = vadd.f32 0.0, %v1296
  %1298 = vdwg.mxu0
  %1299 = vmatpush.msra.mxu0 0.0
  %1300 = vmatpush.msra.mxu0 0.0
  %1301 = vmatpush.msra.mxu0 0.0
  %1302 = vmatpush.msra.mxu0 0.0
  %1303 = vmatpush.msra.mxu0 0.0
  %1304 = vmatpush.msra.mxu0 0.0
  %1305 = vmatpush.msra.mxu0 0.0
  %1306 = vmatpush.msra.mxu0 0.0
  %1307 = vmatpush.msra.mxu0 0.0
  %1308 = vmatpush.msra.mxu0 0.0
  %1309 = vmatpush.msra.mxu0 0.0
  %1310 = vmatpush.msra.mxu0 0.0
  %1311 = vmatpush.msra.mxu0 %v1274
  %1312 = vmatpush.msra.mxu0 %v1273
  %1313 = vmatpush.msra.mxu0 %v1272
  %1314 = vmatpush.msra.mxu0 %v1271
  %1315 = vmatmul.f32.gmra.mxu0 %v1225
  %v1316 = vpop.f32.mrf.mxu0
  %v1317 = vadd.f32 %v1297, %v1316
  %1318 = vdwg.mxu0
  %v1319 = vld [vmem:[%s156] sm:$0x1]
  %v1321 = vperm.slane %v1319, 0
  %v1323 = vadd.f32 %v1317, %v1321
  %v1324 = vxor.u32 %v1323, 2147483648
  %v1325 = vmul.f32 %v1324, 1.442695
  %v1326 = vpow.pop %v1325
  %v1327 = vadd.f32 %v1326, 1.0
  %v1328 = vrcp.pop %v1327
  %v1329 = vmul.f32 %v1327, %v1328
  %v1330 = vsub.f32 1.0, %v1329
  %v1331 = vmul.f32 %v1328, %v1330
  %v1332 = vadd.f32 %v1328, %v1331
  %vm1333 = vweird.f32 %v1327
  %vm1334 = vweird.f32 %v1328
  %vm1335 = vmor %vm1333, %vm1334
  %v1336 = vsel %vm1335, %v1328, %v1332
  %v1337 = vand.u32 2147483647, %v1327
  %vm1338 = vcmp.eq.f32.partialorder %v1337, 8.507059e+37
  %v1339 = vand.u32 %v1327, 2147483648
  %v1340 = vor.u32 1.1754944e-38, %v1339
  %v1341 = vsel %vm1338, %v1340, %v1336
  %v1342 = vmul.f32 1.0, %v1341
  %v1343 = vld [vmem:[%s181] sm:$0xff]
  %v1344 = vld [vmem:[%s181 + $0x8] sm:$0xff]
  %v1345 = vld [vmem:[%s181 + $0x10] sm:$0xff]
  %v1346 = vld [vmem:[%s181 + $0x18] sm:$0xff]
  %v1347 = vld [vmem:[%s186] sm:$0xff]
  %v1348 = vld [vmem:[%s186 + $0x8] sm:$0xff]
  %v1349 = vld [vmem:[%s186 + $0x10] sm:$0xff]
  %v1350 = vld [vmem:[%s186 + $0x18] sm:$0xff]
  %1351 = vmatpush.msra.mxu0 0.0
  %1352 = vmatpush.msra.mxu0 0.0
  %1353 = vmatpush.msra.mxu0 0.0
  %1354 = vmatpush.msra.mxu0 0.0
  %1355 = vmatpush.msra.mxu0 0.0
  %1356 = vmatpush.msra.mxu0 0.0
  %1357 = vmatpush.msra.mxu0 0.0
  %1358 = vmatpush.msra.mxu0 0.0
  %1359 = vmatpush.msra.mxu0 0.0
  %1360 = vmatpush.msra.mxu0 0.0
  %1361 = vmatpush.msra.mxu0 0.0
  %1362 = vmatpush.msra.mxu0 0.0
  %1363 = vmatpush.msra.mxu0 %v1350
  %1364 = vmatpush.msra.mxu0 %v1349
  %1365 = vmatpush.msra.mxu0 %v1348
  %1366 = vmatpush.msra.mxu0 %v1347
  %1367 = vmatmul.f32.gmra.mxu0 %v1202
  %v1368 = vpop.f32.mrf.mxu0
  %v1369 = vadd.f32 0.0, %v1368
  %1370 = vdwg.mxu0
  %1371 = vmatpush.msra.mxu0 0.0
  %1372 = vmatpush.msra.mxu0 0.0
  %1373 = vmatpush.msra.mxu0 0.0
  %1374 = vmatpush.msra.mxu0 0.0
  %1375 = vmatpush.msra.mxu0 0.0
  %1376 = vmatpush.msra.mxu0 0.0
  %1377 = vmatpush.msra.mxu0 0.0
  %1378 = vmatpush.msra.mxu0 0.0
  %1379 = vmatpush.msra.mxu0 0.0
  %1380 = vmatpush.msra.mxu0 0.0
  %1381 = vmatpush.msra.mxu0 0.0
  %1382 = vmatpush.msra.mxu0 0.0
  %1383 = vmatpush.msra.mxu0 %v1346
  %1384 = vmatpush.msra.mxu0 %v1345
  %1385 = vmatpush.msra.mxu0 %v1344
  %1386 = vmatpush.msra.mxu0 %v1343
  %1387 = vmatmul.f32.gmra.mxu0 %v1225
  %v1388 = vpop.f32.mrf.mxu0
  %v1389 = vadd.f32 %v1369, %v1388
  %1390 = vdwg.mxu0
  %v1391 = vld [vmem:[%s231] sm:$0x1]
  %v1393 = vperm.slane %v1391, 0
  %v1395 = vadd.f32 %v1389, %v1393
  %v1396 = vtanh.pop %v1395
  %v1397 = vld [vmem:[%s238] sm:$0xff]
  %v1398 = vld [vmem:[%s238 + $0x8] sm:$0xff]
  %v1399 = vld [vmem:[%s238 + $0x10] sm:$0xff]
  %v1400 = vld [vmem:[%s238 + $0x18] sm:$0xff]
  %v1401 = vld [vmem:[%s243] sm:$0xff]
  %v1402 = vld [vmem:[%s243 + $0x8] sm:$0xff]
  %v1403 = vld [vmem:[%s243 + $0x10] sm:$0xff]
  %v1404 = vld [vmem:[%s243 + $0x18] sm:$0xff]
  %1405 = vmatpush.msra.mxu0 0.0
  %1406 = vmatpush.msra.mxu0 0.0
  %1407 = vmatpush.msra.mxu0 0.0
  %1408 = vmatpush.msra.mxu0 0.0
  %1409 = vmatpush.msra.mxu0 0.0
  %1410 = vmatpush.msra.mxu0 0.0
  %1411 = vmatpush.msra.mxu0 0.0
  %1412 = vmatpush.msra.mxu0 0.0
  %1413 = vmatpush.msra.mxu0 0.0
  %1414 = vmatpush.msra.mxu0 0.0
  %1415 = vmatpush.msra.mxu0 0.0
  %1416 = vmatpush.msra.mxu0 0.0
  %1417 = vmatpush.msra.mxu0 %v1404
  %1418 = vmatpush.msra.mxu0 %v1403
  %1419 = vmatpush.msra.mxu0 %v1402
  %1420 = vmatpush.msra.mxu0 %v1401
  %1421 = vmatmul.f32.gmra.mxu0 %v1202
  %v1422 = vpop.f32.mrf.mxu0
  %v1423 = vadd.f32 0.0, %v1422
  %1424 = vdwg.mxu0
  %1425 = vmatpush.msra.mxu0 0.0
  %1426 = vmatpush.msra.mxu0 0.0
  %1427 = vmatpush.msra.mxu0 0.0
  %1428 = vmatpush.msra.mxu0 0.0
  %1429 = vmatpush.msra.mxu0 0.0
  %1430 = vmatpush.msra.mxu0 0.0
  %1431 = vmatpush.msra.mxu0 0.0
  %1432 = vmatpush.msra.mxu0 0.0
  %1433 = vmatpush.msra.mxu0 0.0
  %1434 = vmatpush.msra.mxu0 0.0
  %1435 = vmatpush.msra.mxu0 0.0
  %1436 = vmatpush.msra.mxu0 0.0
  %1437 = vmatpush.msra.mxu0 %v1400
  %1438 = vmatpush.msra.mxu0 %v1399
  %1439 = vmatpush.msra.mxu0 %v1398
  %1440 = vmatpush.msra.mxu0 %v1397
  %1441 = vmatmul.f32.gmra.mxu0 %v1225
  %v1442 = vpop.f32.mrf.mxu0
  %v1443 = vadd.f32 %v1423, %v1442
  %1444 = vdwg.mxu0
  %v1445 = vld [vmem:[%s288] sm:$0x1]
  %v1447 = vperm.slane %v1445, 0
  %v1449 = vadd.f32 %v1443, %v1447
  %v1450 = vxor.u32 %v1449, 2147483648
  %v1451 = vmul.f32 %v1450, 1.442695
  %v1452 = vpow.pop %v1451
  %v1453 = vadd.f32 %v1452, 1.0
  %v1454 = vrcp.pop %v1453
  %v1455 = vmul.f32 %v1453, %v1454
  %v1456 = vsub.f32 1.0, %v1455
  %v1457 = vmul.f32 %v1454, %v1456
  %v1458 = vadd.f32 %v1454, %v1457
  %vm1459 = vweird.f32 %v1453
  %vm1460 = vweird.f32 %v1454
  %vm1461 = vmor %vm1459, %vm1460
  %v1462 = vsel %vm1461, %v1454, %v1458
  %v1463 = vand.u32 2147483647, %v1453
  %vm1464 = vcmp.eq.f32.partialorder %v1463, 8.507059e+37
  %v1465 = vand.u32 %v1453, 2147483648
  %v1466 = vor.u32 1.1754944e-38, %v1465
  %v1467 = vsel %vm1464, %v1466, %v1462
  %v1468 = vmul.f32 1.0, %v1467
  %v1469 = vmul.f32 %v1342, %v1192
  %v1470 = vmul.f32 %v1270, %v1396
  %v1471 = vadd.f32 %v1469, %v1470
  %v1472 = vtanh.pop %v1471
  %v1473 = vmul.f32 %v1468, %v1472
  %1474 = vst.msk [vmem:[#allocation3] sm:$0x3] %vm318, %v1471
  %1475 = vst.msk [vmem:[#allocation2] sm:$0x3] %vm318, %v1473
  %s1476 = scalar_lea.vmem %s4, 8
  %1477 = vst.msk [vmem:[%s1476] sm:$0x3] %vm318, %v1473
  %s1478 = scalar_lea.vmem %s0, 10
  %v1479 = vld [vmem:[%s1478] sm:$0x3]
  %v1480 = vld [vmem:[#allocation2] sm:$0x3]
  %v1481 = vld [vmem:[#allocation3] sm:$0x3]
  %v1482 = vld [vmem:[%s1] sm:$0xff]
  %v1483 = vld [vmem:[%s1 + $0x8] sm:$0xff]
  %v1484 = vld [vmem:[%s1 + $0x10] sm:$0xff]
  %v1485 = vld [vmem:[%s1 + $0x18] sm:$0xff]
  %v1486 = vld [vmem:[%s2] sm:$0xff]
  %v1487 = vld [vmem:[%s2 + $0x8] sm:$0xff]
  %v1488 = vld [vmem:[%s2 + $0x10] sm:$0xff]
  %v1489 = vld [vmem:[%s2 + $0x18] sm:$0xff]
  %v1491 = vsel %vm35, %v1480, 0
  %1493 = vmatpush.msra.mxu0 0.0
  %1494 = vmatpush.msra.mxu0 0.0
  %1495 = vmatpush.msra.mxu0 0.0
  %1496 = vmatpush.msra.mxu0 0.0
  %1497 = vmatpush.msra.mxu0 0.0
  %1498 = vmatpush.msra.mxu0 0.0
  %1499 = vmatpush.msra.mxu0 0.0
  %1500 = vmatpush.msra.mxu0 0.0
  %1501 = vmatpush.msra.mxu0 0.0
  %1502 = vmatpush.msra.mxu0 0.0
  %1503 = vmatpush.msra.mxu0 0.0
  %1504 = vmatpush.msra.mxu0 0.0
  %1505 = vmatpush.msra.mxu0 %v1489
  %1506 = vmatpush.msra.mxu0 %v1488
  %1507 = vmatpush.msra.mxu0 %v1487
  %1508 = vmatpush.msra.mxu0 %v1486
  %1509 = vmatmul.f32.gmra.mxu0 %v1491
  %v1510 = vpop.f32.mrf.mxu0
  %v1511 = vadd.f32 0.0, %v1510
  %1512 = vdwg.mxu0
  %v1514 = vsel %vm35, %v1479, 0
  %1516 = vmatpush.msra.mxu0 0.0
  %1517 = vmatpush.msra.mxu0 0.0
  %1518 = vmatpush.msra.mxu0 0.0
  %1519 = vmatpush.msra.mxu0 0.0
  %1520 = vmatpush.msra.mxu0 0.0
  %1521 = vmatpush.msra.mxu0 0.0
  %1522 = vmatpush.msra.mxu0 0.0
  %1523 = vmatpush.msra.mxu0 0.0
  %1524 = vmatpush.msra.mxu0 0.0
  %1525 = vmatpush.msra.mxu0 0.0
  %1526 = vmatpush.msra.mxu0 0.0
  %1527 = vmatpush.msra.mxu0 0.0
  %1528 = vmatpush.msra.mxu0 %v1485
  %1529 = vmatpush.msra.mxu0 %v1484
  %1530 = vmatpush.msra.mxu0 %v1483
  %1531 = vmatpush.msra.mxu0 %v1482
  %1532 = vmatmul.f32.gmra.mxu0 %v1514
  %v1533 = vpop.f32.mrf.mxu0
  %v1534 = vadd.f32 %v1511, %v1533
  %1535 = vdwg.mxu0
  %v1536 = vld [vmem:[%s3] sm:$0x1]
  %v1538 = vperm.slane %v1536, 0
  %v1540 = vadd.f32 %v1534, %v1538
  %v1541 = vxor.u32 %v1540, 2147483648
  %v1542 = vmul.f32 %v1541, 1.442695
  %v1543 = vpow.pop %v1542
  %v1544 = vadd.f32 %v1543, 1.0
  %v1545 = vrcp.pop %v1544
  %v1546 = vmul.f32 %v1544, %v1545
  %v1547 = vsub.f32 1.0, %v1546
  %v1548 = vmul.f32 %v1545, %v1547
  %v1549 = vadd.f32 %v1545, %v1548
  %vm1550 = vweird.f32 %v1544
  %vm1551 = vweird.f32 %v1545
  %vm1552 = vmor %vm1550, %vm1551
  %v1553 = vsel %vm1552, %v1545, %v1549
  %v1554 = vand.u32 2147483647, %v1544
  %vm1555 = vcmp.eq.f32.partialorder %v1554, 8.507059e+37
  %v1556 = vand.u32 %v1544, 2147483648
  %v1557 = vor.u32 1.1754944e-38, %v1556
  %v1558 = vsel %vm1555, %v1557, %v1553
  %v1559 = vmul.f32 1.0, %v1558
  %v1560 = vld [vmem:[%s106] sm:$0xff]
  %v1561 = vld [vmem:[%s106 + $0x8] sm:$0xff]
  %v1562 = vld [vmem:[%s106 + $0x10] sm:$0xff]
  %v1563 = vld [vmem:[%s106 + $0x18] sm:$0xff]
  %v1564 = vld [vmem:[%s111] sm:$0xff]
  %v1565 = vld [vmem:[%s111 + $0x8] sm:$0xff]
  %v1566 = vld [vmem:[%s111 + $0x10] sm:$0xff]
  %v1567 = vld [vmem:[%s111 + $0x18] sm:$0xff]
  %1568 = vmatpush.msra.mxu0 0.0
  %1569 = vmatpush.msra.mxu0 0.0
  %1570 = vmatpush.msra.mxu0 0.0
  %1571 = vmatpush.msra.mxu0 0.0
  %1572 = vmatpush.msra.mxu0 0.0
  %1573 = vmatpush.msra.mxu0 0.0
  %1574 = vmatpush.msra.mxu0 0.0
  %1575 = vmatpush.msra.mxu0 0.0
  %1576 = vmatpush.msra.mxu0 0.0
  %1577 = vmatpush.msra.mxu0 0.0
  %1578 = vmatpush.msra.mxu0 0.0
  %1579 = vmatpush.msra.mxu0 0.0
  %1580 = vmatpush.msra.mxu0 %v1567
  %1581 = vmatpush.msra.mxu0 %v1566
  %1582 = vmatpush.msra.mxu0 %v1565
  %1583 = vmatpush.msra.mxu0 %v1564
  %1584 = vmatmul.f32.gmra.mxu0 %v1491
  %v1585 = vpop.f32.mrf.mxu0
  %v1586 = vadd.f32 0.0, %v1585
  %1587 = vdwg.mxu0
  %1588 = vmatpush.msra.mxu0 0.0
  %1589 = vmatpush.msra.mxu0 0.0
  %1590 = vmatpush.msra.mxu0 0.0
  %1591 = vmatpush.msra.mxu0 0.0
  %1592 = vmatpush.msra.mxu0 0.0
  %1593 = vmatpush.msra.mxu0 0.0
  %1594 = vmatpush.msra.mxu0 0.0
  %1595 = vmatpush.msra.mxu0 0.0
  %1596 = vmatpush.msra.mxu0 0.0
  %1597 = vmatpush.msra.mxu0 0.0
  %1598 = vmatpush.msra.mxu0 0.0
  %1599 = vmatpush.msra.mxu0 0.0
  %1600 = vmatpush.msra.mxu0 %v1563
  %1601 = vmatpush.msra.mxu0 %v1562
  %1602 = vmatpush.msra.mxu0 %v1561
  %1603 = vmatpush.msra.mxu0 %v1560
  %1604 = vmatmul.f32.gmra.mxu0 %v1514
  %v1605 = vpop.f32.mrf.mxu0
  %v1606 = vadd.f32 %v1586, %v1605
  %1607 = vdwg.mxu0
  %v1608 = vld [vmem:[%s156] sm:$0x1]
  %v1610 = vperm.slane %v1608, 0
  %v1612 = vadd.f32 %v1606, %v1610
  %v1613 = vxor.u32 %v1612, 2147483648
  %v1614 = vmul.f32 %v1613, 1.442695
  %v1615 = vpow.pop %v1614
  %v1616 = vadd.f32 %v1615, 1.0
  %v1617 = vrcp.pop %v1616
  %v1618 = vmul.f32 %v1616, %v1617
  %v1619 = vsub.f32 1.0, %v1618
  %v1620 = vmul.f32 %v1617, %v1619
  %v1621 = vadd.f32 %v1617, %v1620
  %vm1622 = vweird.f32 %v1616
  %vm1623 = vweird.f32 %v1617
  %vm1624 = vmor %vm1622, %vm1623
  %v1625 = vsel %vm1624, %v1617, %v1621
  %v1626 = vand.u32 2147483647, %v1616
  %vm1627 = vcmp.eq.f32.partialorder %v1626, 8.507059e+37
  %v1628 = vand.u32 %v1616, 2147483648
  %v1629 = vor.u32 1.1754944e-38, %v1628
  %v1630 = vsel %vm1627, %v1629, %v1625
  %v1631 = vmul.f32 1.0, %v1630
  %v1632 = vld [vmem:[%s181] sm:$0xff]
  %v1633 = vld [vmem:[%s181 + $0x8] sm:$0xff]
  %v1634 = vld [vmem:[%s181 + $0x10] sm:$0xff]
  %v1635 = vld [vmem:[%s181 + $0x18] sm:$0xff]
  %v1636 = vld [vmem:[%s186] sm:$0xff]
  %v1637 = vld [vmem:[%s186 + $0x8] sm:$0xff]
  %v1638 = vld [vmem:[%s186 + $0x10] sm:$0xff]
  %v1639 = vld [vmem:[%s186 + $0x18] sm:$0xff]
  %1640 = vmatpush.msra.mxu0 0.0
  %1641 = vmatpush.msra.mxu0 0.0
  %1642 = vmatpush.msra.mxu0 0.0
  %1643 = vmatpush.msra.mxu0 0.0
  %1644 = vmatpush.msra.mxu0 0.0
  %1645 = vmatpush.msra.mxu0 0.0
  %1646 = vmatpush.msra.mxu0 0.0
  %1647 = vmatpush.msra.mxu0 0.0
  %1648 = vmatpush.msra.mxu0 0.0
  %1649 = vmatpush.msra.mxu0 0.0
  %1650 = vmatpush.msra.mxu0 0.0
  %1651 = vmatpush.msra.mxu0 0.0
  %1652 = vmatpush.msra.mxu0 %v1639
  %1653 = vmatpush.msra.mxu0 %v1638
  %1654 = vmatpush.msra.mxu0 %v1637
  %1655 = vmatpush.msra.mxu0 %v1636
  %1656 = vmatmul.f32.gmra.mxu0 %v1491
  %v1657 = vpop.f32.mrf.mxu0
  %v1658 = vadd.f32 0.0, %v1657
  %1659 = vdwg.mxu0
  %1660 = vmatpush.msra.mxu0 0.0
  %1661 = vmatpush.msra.mxu0 0.0
  %1662 = vmatpush.msra.mxu0 0.0
  %1663 = vmatpush.msra.mxu0 0.0
  %1664 = vmatpush.msra.mxu0 0.0
  %1665 = vmatpush.msra.mxu0 0.0
  %1666 = vmatpush.msra.mxu0 0.0
  %1667 = vmatpush.msra.mxu0 0.0
  %1668 = vmatpush.msra.mxu0 0.0
  %1669 = vmatpush.msra.mxu0 0.0
  %1670 = vmatpush.msra.mxu0 0.0
  %1671 = vmatpush.msra.mxu0 0.0
  %1672 = vmatpush.msra.mxu0 %v1635
  %1673 = vmatpush.msra.mxu0 %v1634
  %1674 = vmatpush.msra.mxu0 %v1633
  %1675 = vmatpush.msra.mxu0 %v1632
  %1676 = vmatmul.f32.gmra.mxu0 %v1514
  %v1677 = vpop.f32.mrf.mxu0
  %v1678 = vadd.f32 %v1658, %v1677
  %1679 = vdwg.mxu0
  %v1680 = vld [vmem:[%s231] sm:$0x1]
  %v1682 = vperm.slane %v1680, 0
  %v1684 = vadd.f32 %v1678, %v1682
  %v1685 = vtanh.pop %v1684
  %v1686 = vld [vmem:[%s238] sm:$0xff]
  %v1687 = vld [vmem:[%s238 + $0x8] sm:$0xff]
  %v1688 = vld [vmem:[%s238 + $0x10] sm:$0xff]
  %v1689 = vld [vmem:[%s238 + $0x18] sm:$0xff]
  %v1690 = vld [vmem:[%s243] sm:$0xff]
  %v1691 = vld [vmem:[%s243 + $0x8] sm:$0xff]
  %v1692 = vld [vmem:[%s243 + $0x10] sm:$0xff]
  %v1693 = vld [vmem:[%s243 + $0x18] sm:$0xff]
  %1694 = vmatpush.msra.mxu0 0.0
  %1695 = vmatpush.msra.mxu0 0.0
  %1696 = vmatpush.msra.mxu0 0.0
  %1697 = vmatpush.msra.mxu0 0.0
  %1698 = vmatpush.msra.mxu0 0.0
  %1699 = vmatpush.msra.mxu0 0.0
  %1700 = vmatpush.msra.mxu0 0.0
  %1701 = vmatpush.msra.mxu0 0.0
  %1702 = vmatpush.msra.mxu0 0.0
  %1703 = vmatpush.msra.mxu0 0.0
  %1704 = vmatpush.msra.mxu0 0.0
  %1705 = vmatpush.msra.mxu0 0.0
  %1706 = vmatpush.msra.mxu0 %v1693
  %1707 = vmatpush.msra.mxu0 %v1692
  %1708 = vmatpush.msra.mxu0 %v1691
  %1709 = vmatpush.msra.mxu0 %v1690
  %1710 = vmatmul.f32.gmra.mxu0 %v1491
  %v1711 = vpop.f32.mrf.mxu0
  %v1712 = vadd.f32 0.0, %v1711
  %1713 = vdwg.mxu0
  %1714 = vmatpush.msra.mxu0 0.0
  %1715 = vmatpush.msra.mxu0 0.0
  %1716 = vmatpush.msra.mxu0 0.0
  %1717 = vmatpush.msra.mxu0 0.0
  %1718 = vmatpush.msra.mxu0 0.0
  %1719 = vmatpush.msra.mxu0 0.0
  %1720 = vmatpush.msra.mxu0 0.0
  %1721 = vmatpush.msra.mxu0 0.0
  %1722 = vmatpush.msra.mxu0 0.0
  %1723 = vmatpush.msra.mxu0 0.0
  %1724 = vmatpush.msra.mxu0 0.0
  %1725 = vmatpush.msra.mxu0 0.0
  %1726 = vmatpush.msra.mxu0 %v1689
  %1727 = vmatpush.msra.mxu0 %v1688
  %1728 = vmatpush.msra.mxu0 %v1687
  %1729 = vmatpush.msra.mxu0 %v1686
  %1730 = vmatmul.f32.gmra.mxu0 %v1514
  %v1731 = vpop.f32.mrf.mxu0
  %v1732 = vadd.f32 %v1712, %v1731
  %1733 = vdwg.mxu0
  %v1734 = vld [vmem:[%s288] sm:$0x1]
  %v1736 = vperm.slane %v1734, 0
  %v1738 = vadd.f32 %v1732, %v1736
  %v1739 = vxor.u32 %v1738, 2147483648
  %v1740 = vmul.f32 %v1739, 1.442695
  %v1741 = vpow.pop %v1740
  %v1742 = vadd.f32 %v1741, 1.0
  %v1743 = vrcp.pop %v1742
  %v1744 = vmul.f32 %v1742, %v1743
  %v1745 = vsub.f32 1.0, %v1744
  %v1746 = vmul.f32 %v1743, %v1745
  %v1747 = vadd.f32 %v1743, %v1746
  %vm1748 = vweird.f32 %v1742
  %vm1749 = vweird.f32 %v1743
  %vm1750 = vmor %vm1748, %vm1749
  %v1751 = vsel %vm1750, %v1743, %v1747
  %v1752 = vand.u32 2147483647, %v1742
  %vm1753 = vcmp.eq.f32.partialorder %v1752, 8.507059e+37
  %v1754 = vand.u32 %v1742, 2147483648
  %v1755 = vor.u32 1.1754944e-38, %v1754
  %v1756 = vsel %vm1753, %v1755, %v1751
  %v1757 = vmul.f32 1.0, %v1756
  %v1758 = vmul.f32 %v1631, %v1481
  %v1759 = vmul.f32 %v1559, %v1685
  %v1760 = vadd.f32 %v1758, %v1759
  %v1761 = vtanh.pop %v1760
  %v1762 = vmul.f32 %v1757, %v1761
  %1763 = vst.msk [vmem:[#allocation3] sm:$0x3] %vm318, %v1760
  %1764 = vst.msk [vmem:[#allocation2] sm:$0x3] %vm318, %v1762
  %s1765 = scalar_lea.vmem %s4, 10
  %1766 = vst.msk [vmem:[%s1765] sm:$0x3] %vm318, %v1762
  %s1767 = scalar_lea.vmem %s0, 12
  %v1768 = vld [vmem:[%s1767] sm:$0x3]
  %v1769 = vld [vmem:[#allocation2] sm:$0x3]
  %v1770 = vld [vmem:[#allocation3] sm:$0x3]
  %v1771 = vld [vmem:[%s1] sm:$0xff]
  %v1772 = vld [vmem:[%s1 + $0x8] sm:$0xff]
  %v1773 = vld [vmem:[%s1 + $0x10] sm:$0xff]
  %v1774 = vld [vmem:[%s1 + $0x18] sm:$0xff]
  %v1775 = vld [vmem:[%s2] sm:$0xff]
  %v1776 = vld [vmem:[%s2 + $0x8] sm:$0xff]
  %v1777 = vld [vmem:[%s2 + $0x10] sm:$0xff]
  %v1778 = vld [vmem:[%s2 + $0x18] sm:$0xff]
  %v1780 = vsel %vm35, %v1769, 0
  %1782 = vmatpush.msra.mxu0 0.0
  %1783 = vmatpush.msra.mxu0 0.0
  %1784 = vmatpush.msra.mxu0 0.0
  %1785 = vmatpush.msra.mxu0 0.0
  %1786 = vmatpush.msra.mxu0 0.0
  %1787 = vmatpush.msra.mxu0 0.0
  %1788 = vmatpush.msra.mxu0 0.0
  %1789 = vmatpush.msra.mxu0 0.0
  %1790 = vmatpush.msra.mxu0 0.0
  %1791 = vmatpush.msra.mxu0 0.0
  %1792 = vmatpush.msra.mxu0 0.0
  %1793 = vmatpush.msra.mxu0 0.0
  %1794 = vmatpush.msra.mxu0 %v1778
  %1795 = vmatpush.msra.mxu0 %v1777
  %1796 = vmatpush.msra.mxu0 %v1776
  %1797 = vmatpush.msra.mxu0 %v1775
  %1798 = vmatmul.f32.gmra.mxu0 %v1780
  %v1799 = vpop.f32.mrf.mxu0
  %v1800 = vadd.f32 0.0, %v1799
  %1801 = vdwg.mxu0
  %v1803 = vsel %vm35, %v1768, 0
  %1805 = vmatpush.msra.mxu0 0.0
  %1806 = vmatpush.msra.mxu0 0.0
  %1807 = vmatpush.msra.mxu0 0.0
  %1808 = vmatpush.msra.mxu0 0.0
  %1809 = vmatpush.msra.mxu0 0.0
  %1810 = vmatpush.msra.mxu0 0.0
  %1811 = vmatpush.msra.mxu0 0.0
  %1812 = vmatpush.msra.mxu0 0.0
  %1813 = vmatpush.msra.mxu0 0.0
  %1814 = vmatpush.msra.mxu0 0.0
  %1815 = vmatpush.msra.mxu0 0.0
  %1816 = vmatpush.msra.mxu0 0.0
  %1817 = vmatpush.msra.mxu0 %v1774
  %1818 = vmatpush.msra.mxu0 %v1773
  %1819 = vmatpush.msra.mxu0 %v1772
  %1820 = vmatpush.msra.mxu0 %v1771
  %1821 = vmatmul.f32.gmra.mxu0 %v1803
  %v1822 = vpop.f32.mrf.mxu0
  %v1823 = vadd.f32 %v1800, %v1822
  %1824 = vdwg.mxu0
  %v1825 = vld [vmem:[%s3] sm:$0x1]
  %v1827 = vperm.slane %v1825, 0
  %v1829 = vadd.f32 %v1823, %v1827
  %v1830 = vxor.u32 %v1829, 2147483648
  %v1831 = vmul.f32 %v1830, 1.442695
  %v1832 = vpow.pop %v1831
  %v1833 = vadd.f32 %v1832, 1.0
  %v1834 = vrcp.pop %v1833
  %v1835 = vmul.f32 %v1833, %v1834
  %v1836 = vsub.f32 1.0, %v1835
  %v1837 = vmul.f32 %v1834, %v1836
  %v1838 = vadd.f32 %v1834, %v1837
  %vm1839 = vweird.f32 %v1833
  %vm1840 = vweird.f32 %v1834
  %vm1841 = vmor %vm1839, %vm1840
  %v1842 = vsel %vm1841, %v1834, %v1838
  %v1843 = vand.u32 2147483647, %v1833
  %vm1844 = vcmp.eq.f32.partialorder %v1843, 8.507059e+37
  %v1845 = vand.u32 %v1833, 2147483648
  %v1846 = vor.u32 1.1754944e-38, %v1845
  %v1847 = vsel %vm1844, %v1846, %v1842
  %v1848 = vmul.f32 1.0, %v1847
  %v1849 = vld [vmem:[%s106] sm:$0xff]
  %v1850 = vld [vmem:[%s106 + $0x8] sm:$0xff]
  %v1851 = vld [vmem:[%s106 + $0x10] sm:$0xff]
  %v1852 = vld [vmem:[%s106 + $0x18] sm:$0xff]
  %v1853 = vld [vmem:[%s111] sm:$0xff]
  %v1854 = vld [vmem:[%s111 + $0x8] sm:$0xff]
  %v1855 = vld [vmem:[%s111 + $0x10] sm:$0xff]
  %v1856 = vld [vmem:[%s111 + $0x18] sm:$0xff]
  %1857 = vmatpush.msra.mxu0 0.0
  %1858 = vmatpush.msra.mxu0 0.0
  %1859 = vmatpush.msra.mxu0 0.0
  %1860 = vmatpush.msra.mxu0 0.0
  %1861 = vmatpush.msra.mxu0 0.0
  %1862 = vmatpush.msra.mxu0 0.0
  %1863 = vmatpush.msra.mxu0 0.0
  %1864 = vmatpush.msra.mxu0 0.0
  %1865 = vmatpush.msra.mxu0 0.0
  %1866 = vmatpush.msra.mxu0 0.0
  %1867 = vmatpush.msra.mxu0 0.0
  %1868 = vmatpush.msra.mxu0 0.0
  %1869 = vmatpush.msra.mxu0 %v1856
  %1870 = vmatpush.msra.mxu0 %v1855
  %1871 = vmatpush.msra.mxu0 %v1854
  %1872 = vmatpush.msra.mxu0 %v1853
  %1873 = vmatmul.f32.gmra.mxu0 %v1780
  %v1874 = vpop.f32.mrf.mxu0
  %v1875 = vadd.f32 0.0, %v1874
  %1876 = vdwg.mxu0
  %1877 = vmatpush.msra.mxu0 0.0
  %1878 = vmatpush.msra.mxu0 0.0
  %1879 = vmatpush.msra.mxu0 0.0
  %1880 = vmatpush.msra.mxu0 0.0
  %1881 = vmatpush.msra.mxu0 0.0
  %1882 = vmatpush.msra.mxu0 0.0
  %1883 = vmatpush.msra.mxu0 0.0
  %1884 = vmatpush.msra.mxu0 0.0
  %1885 = vmatpush.msra.mxu0 0.0
  %1886 = vmatpush.msra.mxu0 0.0
  %1887 = vmatpush.msra.mxu0 0.0
  %1888 = vmatpush.msra.mxu0 0.0
  %1889 = vmatpush.msra.mxu0 %v1852
  %1890 = vmatpush.msra.mxu0 %v1851
  %1891 = vmatpush.msra.mxu0 %v1850
  %1892 = vmatpush.msra.mxu0 %v1849
  %1893 = vmatmul.f32.gmra.mxu0 %v1803
  %v1894 = vpop.f32.mrf.mxu0
  %v1895 = vadd.f32 %v1875, %v1894
  %1896 = vdwg.mxu0
  %v1897 = vld [vmem:[%s156] sm:$0x1]
  %v1899 = vperm.slane %v1897, 0
  %v1901 = vadd.f32 %v1895, %v1899
  %v1902 = vxor.u32 %v1901, 2147483648
  %v1903 = vmul.f32 %v1902, 1.442695
  %v1904 = vpow.pop %v1903
  %v1905 = vadd.f32 %v1904, 1.0
  %v1906 = vrcp.pop %v1905
  %v1907 = vmul.f32 %v1905, %v1906
  %v1908 = vsub.f32 1.0, %v1907
  %v1909 = vmul.f32 %v1906, %v1908
  %v1910 = vadd.f32 %v1906, %v1909
  %vm1911 = vweird.f32 %v1905
  %vm1912 = vweird.f32 %v1906
  %vm1913 = vmor %vm1911, %vm1912
  %v1914 = vsel %vm1913, %v1906, %v1910
  %v1915 = vand.u32 2147483647, %v1905
  %vm1916 = vcmp.eq.f32.partialorder %v1915, 8.507059e+37
  %v1917 = vand.u32 %v1905, 2147483648
  %v1918 = vor.u32 1.1754944e-38, %v1917
  %v1919 = vsel %vm1916, %v1918, %v1914
  %v1920 = vmul.f32 1.0, %v1919
  %v1921 = vld [vmem:[%s181] sm:$0xff]
  %v1922 = vld [vmem:[%s181 + $0x8] sm:$0xff]
  %v1923 = vld [vmem:[%s181 + $0x10] sm:$0xff]
  %v1924 = vld [vmem:[%s181 + $0x18] sm:$0xff]
  %v1925 = vld [vmem:[%s186] sm:$0xff]
  %v1926 = vld [vmem:[%s186 + $0x8] sm:$0xff]
  %v1927 = vld [vmem:[%s186 + $0x10] sm:$0xff]
  %v1928 = vld [vmem:[%s186 + $0x18] sm:$0xff]
  %1929 = vmatpush.msra.mxu0 0.0
  %1930 = vmatpush.msra.mxu0 0.0
  %1931 = vmatpush.msra.mxu0 0.0
  %1932 = vmatpush.msra.mxu0 0.0
  %1933 = vmatpush.msra.mxu0 0.0
  %1934 = vmatpush.msra.mxu0 0.0
  %1935 = vmatpush.msra.mxu0 0.0
  %1936 = vmatpush.msra.mxu0 0.0
  %1937 = vmatpush.msra.mxu0 0.0
  %1938 = vmatpush.msra.mxu0 0.0
  %1939 = vmatpush.msra.mxu0 0.0
  %1940 = vmatpush.msra.mxu0 0.0
  %1941 = vmatpush.msra.mxu0 %v1928
  %1942 = vmatpush.msra.mxu0 %v1927
  %1943 = vmatpush.msra.mxu0 %v1926
  %1944 = vmatpush.msra.mxu0 %v1925
  %1945 = vmatmul.f32.gmra.mxu0 %v1780
  %v1946 = vpop.f32.mrf.mxu0
  %v1947 = vadd.f32 0.0, %v1946
  %1948 = vdwg.mxu0
  %1949 = vmatpush.msra.mxu0 0.0
  %1950 = vmatpush.msra.mxu0 0.0
  %1951 = vmatpush.msra.mxu0 0.0
  %1952 = vmatpush.msra.mxu0 0.0
  %1953 = vmatpush.msra.mxu0 0.0
  %1954 = vmatpush.msra.mxu0 0.0
  %1955 = vmatpush.msra.mxu0 0.0
  %1956 = vmatpush.msra.mxu0 0.0
  %1957 = vmatpush.msra.mxu0 0.0
  %1958 = vmatpush.msra.mxu0 0.0
  %1959 = vmatpush.msra.mxu0 0.0
  %1960 = vmatpush.msra.mxu0 0.0
  %1961 = vmatpush.msra.mxu0 %v1924
  %1962 = vmatpush.msra.mxu0 %v1923
  %1963 = vmatpush.msra.mxu0 %v1922
  %1964 = vmatpush.msra.mxu0 %v1921
  %1965 = vmatmul.f32.gmra.mxu0 %v1803
  %v1966 = vpop.f32.mrf.mxu0
  %v1967 = vadd.f32 %v1947, %v1966
  %1968 = vdwg.mxu0
  %v1969 = vld [vmem:[%s231] sm:$0x1]
  %v1971 = vperm.slane %v1969, 0
  %v1973 = vadd.f32 %v1967, %v1971
  %v1974 = vtanh.pop %v1973
  %v1975 = vld [vmem:[%s238] sm:$0xff]
  %v1976 = vld [vmem:[%s238 + $0x8] sm:$0xff]
  %v1977 = vld [vmem:[%s238 + $0x10] sm:$0xff]
  %v1978 = vld [vmem:[%s238 + $0x18] sm:$0xff]
  %v1979 = vld [vmem:[%s243] sm:$0xff]
  %v1980 = vld [vmem:[%s243 + $0x8] sm:$0xff]
  %v1981 = vld [vmem:[%s243 + $0x10] sm:$0xff]
  %v1982 = vld [vmem:[%s243 + $0x18] sm:$0xff]
  %1983 = vmatpush.msra.mxu0 0.0
  %1984 = vmatpush.msra.mxu0 0.0
  %1985 = vmatpush.msra.mxu0 0.0
  %1986 = vmatpush.msra.mxu0 0.0
  %1987 = vmatpush.msra.mxu0 0.0
  %1988 = vmatpush.msra.mxu0 0.0
  %1989 = vmatpush.msra.mxu0 0.0
  %1990 = vmatpush.msra.mxu0 0.0
  %1991 = vmatpush.msra.mxu0 0.0
  %1992 = vmatpush.msra.mxu0 0.0
  %1993 = vmatpush.msra.mxu0 0.0
  %1994 = vmatpush.msra.mxu0 0.0
  %1995 = vmatpush.msra.mxu0 %v1982
  %1996 = vmatpush.msra.mxu0 %v1981
  %1997 = vmatpush.msra.mxu0 %v1980
  %1998 = vmatpush.msra.mxu0 %v1979
  %1999 = vmatmul.f32.gmra.mxu0 %v1780
  %v2000 = vpop.f32.mrf.mxu0
  %v2001 = vadd.f32 0.0, %v2000
  %2002 = vdwg.mxu0
  %2003 = vmatpush.msra.mxu0 0.0
  %2004 = vmatpush.msra.mxu0 0.0
  %2005 = vmatpush.msra.mxu0 0.0
  %2006 = vmatpush.msra.mxu0 0.0
  %2007 = vmatpush.msra.mxu0 0.0
  %2008 = vmatpush.msra.mxu0 0.0
  %2009 = vmatpush.msra.mxu0 0.0
  %2010 = vmatpush.msra.mxu0 0.0
  %2011 = vmatpush.msra.mxu0 0.0
  %2012 = vmatpush.msra.mxu0 0.0
  %2013 = vmatpush.msra.mxu0 0.0
  %2014 = vmatpush.msra.mxu0 0.0
  %2015 = vmatpush.msra.mxu0 %v1978
  %2016 = vmatpush.msra.mxu0 %v1977
  %2017 = vmatpush.msra.mxu0 %v1976
  %2018 = vmatpush.msra.mxu0 %v1975
  %2019 = vmatmul.f32.gmra.mxu0 %v1803
  %v2020 = vpop.f32.mrf.mxu0
  %v2021 = vadd.f32 %v2001, %v2020
  %2022 = vdwg.mxu0
  %v2023 = vld [vmem:[%s288] sm:$0x1]
  %v2025 = vperm.slane %v2023, 0
  %v2027 = vadd.f32 %v2021, %v2025
  %v2028 = vxor.u32 %v2027, 2147483648
  %v2029 = vmul.f32 %v2028, 1.442695
  %v2030 = vpow.pop %v2029
  %v2031 = vadd.f32 %v2030, 1.0
  %v2032 = vrcp.pop %v2031
  %v2033 = vmul.f32 %v2031, %v2032
  %v2034 = vsub.f32 1.0, %v2033
  %v2035 = vmul.f32 %v2032, %v2034
  %v2036 = vadd.f32 %v2032, %v2035
  %vm2037 = vweird.f32 %v2031
  %vm2038 = vweird.f32 %v2032
  %vm2039 = vmor %vm2037, %vm2038
  %v2040 = vsel %vm2039, %v2032, %v2036
  %v2041 = vand.u32 2147483647, %v2031
  %vm2042 = vcmp.eq.f32.partialorder %v2041, 8.507059e+37
  %v2043 = vand.u32 %v2031, 2147483648
  %v2044 = vor.u32 1.1754944e-38, %v2043
  %v2045 = vsel %vm2042, %v2044, %v2040
  %v2046 = vmul.f32 1.0, %v2045
  %v2047 = vmul.f32 %v1920, %v1770
  %v2048 = vmul.f32 %v1848, %v1974
  %v2049 = vadd.f32 %v2047, %v2048
  %v2050 = vtanh.pop %v2049
  %v2051 = vmul.f32 %v2046, %v2050
  %2052 = vst.msk [vmem:[#allocation3] sm:$0x3] %vm318, %v2049
  %2053 = vst.msk [vmem:[#allocation2] sm:$0x3] %vm318, %v2051
  %s2054 = scalar_lea.vmem %s4, 12
  %2055 = vst.msk [vmem:[%s2054] sm:$0x3] %vm318, %v2051
  %s2056 = scalar_lea.vmem %s0, 14
  %v2057 = vld [vmem:[%s2056] sm:$0x3]
  %v2058 = vld [vmem:[#allocation2] sm:$0x3]
  %v2059 = vld [vmem:[#allocation3] sm:$0x3]
  %v2060 = vld [vmem:[%s1] sm:$0xff]
  %v2061 = vld [vmem:[%s1 + $0x8] sm:$0xff]
  %v2062 = vld [vmem:[%s1 + $0x10] sm:$0xff]
  %v2063 = vld [vmem:[%s1 + $0x18] sm:$0xff]
  %v2064 = vld [vmem:[%s2] sm:$0xff]
  %v2065 = vld [vmem:[%s2 + $0x8] sm:$0xff]
  %v2066 = vld [vmem:[%s2 + $0x10] sm:$0xff]
  %v2067 = vld [vmem:[%s2 + $0x18] sm:$0xff]
  %v2069 = vsel %vm35, %v2058, 0
  %2071 = vmatpush.msra.mxu0 0.0
  %2072 = vmatpush.msra.mxu0 0.0
  %2073 = vmatpush.msra.mxu0 0.0
  %2074 = vmatpush.msra.mxu0 0.0
  %2075 = vmatpush.msra.mxu0 0.0
  %2076 = vmatpush.msra.mxu0 0.0
  %2077 = vmatpush.msra.mxu0 0.0
  %2078 = vmatpush.msra.mxu0 0.0
  %2079 = vmatpush.msra.mxu0 0.0
  %2080 = vmatpush.msra.mxu0 0.0
  %2081 = vmatpush.msra.mxu0 0.0
  %2082 = vmatpush.msra.mxu0 0.0
  %2083 = vmatpush.msra.mxu0 %v2067
  %2084 = vmatpush.msra.mxu0 %v2066
  %2085 = vmatpush.msra.mxu0 %v2065
  %2086 = vmatpush.msra.mxu0 %v2064
  %2087 = vmatmul.f32.gmra.mxu0 %v2069
  %v2088 = vpop.f32.mrf.mxu0
  %v2089 = vadd.f32 0.0, %v2088
  %2090 = vdwg.mxu0
  %v2092 = vsel %vm35, %v2057, 0
  %2094 = vmatpush.msra.mxu0 0.0
  %2095 = vmatpush.msra.mxu0 0.0
  %2096 = vmatpush.msra.mxu0 0.0
  %2097 = vmatpush.msra.mxu0 0.0
  %2098 = vmatpush.msra.mxu0 0.0
  %2099 = vmatpush.msra.mxu0 0.0
  %2100 = vmatpush.msra.mxu0 0.0
  %2101 = vmatpush.msra.mxu0 0.0
  %2102 = vmatpush.msra.mxu0 0.0
  %2103 = vmatpush.msra.mxu0 0.0
  %2104 = vmatpush.msra.mxu0 0.0
  %2105 = vmatpush.msra.mxu0 0.0
  %2106 = vmatpush.msra.mxu0 %v2063
  %2107 = vmatpush.msra.mxu0 %v2062
  %2108 = vmatpush.msra.mxu0 %v2061
  %2109 = vmatpush.msra.mxu0 %v2060
  %2110 = vmatmul.f32.gmra.mxu0 %v2092
  %v2111 = vpop.f32.mrf.mxu0
  %v2112 = vadd.f32 %v2089, %v2111
  %2113 = vdwg.mxu0
  %v2114 = vld [vmem:[%s3] sm:$0x1]
  %v2116 = vperm.slane %v2114, 0
  %v2118 = vadd.f32 %v2112, %v2116
  %v2119 = vxor.u32 %v2118, 2147483648
  %v2120 = vmul.f32 %v2119, 1.442695
  %v2121 = vpow.pop %v2120
  %v2122 = vadd.f32 %v2121, 1.0
  %v2123 = vrcp.pop %v2122
  %v2124 = vmul.f32 %v2122, %v2123
  %v2125 = vsub.f32 1.0, %v2124
  %v2126 = vmul.f32 %v2123, %v2125
  %v2127 = vadd.f32 %v2123, %v2126
  %vm2128 = vweird.f32 %v2122
  %vm2129 = vweird.f32 %v2123
  %vm2130 = vmor %vm2128, %vm2129
  %v2131 = vsel %vm2130, %v2123, %v2127
  %v2132 = vand.u32 2147483647, %v2122
  %vm2133 = vcmp.eq.f32.partialorder %v2132, 8.507059e+37
  %v2134 = vand.u32 %v2122, 2147483648
  %v2135 = vor.u32 1.1754944e-38, %v2134
  %v2136 = vsel %vm2133, %v2135, %v2131
  %v2137 = vmul.f32 1.0, %v2136
  %v2138 = vld [vmem:[%s106] sm:$0xff]
  %v2139 = vld [vmem:[%s106 + $0x8] sm:$0xff]
  %v2140 = vld [vmem:[%s106 + $0x10] sm:$0xff]
  %v2141 = vld [vmem:[%s106 + $0x18] sm:$0xff]
  %v2142 = vld [vmem:[%s111] sm:$0xff]
  %v2143 = vld [vmem:[%s111 + $0x8] sm:$0xff]
  %v2144 = vld [vmem:[%s111 + $0x10] sm:$0xff]
  %v2145 = vld [vmem:[%s111 + $0x18] sm:$0xff]
  %2146 = vmatpush.msra.mxu0 0.0
  %2147 = vmatpush.msra.mxu0 0.0
  %2148 = vmatpush.msra.mxu0 0.0
  %2149 = vmatpush.msra.mxu0 0.0
  %2150 = vmatpush.msra.mxu0 0.0
  %2151 = vmatpush.msra.mxu0 0.0
  %2152 = vmatpush.msra.mxu0 0.0
  %2153 = vmatpush.msra.mxu0 0.0
  %2154 = vmatpush.msra.mxu0 0.0
  %2155 = vmatpush.msra.mxu0 0.0
  %2156 = vmatpush.msra.mxu0 0.0
  %2157 = vmatpush.msra.mxu0 0.0
  %2158 = vmatpush.msra.mxu0 %v2145
  %2159 = vmatpush.msra.mxu0 %v2144
  %2160 = vmatpush.msra.mxu0 %v2143
  %2161 = vmatpush.msra.mxu0 %v2142
  %2162 = vmatmul.f32.gmra.mxu0 %v2069
  %v2163 = vpop.f32.mrf.mxu0
  %v2164 = vadd.f32 0.0, %v2163
  %2165 = vdwg.mxu0
  %2166 = vmatpush.msra.mxu0 0.0
  %2167 = vmatpush.msra.mxu0 0.0
  %2168 = vmatpush.msra.mxu0 0.0
  %2169 = vmatpush.msra.mxu0 0.0
  %2170 = vmatpush.msra.mxu0 0.0
  %2171 = vmatpush.msra.mxu0 0.0
  %2172 = vmatpush.msra.mxu0 0.0
  %2173 = vmatpush.msra.mxu0 0.0
  %2174 = vmatpush.msra.mxu0 0.0
  %2175 = vmatpush.msra.mxu0 0.0
  %2176 = vmatpush.msra.mxu0 0.0
  %2177 = vmatpush.msra.mxu0 0.0
  %2178 = vmatpush.msra.mxu0 %v2141
  %2179 = vmatpush.msra.mxu0 %v2140
  %2180 = vmatpush.msra.mxu0 %v2139
  %2181 = vmatpush.msra.mxu0 %v2138
  %2182 = vmatmul.f32.gmra.mxu0 %v2092
  %v2183 = vpop.f32.mrf.mxu0
  %v2184 = vadd.f32 %v2164, %v2183
  %2185 = vdwg.mxu0
  %v2186 = vld [vmem:[%s156] sm:$0x1]
  %v2188 = vperm.slane %v2186, 0
  %v2190 = vadd.f32 %v2184, %v2188
  %v2191 = vxor.u32 %v2190, 2147483648
  %v2192 = vmul.f32 %v2191, 1.442695
  %v2193 = vpow.pop %v2192
  %v2194 = vadd.f32 %v2193, 1.0
  %v2195 = vrcp.pop %v2194
  %v2196 = vmul.f32 %v2194, %v2195
  %v2197 = vsub.f32 1.0, %v2196
  %v2198 = vmul.f32 %v2195, %v2197
  %v2199 = vadd.f32 %v2195, %v2198
  %vm2200 = vweird.f32 %v2194
  %vm2201 = vweird.f32 %v2195
  %vm2202 = vmor %vm2200, %vm2201
  %v2203 = vsel %vm2202, %v2195, %v2199
  %v2204 = vand.u32 2147483647, %v2194
  %vm2205 = vcmp.eq.f32.partialorder %v2204, 8.507059e+37
  %v2206 = vand.u32 %v2194, 2147483648
  %v2207 = vor.u32 1.1754944e-38, %v2206
  %v2208 = vsel %vm2205, %v2207, %v2203
  %v2209 = vmul.f32 1.0, %v2208
  %v2210 = vld [vmem:[%s181] sm:$0xff]
  %v2211 = vld [vmem:[%s181 + $0x8] sm:$0xff]
  %v2212 = vld [vmem:[%s181 + $0x10] sm:$0xff]
  %v2213 = vld [vmem:[%s181 + $0x18] sm:$0xff]
  %v2214 = vld [vmem:[%s186] sm:$0xff]
  %v2215 = vld [vmem:[%s186 + $0x8] sm:$0xff]
  %v2216 = vld [vmem:[%s186 + $0x10] sm:$0xff]
  %v2217 = vld [vmem:[%s186 + $0x18] sm:$0xff]
  %2218 = vmatpush.msra.mxu0 0.0
  %2219 = vmatpush.msra.mxu0 0.0
  %2220 = vmatpush.msra.mxu0 0.0
  %2221 = vmatpush.msra.mxu0 0.0
  %2222 = vmatpush.msra.mxu0 0.0
  %2223 = vmatpush.msra.mxu0 0.0
  %2224 = vmatpush.msra.mxu0 0.0
  %2225 = vmatpush.msra.mxu0 0.0
  %2226 = vmatpush.msra.mxu0 0.0
  %2227 = vmatpush.msra.mxu0 0.0
  %2228 = vmatpush.msra.mxu0 0.0
  %2229 = vmatpush.msra.mxu0 0.0
  %2230 = vmatpush.msra.mxu0 %v2217
  %2231 = vmatpush.msra.mxu0 %v2216
  %2232 = vmatpush.msra.mxu0 %v2215
  %2233 = vmatpush.msra.mxu0 %v2214
  %2234 = vmatmul.f32.gmra.mxu0 %v2069
  %v2235 = vpop.f32.mrf.mxu0
  %v2236 = vadd.f32 0.0, %v2235
  %2237 = vdwg.mxu0
  %2238 = vmatpush.msra.mxu0 0.0
  %2239 = vmatpush.msra.mxu0 0.0
  %2240 = vmatpush.msra.mxu0 0.0
  %2241 = vmatpush.msra.mxu0 0.0
  %2242 = vmatpush.msra.mxu0 0.0
  %2243 = vmatpush.msra.mxu0 0.0
  %2244 = vmatpush.msra.mxu0 0.0
  %2245 = vmatpush.msra.mxu0 0.0
  %2246 = vmatpush.msra.mxu0 0.0
  %2247 = vmatpush.msra.mxu0 0.0
  %2248 = vmatpush.msra.mxu0 0.0
  %2249 = vmatpush.msra.mxu0 0.0
  %2250 = vmatpush.msra.mxu0 %v2213
  %2251 = vmatpush.msra.mxu0 %v2212
  %2252 = vmatpush.msra.mxu0 %v2211
  %2253 = vmatpush.msra.mxu0 %v2210
  %2254 = vmatmul.f32.gmra.mxu0 %v2092
  %v2255 = vpop.f32.mrf.mxu0
  %v2256 = vadd.f32 %v2236, %v2255
  %2257 = vdwg.mxu0
  %v2258 = vld [vmem:[%s231] sm:$0x1]
  %v2260 = vperm.slane %v2258, 0
  %v2262 = vadd.f32 %v2256, %v2260
  %v2263 = vtanh.pop %v2262
  %v2264 = vld [vmem:[%s238] sm:$0xff]
  %v2265 = vld [vmem:[%s238 + $0x8] sm:$0xff]
  %v2266 = vld [vmem:[%s238 + $0x10] sm:$0xff]
  %v2267 = vld [vmem:[%s238 + $0x18] sm:$0xff]
  %v2268 = vld [vmem:[%s243] sm:$0xff]
  %v2269 = vld [vmem:[%s243 + $0x8] sm:$0xff]
  %v2270 = vld [vmem:[%s243 + $0x10] sm:$0xff]
  %v2271 = vld [vmem:[%s243 + $0x18] sm:$0xff]
  %2272 = vmatpush.msra.mxu0 0.0
  %2273 = vmatpush.msra.mxu0 0.0
  %2274 = vmatpush.msra.mxu0 0.0
  %2275 = vmatpush.msra.mxu0 0.0
  %2276 = vmatpush.msra.mxu0 0.0
  %2277 = vmatpush.msra.mxu0 0.0
  %2278 = vmatpush.msra.mxu0 0.0
  %2279 = vmatpush.msra.mxu0 0.0
  %2280 = vmatpush.msra.mxu0 0.0
  %2281 = vmatpush.msra.mxu0 0.0
  %2282 = vmatpush.msra.mxu0 0.0
  %2283 = vmatpush.msra.mxu0 0.0
  %2284 = vmatpush.msra.mxu0 %v2271
  %2285 = vmatpush.msra.mxu0 %v2270
  %2286 = vmatpush.msra.mxu0 %v2269
  %2287 = vmatpush.msra.mxu0 %v2268
  %2288 = vmatmul.f32.gmra.mxu0 %v2069
  %v2289 = vpop.f32.mrf.mxu0
  %v2290 = vadd.f32 0.0, %v2289
  %2291 = vdwg.mxu0
  %2292 = vmatpush.msra.mxu0 0.0
  %2293 = vmatpush.msra.mxu0 0.0
  %2294 = vmatpush.msra.mxu0 0.0
  %2295 = vmatpush.msra.mxu0 0.0
  %2296 = vmatpush.msra.mxu0 0.0
  %2297 = vmatpush.msra.mxu0 0.0
  %2298 = vmatpush.msra.mxu0 0.0
  %2299 = vmatpush.msra.mxu0 0.0
  %2300 = vmatpush.msra.mxu0 0.0
  %2301 = vmatpush.msra.mxu0 0.0
  %2302 = vmatpush.msra.mxu0 0.0
  %2303 = vmatpush.msra.mxu0 0.0
  %2304 = vmatpush.msra.mxu0 %v2267
  %2305 = vmatpush.msra.mxu0 %v2266
  %2306 = vmatpush.msra.mxu0 %v2265
  %2307 = vmatpush.msra.mxu0 %v2264
  %2308 = vmatmul.f32.gmra.mxu0 %v2092
  %v2309 = vpop.f32.mrf.mxu0
  %v2310 = vadd.f32 %v2290, %v2309
  %2311 = vdwg.mxu0
  %v2312 = vld [vmem:[%s288] sm:$0x1]
  %v2314 = vperm.slane %v2312, 0
  %v2316 = vadd.f32 %v2310, %v2314
  %v2317 = vxor.u32 %v2316, 2147483648
  %v2318 = vmul.f32 %v2317, 1.442695
  %v2319 = vpow.pop %v2318
  %v2320 = vadd.f32 %v2319, 1.0
  %v2321 = vrcp.pop %v2320
  %v2322 = vmul.f32 %v2320, %v2321
  %v2323 = vsub.f32 1.0, %v2322
  %v2324 = vmul.f32 %v2321, %v2323
  %v2325 = vadd.f32 %v2321, %v2324
  %vm2326 = vweird.f32 %v2320
  %vm2327 = vweird.f32 %v2321
  %vm2328 = vmor %vm2326, %vm2327
  %v2329 = vsel %vm2328, %v2321, %v2325
  %v2330 = vand.u32 2147483647, %v2320
  %vm2331 = vcmp.eq.f32.partialorder %v2330, 8.507059e+37
  %v2332 = vand.u32 %v2320, 2147483648
  %v2333 = vor.u32 1.1754944e-38, %v2332
  %v2334 = vsel %vm2331, %v2333, %v2329
  %v2335 = vmul.f32 1.0, %v2334
  %v2336 = vmul.f32 %v2209, %v2059
  %v2337 = vmul.f32 %v2137, %v2263
  %v2338 = vadd.f32 %v2336, %v2337
  %v2339 = vtanh.pop %v2338
  %v2340 = vmul.f32 %v2335, %v2339
  %2341 = vst.msk [vmem:[#allocation3] sm:$0x3] %vm318, %v2338
  %2342 = vst.msk [vmem:[#allocation2] sm:$0x3] %vm318, %v2340
  %s2343 = scalar_lea.vmem %s4, 14
  %2344 = vst.msk [vmem:[%s2343] sm:$0x3] %vm318, %v2340
  // Predicated region
  $region22: #{decoder_rnn_forward.2} parent=0 // pred_check
    _
  $region23: #{decoder_rnn_forward.2} parent=0 // pred_check_branch
    %2346 = sbr.rel (0) target = $region25
  $region24: #{decoder_rnn_forward.2} parent=0 // pred_region
    _
  $region25: #{decoder_rnn_forward.2} parent=0 // pred_fallthru
    _
  // Predicated region
  $region26: #{decoder_rnn_forward.2} parent=0 // pred_check
    _
  $region27: #{decoder_rnn_forward.2} parent=0 // pred_check_branch
    %2348 = sbr.rel (0) target = $region29
  $region28: #{decoder_rnn_forward.2} parent=0 // pred_region
    _
  $region29: #{decoder_rnn_forward.2} parent=0 // pred_fallthru
    _

</llo_original>
